<compile_context>
chip_gen: v7x
topology: tpu7x:2x2x1
jax: 0.10.0
libtpu: 0.0.40
codegen_flags: <defaults>
</compile_context>

<pallas_src>
import jax
import jax.numpy as jnp
from jax.experimental import pallas as pl
from jax.experimental.pallas import tpu as pltpu


def _iwt_haar_kernel(x_ref, o_ref):
    # x_ref: (1, 4, TC, TH, W) -- 4 wavelet sub-bands of TC output channels.
    # o_ref: (1, TC, 2*TH, 2*W) float32.
    tc, th, w = x_ref.shape[2], x_ref.shape[3], x_ref.shape[4]
    m = tc * th  # channel tile folded into the sublane axis

    x1 = x_ref[0, 0].reshape(m, w).astype(jnp.float32)
    x2 = x_ref[0, 1].reshape(m, w).astype(jnp.float32)
    x3 = x_ref[0, 2].reshape(m, w).astype(jnp.float32)
    x4 = x_ref[0, 3].reshape(m, w).astype(jnp.float32)

    # Butterfly: 8 adds + 4 muls per 2x2 output quad (vs 12 adds + 4 muls direct).
    p = x1 + x4
    q = x1 - x4
    r = x2 + x3
    s = x2 - x3

    a = (p - r) * 0.5   # -> syn[0::2, 0::2]
    c = (q + s) * 0.5   # -> syn[0::2, 1::2]
    b = (q - s) * 0.5   # -> syn[1::2, 0::2]
    d = (p + r) * 0.5   # -> syn[1::2, 1::2]

    # Column (lane) interleave: even cols from a/b, odd cols from c/d.
    row_even = jnp.stack([a, c], axis=-1).reshape(m, 2 * w)
    row_odd = jnp.stack([b, d], axis=-1).reshape(m, 2 * w)
    # Row (sublane) interleave.
    syn = jnp.stack([row_even, row_odd], axis=1).reshape(2 * m, 2 * w)

    # Unfold the channel tile (layout-preserving: 2*TH is sublane-aligned when
    # TC > 1, and a trivial expand when TC == 1).
    o_ref[0] = syn.reshape(tc, 2 * th, 2 * w).astype(o_ref.dtype)


def _vmem_capacity_bytes():
    """Per-core VMEM capacity, with a conservative fallback (v7x = 64 MiB/TC)."""
    try:
        info = pltpu.get_tpu_info()
        cap = int(getattr(info, "vmem_capacity_bytes", 0))
        if cap > 0:
            return cap
    except Exception:
        pass
    return 64 * 1024 * 1024


def _choose_tiles(cout, h, w, in_itemsize, vmem_limit_bytes, target_block_bytes):
    """Pick (TC, TH) so one grid step moves ~target_block_bytes of HBM traffic
    while the full VMEM footprint (double-buffered pipeline buffers + f32
    interleave temporaries) stays well under the scoped VMEM limit."""
    sub = {4: 8, 2: 16, 1: 32}.get(in_itemsize, 8)  # sublane tile of input dtype

    in_out_per_pos = 4 * in_itemsize + 16            # HBM bytes per input position
    pipe_per_pos = 2 * in_out_per_pos                # double-buffered in + out
    temp_per_pos = 64                                # a..d, row_even/odd, syn (f32)
    footprint_per_pos = pipe_per_pos + temp_per_pos

    target_pos = max(1, target_block_bytes // in_out_per_pos)
    cap_pos = max(1, (vmem_limit_bytes * 4 // 5) // footprint_per_pos)
    max_pos = max(1, min(target_pos, cap_pos))

    if h * w <= max_pos:
        th = h
    else:
        th = min(h, max(sub, ((max_pos // max(w, 1)) // sub) * sub))

    tc = max(1, min(cout, max_pos // max(th * w, 1)))
    if tc > 1 and th % sub != 0:
        # Keep the channel -> sublane fold layout-preserving.
        tc = 1
    return tc, th


def iwt_haar(x, *, target_block_bytes=4 * 1024 * 1024, vmem_limit_bytes=None):
    B, C, H, W = x.shape
    assert C % 4 == 0, "channel count must be divisible by 4"
    Cout = C // 4

    if vmem_limit_bytes is None:
        cap = _vmem_capacity_bytes()
        # ~96 MiB on 128-MiB parts (v5e/v6e), ~48 MiB on 64-MiB v7x.
        vmem_limit_bytes = min(max(cap * 3 // 4, 32 * 1024 * 1024),
                               96 * 1024 * 1024)
        vmem_limit_bytes = min(vmem_limit_bytes, cap)
    vmem_limit_bytes = int(vmem_limit_bytes)

    TC, TH = _choose_tiles(Cout, H, W, x.dtype.itemsize,
                           vmem_limit_bytes, target_block_bytes)
    n_c = pl.cdiv(Cout, TC)
    n_h = pl.cdiv(H, TH)

    # Free view: xg[:, g, c] == x[:, g*Cout + c] (sub-band g of output channel c),
    # so ONE strided DMA per grid step fetches all four sub-bands of TC channels.
    xg = x.reshape(B, 4, Cout, H, W)

    out_shape = jax.ShapeDtypeStruct((B, Cout, 2 * H, 2 * W), jnp.float32)

    in_spec = pl.BlockSpec((1, 4, TC, TH, W),
                           lambda bi, ci, hi: (bi, 0, ci, hi, 0))
    out_spec = pl.BlockSpec((1, TC, 2 * TH, 2 * W),
                            lambda bi, ci, hi: (bi, ci, hi, 0))

    in_bytes = x.size * x.dtype.itemsize
    out_bytes = B * Cout * 4 * H * W * 4
    cost = pl.CostEstimate(
        flops=12 * B * Cout * H * W,
        transcendentals=0,
        bytes_accessed=in_bytes + out_bytes,
    )

    return pl.pallas_call(
        _iwt_haar_kernel,
        out_shape=out_shape,
        grid=(B, n_c, n_h),
        in_specs=[in_spec],
        out_specs=out_spec,
        compiler_params=pltpu.CompilerParams(
            dimension_semantics=("parallel", "parallel", "parallel"),
            vmem_limit_bytes=vmem_limit_bytes,
        ),
        cost_estimate=cost,
    )(xg)


def iwt_haar_ref(x):
    # Pure-JAX reference mirroring the PyTorch code.
    B, C, H, W = x.shape
    Cout = C // 4
    x1 = x[:, 0:Cout].astype(jnp.float32) / 2
    x2 = x[:, Cout:2 * Cout].astype(jnp.float32) / 2
    x3 = x[:, 2 * Cout:3 * Cout].astype(jnp.float32) / 2
    x4 = x[:, 3 * Cout:4 * Cout].astype(jnp.float32) / 2
    syn = jnp.zeros((B, Cout, 2 * H, 2 * W), jnp.float32)
    syn = syn.at[:, :, 0::2, 0::2].set(x1 - x2 - x3 + x4)
    syn = syn.at[:, :, 1::2, 0::2].set(x1 - x2 + x3 - x4)
    syn = syn.at[:, :, 0::2, 1::2].set(x1 + x2 - x3 - x4)
    syn = syn.at[:, :, 1::2, 1::2].set(x1 + x2 + x3 + x4)
    return syn


if __name__ == "__main__":
    key = jax.random.PRNGKey(0)

    # Test 1: small shape matching the module's typical use.
    # B=2, C=4 (Cout=1), spatial 16x16 -> output (2, 1, 32, 32). Single block.
    x = jax.random.normal(key, (2, 4, 16, 16), dtype=jnp.float32)
    out = jax.block_until_ready(iwt_haar(x))
    ref = iwt_haar_ref(x)
    assert out.shape == (2, 1, 32, 32)
    assert out.dtype == jnp.float32
    assert jnp.allclose(out, ref, atol=1e-5, rtol=1e-5)

    # Test 2: multi-channel blocking with a padded channel grid.
    # Cout=3, TC=2 (forced via small block target) -> cdiv(3,2)=2 channel tiles,
    # second tile partially out of bounds (writes dropped).
    k2 = jax.random.PRNGKey(0)
    x2 = jax.random.normal(k2, (1, 12, 32, 32), dtype=jnp.float32)
    out2 = jax.block_until_ready(iwt_haar(x2, target_block_bytes=64 * 1024))
    ref2 = iwt_haar_ref(x2)
    assert out2.shape == (1, 3, 64, 64)
    assert jnp.allclose(out2, ref2, atol=1e-5, rtol=1e-5)

    # Test 3: H tiling with a padded H grid (H=36, TH=8 -> cdiv=5 tiles,
    # last tile partially out of bounds).
    k3 = jax.random.PRNGKey(0)
    x3 = jax.random.normal(k3, (1, 8, 36, 32), dtype=jnp.float32)
    out3 = jax.block_until_ready(iwt_haar(x3, target_block_bytes=8 * 1024))
    ref3 = iwt_haar_ref(x3)
    assert out3.shape == (1, 2, 72, 64)
    assert jnp.allclose(out3, ref3, atol=1e-5, rtol=1e-5)

    # Test 4: bf16 input (output stays float32, as in the PyTorch module).
    k4 = jax.random.PRNGKey(0)
    x4 = jax.random.normal(k4, (1, 8, 16, 16), dtype=jnp.bfloat16)
    out4 = jax.block_until_ready(iwt_haar(x4))
    ref4 = iwt_haar_ref(x4)
    assert out4.shape == (1, 2, 32, 32)
    assert out4.dtype == jnp.float32
    assert jnp.allclose(out4, ref4, atol=1e-5, rtol=1e-5)

    print("KERNEL_OK")
</pallas_src>

<mosaic_0001>
module attributes {stable_mosaic.version = 11 : i64} {
  func.func @_iwt_haar_kernel(%arg0: i32, %arg1: i32, %arg2: i32, %arg3: memref<1x4x1x16x16xf32, #tpu.memory_space<vmem>>, %arg4: memref<1x1x32x32xf32, #tpu.memory_space<vmem>>) attributes {dimension_semantics = [#tpu.dimension_semantics<parallel>, #tpu.dimension_semantics<parallel>, #tpu.dimension_semantics<parallel>], iteration_bounds = array<i64: 2, 1, 1>, scalar_prefetch = 0 : i64, scratch_operands = 0 : i64, tpu.core_type = #tpu.core_type<tc>, window_params = [{transform_indices = @transform_0, window_bounds = array<i64: 1, 4, 1, 16, 16>}, {transform_indices = @transform_1, window_bounds = array<i64: 1, 1, 32, 32>}]} {
    %c0 = arith.constant 0 : index
    %c0_0 = arith.constant 0 : index
    %c0_1 = arith.constant 0 : index
    %c0_2 = arith.constant 0 : index
    %c0_3 = arith.constant 0 : index
    %0 = vector.load %arg3[%c0, %c0_0, %c0_1, %c0_2, %c0_3] : memref<1x4x1x16x16xf32, #tpu.memory_space<vmem>>, vector<1x1x1x16x16xf32>
    %1 = vector.shape_cast %0 : vector<1x1x1x16x16xf32> to vector<1x16x16xf32>
    %2 = vector.shape_cast %1 : vector<1x16x16xf32> to vector<16x16xf32>
    %c0_4 = arith.constant 0 : index
    %c1 = arith.constant 1 : index
    %c0_5 = arith.constant 0 : index
    %c0_6 = arith.constant 0 : index
    %c0_7 = arith.constant 0 : index
    %3 = vector.load %arg3[%c0_4, %c1, %c0_5, %c0_6, %c0_7] : memref<1x4x1x16x16xf32, #tpu.memory_space<vmem>>, vector<1x1x1x16x16xf32>
    %4 = vector.shape_cast %3 : vector<1x1x1x16x16xf32> to vector<1x16x16xf32>
    %5 = vector.shape_cast %4 : vector<1x16x16xf32> to vector<16x16xf32>
    %c0_8 = arith.constant 0 : index
    %c2 = arith.constant 2 : index
    %c0_9 = arith.constant 0 : index
    %c0_10 = arith.constant 0 : index
    %c0_11 = arith.constant 0 : index
    %6 = vector.load %arg3[%c0_8, %c2, %c0_9, %c0_10, %c0_11] : memref<1x4x1x16x16xf32, #tpu.memory_space<vmem>>, vector<1x1x1x16x16xf32>
    %7 = vector.shape_cast %6 : vector<1x1x1x16x16xf32> to vector<1x16x16xf32>
    %8 = vector.shape_cast %7 : vector<1x16x16xf32> to vector<16x16xf32>
    %c0_12 = arith.constant 0 : index
    %c3 = arith.constant 3 : index
    %c0_13 = arith.constant 0 : index
    %c0_14 = arith.constant 0 : index
    %c0_15 = arith.constant 0 : index
    %9 = vector.load %arg3[%c0_12, %c3, %c0_13, %c0_14, %c0_15] : memref<1x4x1x16x16xf32, #tpu.memory_space<vmem>>, vector<1x1x1x16x16xf32>
    %10 = vector.shape_cast %9 : vector<1x1x1x16x16xf32> to vector<1x16x16xf32>
    %11 = vector.shape_cast %10 : vector<1x16x16xf32> to vector<16x16xf32>
    %12 = arith.addf %2, %11 : vector<16x16xf32>
    %13 = arith.subf %2, %11 : vector<16x16xf32>
    %14 = arith.addf %5, %8 : vector<16x16xf32>
    %15 = arith.subf %5, %8 : vector<16x16xf32>
    %16 = arith.subf %12, %14 : vector<16x16xf32>
    %cst = arith.constant 5.000000e-01 : f32
    %17 = vector.broadcast %cst : f32 to vector<16x16xf32>
    %18 = arith.mulf %16, %17 : vector<16x16xf32>
    %19 = arith.addf %13, %15 : vector<16x16xf32>
    %cst_16 = arith.constant 5.000000e-01 : f32
    %20 = vector.broadcast %cst_16 : f32 to vector<16x16xf32>
    %21 = arith.mulf %19, %20 : vector<16x16xf32>
    %22 = arith.subf %13, %15 : vector<16x16xf32>
    %cst_17 = arith.constant 5.000000e-01 : f32
    %23 = vector.broadcast %cst_17 : f32 to vector<16x16xf32>
    %24 = arith.mulf %22, %23 : vector<16x16xf32>
    %25 = arith.addf %12, %14 : vector<16x16xf32>
    %cst_18 = arith.constant 5.000000e-01 : f32
    %26 = vector.broadcast %cst_18 : f32 to vector<16x16xf32>
    %27 = arith.mulf %25, %26 : vector<16x16xf32>
    %28 = vector.shape_cast %18 : vector<16x16xf32> to vector<16x16x1xf32>
    %29 = vector.shape_cast %21 : vector<16x16xf32> to vector<16x16x1xf32>
    %30 = tpu.concatenate %28, %29 in 2 : vector<16x16x1xf32>, vector<16x16x1xf32> -> vector<16x16x2xf32>
    %31 = vector.shape_cast %30 : vector<16x16x2xf32> to vector<16x32xf32>
    %32 = vector.shape_cast %24 : vector<16x16xf32> to vector<16x16x1xf32>
    %33 = vector.shape_cast %27 : vector<16x16xf32> to vector<16x16x1xf32>
    %34 = tpu.concatenate %32, %33 in 2 : vector<16x16x1xf32>, vector<16x16x1xf32> -> vector<16x16x2xf32>
    %35 = vector.shape_cast %34 : vector<16x16x2xf32> to vector<16x32xf32>
    %36 = vector.shape_cast %31 : vector<16x32xf32> to vector<16x1x32xf32>
    %37 = vector.shape_cast %35 : vector<16x32xf32> to vector<16x1x32xf32>
    %38 = tpu.concatenate %36, %37 in 1 : vector<16x1x32xf32>, vector<16x1x32xf32> -> vector<16x2x32xf32>
    %39 = vector.shape_cast %38 : vector<16x2x32xf32> to vector<32x32xf32>
    %40 = vector.shape_cast %39 : vector<32x32xf32> to vector<1x32x32xf32>
    %c0_19 = arith.constant 0 : index
    %c0_20 = arith.constant 0 : index
    %c0_21 = arith.constant 0 : index
    %c0_22 = arith.constant 0 : index
    %41 = vector.load %arg4[%c0_19, %c0_20, %c0_21, %c0_22] : memref<1x1x32x32xf32, #tpu.memory_space<vmem>>, vector<1x1x32x32xf32>
    %42 = vector.shape_cast %41 : vector<1x1x32x32xf32> to vector<1x32x32xf32>
    %43 = vector.shape_cast %40 : vector<1x32x32xf32> to vector<1x1x32x32xf32>
    tpu.vector_store %arg4[%c0_19, %c0_20, %c0_21, %c0_22], %43 {strides = array<i32>} : memref<1x1x32x32xf32, #tpu.memory_space<vmem>>, vector<1x1x32x32xf32>,
    return
  }
  func.func @transform_0(%arg0: i32, %arg1: i32, %arg2: i32) -> (i32, i32, i32, i32, i32) {
    %c0_i32 = arith.constant 0 : i32
    %c0_i32_0 = arith.constant 0 : i32
    %c0_i32_1 = arith.constant 0 : i32
    return %arg0, %c0_i32, %arg1, %arg2, %c0_i32_0 : i32, i32, i32, i32, i32
  }
  func.func @transform_1(%arg0: i32, %arg1: i32, %arg2: i32) -> (i32, i32, i32, i32) {
    %c0_i32 = arith.constant 0 : i32
    %c0_i32_0 = arith.constant 0 : i32
    return %arg0, %arg1, %arg2, %c0_i32 : i32, i32, i32, i32
  }
}

</mosaic_0001>

<llo_original>
// kernel: tpu_custom_call.1
$region0: #{tpu_custom_call.1}
  #allocation0 [shape = 'u32[]', space=smem, size = 0x4, offset = 0x4, fixed_abs, tag = 'smem constant byte address 0x4 - core index']
  #allocation1 [shape = 'u32[144,128]{1,0:T(1,128)}', space=vmem, size = 0x12000, scoped, tag = 'internal scratch']
  %s0 = inlined_call_operand.hbm [shape: f32[2,4,1,16,16], index: 0, kind: input, shape index: {}]
  %s1 = inlined_call_operand.hbm [shape: f32[2,1,32,32], index: 1, kind: output, shape index: {}]
  %s2 = sld [smem:[#allocation0]]
  $region41: #{tpu_custom_call.1} parent=0
    _
  %s4 = ssub.s32 1, %s2
  %s5 = scalar_select 0, %s4, %s2
  $region1: #{tpu_custom_call.1} parent=0
    #allocation2 [shape = 'u8[65536]{0}', space=vmem, size = 0x10000, scoped, tag = 'input window, operand 0']
    #allocation3 [shape = 's32[2]{0}', space=sflag, size = 0x8, scoped, tag = 'scoped memory for tpu_custom_call.1']
    #allocation4 [shape = 's32[2]{0}', space=sflag, size = 0x8, scoped, tag = 'scoped memory for tpu_custom_call.1']
    #allocation5 [shape = 'u8[32768]{0}', space=vmem, size = 0x8000, scoped, tag = 'output window, operand 0']
    %6 = vsyncpa [#allocation3], 0
    %s7 = scalar_lea.sflag [#allocation3], 1
    %8 = vsyncpa %s7, 0
    %9 = vsyncpa [#allocation4], 0
    %s10 = scalar_lea.sflag [#allocation4], 1
    %11 = vsyncpa %s10, 0
    loop: start=0, step=1, limit=4
    $region2: #{tpu_custom_call.1} parent=1 // loop_pre_header
      _
    $region3: #{tpu_custom_call.1} parent=1 // loop_header
      %s13 = sphi 0, %s17
      %p14 = scmp.ge.s32.totalorder %s13, 4
      %s20 = sphi 0, %s39
      %s21 = sphi 0, %s35
      %s22 = sphi 0, %s31
      %s23 = sphi 0, %s20
      %s24 = sphi 0, %s21
      %s25 = sphi 0, %s22
      %s26 = sphi 0, %s23
      %s27 = sphi 0, %s24
      %s28 = sphi 0, %s25
      %s46 = sphi 0, %s48
      %s49 = sphi 0, %s46
      %s50 = sphi 0, %s49
      %s66 = sphi 0, %s50
      %s76 = sphi 0, %s78
      %s79 = sphi 0, %s76
      %s80 = sphi 0, %s79
      %s96 = sphi 0, %s80
    $region4: #{tpu_custom_call.1} parent=1 // loop_header_branch
      %16 = sbr.rel (%p14) target = $region8
    $region5: #{tpu_custom_call.1} parent=1 // loop_body
      %s18 = ssub.s32 %s13, 1
      %s19 = ssub.s32 %s13, 2
      %s29 = sadd.s32 1, %s22
      %p30 = scmp.ge.s32.totalorder %s29, 1
      %s31 = scalar_select %p30, 0, %s29
      %s32 = sadd.s32 1, %s21
      %s33 = scalar_select %p30, %s32, %s21
      %p34 = scmp.ge.s32.totalorder %s33, 1
      %s35 = scalar_select %p34, 0, %s33
      %s36 = sadd.s32 1, %s20
      %s37 = scalar_select %p34, %s36, %s20
      %p38 = scmp.ge.s32.totalorder %s37, 2
      %s39 = scalar_select %p38, 0, %s37
      %s40 = ssub.s32 %s20, %s39
      %s41 = ssub.s32 %s21, %s35
      %s42 = sor.u32 %s40, %s41
      %s43 = ssub.s32 %s22, %s31
      %s44 = sor.u32 %s42, %s43
      %p45 = scmp.eq.s32.totalorder %s44, 0
      %s47 = sadd.s32 %s46, 1
      %s48 = scalar_select %p45, %s46, %s47
      %p51 = pneg %p45
      %p52 = scmp.eq.s32.totalorder %s13, 1
      %p53 = por %p51, %p52
      %p54 = scmp.ne.s32.totalorder %s46, %s49
      %p55 = scmp.eq.s32.totalorder %s13, 0
      %p56 = por %p54, %p55
      %p57 = scmp.ne.s32.totalorder %s46, %s49
      %p58 = scmp.eq.s32.totalorder %s18, 1
      %p59 = por %p57, %p58
      %p60 = scmp.ne.s32.totalorder %s49, %s50
      %p61 = scmp.eq.s32.totalorder %s18, 0
      %p62 = por %p60, %p61
      %p63 = scmp.ne.s32.totalorder %s49, %s50
      %p64 = scmp.eq.s32.totalorder %s19, 1
      %p65 = por %p63, %p64
      %p67 = scmp.ne.s32.totalorder %s50, %s66
      %p68 = scmp.eq.s32.totalorder %s19, 0
      %p69 = por %p67, %p68
      %s70 = ssub.s32 %s20, %s39
      %s71 = ssub.s32 %s21, %s35
      %s72 = sor.u32 %s70, %s71
      %s73 = ssub.s32 %s22, %s31
      %s74 = sor.u32 %s72, %s73
      %p75 = scmp.eq.s32.totalorder %s74, 0
      %s77 = sadd.s32 %s76, 1
      %s78 = scalar_select %p75, %s76, %s77
      %p81 = pneg %p75
      %p82 = scmp.eq.s32.totalorder %s13, 1
      %p83 = por %p81, %p82
      %p84 = scmp.ne.s32.totalorder %s76, %s79
      %p85 = scmp.eq.s32.totalorder %s13, 0
      %p86 = por %p84, %p85
      %p87 = scmp.ne.s32.totalorder %s76, %s79
      %p88 = scmp.eq.s32.totalorder %s18, 1
      %p89 = por %p87, %p88
      %p90 = scmp.ne.s32.totalorder %s79, %s80
      %p91 = scmp.eq.s32.totalorder %s18, 0
      %p92 = por %p90, %p91
      %p93 = scmp.ne.s32.totalorder %s79, %s80
      %p94 = scmp.eq.s32.totalorder %s19, 1
      %p95 = por %p93, %p94
      %p97 = scmp.ne.s32.totalorder %s80, %s96
      %p98 = scmp.eq.s32.totalorder %s19, 0
      %p99 = por %p97, %p98
      %p100 = scmp.le.s32.totalorder 1, %s13
      %p101 = scmp.lt.s32.totalorder %s13, 3
      %p102 = pnand %p100, %p101
      %p103 = pneg %p102
      // Predicated region
      $region9: #{tpu_custom_call.1} parent=5 // pred_check
        _
      $region10: #{tpu_custom_call.1} parent=5 // pred_check_branch
        %105 = sbr.rel (%p102) target = $region12
      $region11: #{tpu_custom_call.1} parent=5 // pred_region
        %s106 = ssub.s32 %s13, 1
      $region12: #{tpu_custom_call.1} parent=5 // pred_fallthru
        _
      %p107 = scmp.lt.s32.totalorder %s13, 2
      // Predicated region
      $region13: #{tpu_custom_call.1} parent=5 // pred_check
        %p108 = pneg %p107
      $region14: #{tpu_custom_call.1} parent=5 // pred_check_branch
        %110 = sbr.rel (%p108) target = $region16
      $region15: #{tpu_custom_call.1} parent=5 // pred_region
        // Predicated region
        $region17: #{tpu_custom_call.1} parent=15 // pred_check
          %p111 = pneg %p56
        $region18: #{tpu_custom_call.1} parent=15 // pred_check_branch
          %113 = sbr.rel (%p111) target = $region20
        $region19: #{tpu_custom_call.1} parent=15 // pred_region
          %s114 = sand.u32 %s46, 1
          %s115 = scalar_lea.sflag [#allocation3], %s114
          %s116 = sand.u32 %s46, 1
          %s117 = smul.addr %s116, 64
          %s118 = scalar_lea.vmem [#allocation2], %s117
          %s119 = smul.u32 2, %s22
          %s121 = ssub.s32 1024, 1024
          %122 = vsyncadd %s115, %s121
          %s123 = smul.addr %s21, 2
          %s124 = sadd.s32 %s119, %s123
          %s125 = smul.addr %s20, 8
          %s126 = sadd.s32 %s124, %s125
          %s127 = smul.addr %s126, 128
          %s128 = scalar_lea.hbm %s0, %s127
          %s129 = sshll.u32 %s118, 4
          %s130 = int_to_ptr.vmem [resolvable:$true] %s129
          %135 = dma.hbm_to_vmem [thread:$0]  %s128, 1024, %s130, %s115, 128, 128, 8
        $region20: #{tpu_custom_call.1} parent=15 // pred_fallthru
          _
      $region16: #{tpu_custom_call.1} parent=5 // pred_fallthru
        _
      %p136 = scmp.le.s32.totalorder 1, %s13
      %p137 = scmp.lt.s32.totalorder %s13, 3
      %p138 = pnand %p136, %p137
      %p139 = pneg %p138
      // Predicated region
      $region21: #{tpu_custom_call.1} parent=5 // pred_check
        _
      $region22: #{tpu_custom_call.1} parent=5 // pred_check_branch
        %141 = sbr.rel (%p138) target = $region24
      $region23: #{tpu_custom_call.1} parent=5 // pred_region
        %s142 = ssub.s32 %s13, 1
        %s143 = sand.u32 %s49, 1
        %s144 = scalar_lea.sflag [#allocation3], %s143
        %s145 = sand.u32 %s49, 1
        %s146 = smul.addr %s145, 64
        %s147 = scalar_lea.vmem [#allocation2], %s146
        // Predicated region
        $region25: #{tpu_custom_call.1} parent=23 // pred_check
          %p148 = pneg %p62
        $region26: #{tpu_custom_call.1} parent=23 // pred_check_branch
          %150 = sbr.rel (%p148) target = $region28
        $region27: #{tpu_custom_call.1} parent=23 // pred_region
          %151 = dma.done %s144, 1024
        $region28: #{tpu_custom_call.1} parent=23 // pred_fallthru
          _
        %s152 = sand.u32 %s49, 1
        %s153 = scalar_lea.sflag [#allocation3], %s152
        %s154 = sand.u32 %s49, 1
        %s155 = smul.addr %s154, 64
        %s156 = scalar_lea.vmem [#allocation2], %s155
        %p157 = pneg %p62
        %p158 = pneg %p59
        %p159 = pneg %p92
        %p160 = pneg %p89
        %s161 = sand.u32 %s79, 1
        %s162 = scalar_lea.sflag [#allocation4], %s161
        %s163 = sand.u32 %s79, 1
        %s164 = smul.addr %s163, 32
        %s165 = scalar_lea.vmem [#allocation5], %s164
        %s166 = smul.u32 2, %s25
        %s167 = smul.u32 4, %s25
        %v168 = vld [vmem:[%s147] sm:$0xff]
        %v169 = vld [vmem:[%s147 + $0x8] sm:$0xff]
        %s170 = scalar_lea.vmem %s147, 16 [#allocation2]
        %v171 = vld [vmem:[%s170] sm:$0xff]
        %v172 = vld [vmem:[%s170 + $0x8] sm:$0xff]
        %s173 = scalar_lea.vmem %s147, 32 [#allocation2]
        %v174 = vld [vmem:[%s173] sm:$0xff]
        %v175 = vld [vmem:[%s173 + $0x8] sm:$0xff]
        %s176 = scalar_lea.vmem %s147, 48 [#allocation2]
        %v177 = vld [vmem:[%s176] sm:$0xff]
        %v178 = vld [vmem:[%s176 + $0x8] sm:$0xff]
        %v179 = vadd.f32 %v168, %v177
        %v180 = vadd.f32 %v169, %v178
        %v181 = vsub.f32 %v168, %v177
        %v182 = vsub.f32 %v169, %v178
        %v183 = vadd.f32 %v171, %v174
        %v184 = vadd.f32 %v172, %v175
        %v185 = vsub.f32 %v171, %v174
        %v186 = vsub.f32 %v172, %v175
        %v187 = vsub.f32 %v179, %v183
        %v188 = vsub.f32 %v180, %v184
        %v189 = vmul.f32 %v187, 0.5
        %v190 = vmul.f32 %v188, 0.5
        %v191 = vadd.f32 %v181, %v185
        %v192 = vadd.f32 %v182, %v186
        %v193 = vmul.f32 %v191, 0.5
        %v194 = vmul.f32 %v192, 0.5
        %v195 = vsub.f32 %v181, %v185
        %v196 = vsub.f32 %v182, %v186
        %v197 = vmul.f32 %v195, 0.5
        %v198 = vmul.f32 %v196, 0.5
        %v199 = vadd.f32 %v179, %v183
        %v200 = vadd.f32 %v180, %v184
        %v201 = vmul.f32 %v199, 0.5
        %v202 = vmul.f32 %v200, 0.5
        %v203 = vlaneseq
        %v204 = vshrl.u32 %v203, 7
        %v205 = vsub.s32 0, %v204
        %v206 = vrot.slane %v189, %v205
        %208 = vbcast.lane.b32.xlu0 %v206, 256
        %v209 = vpop.permute.xlu0 %208
        %s211 = sor.u32 256, 8
        %212 = vbcast.lane.b32.xlu0 %v206, %s211
        %v213 = vpop.permute.xlu0 %212
        %v214 = vlaneseq
        %v215 = vshrl.u32 %v214, 7
        %v216 = vsub.s32 1, %v215
        %v217 = vrot.slane %v189, %v216
        %219 = vbcast.lane.b32.xlu0 %v217, 256
        %v220 = vpop.permute.xlu0 %219
        %s222 = sor.u32 256, 8
        %223 = vbcast.lane.b32.xlu0 %v217, %s222
        %v224 = vpop.permute.xlu0 %223
        %v225 = vlaneseq
        %v226 = vshrl.u32 %v225, 7
        %v227 = vsub.s32 2, %v226
        %v228 = vrot.slane %v189, %v227
        %230 = vbcast.lane.b32.xlu0 %v228, 256
        %v231 = vpop.permute.xlu0 %230
        %s233 = sor.u32 256, 8
        %234 = vbcast.lane.b32.xlu0 %v228, %s233
        %v235 = vpop.permute.xlu0 %234
        %v236 = vlaneseq
        %v237 = vshrl.u32 %v236, 7
        %v238 = vsub.s32 3, %v237
        %v239 = vrot.slane %v189, %v238
        %241 = vbcast.lane.b32.xlu0 %v239, 256
        %v242 = vpop.permute.xlu0 %241
        %s244 = sor.u32 256, 8
        %245 = vbcast.lane.b32.xlu0 %v239, %s244
        %v246 = vpop.permute.xlu0 %245
        %v247 = vlaneseq
        %v248 = vshrl.u32 %v247, 7
        %v249 = vsub.s32 4, %v248
        %v250 = vrot.slane %v189, %v249
        %252 = vbcast.lane.b32.xlu0 %v250, 256
        %v253 = vpop.permute.xlu0 %252
        %s255 = sor.u32 256, 8
        %256 = vbcast.lane.b32.xlu0 %v250, %s255
        %v257 = vpop.permute.xlu0 %256
        %v258 = vlaneseq
        %v259 = vshrl.u32 %v258, 7
        %v260 = vsub.s32 5, %v259
        %v261 = vrot.slane %v189, %v260
        %263 = vbcast.lane.b32.xlu0 %v261, 256
        %v264 = vpop.permute.xlu0 %263
        %s266 = sor.u32 256, 8
        %267 = vbcast.lane.b32.xlu0 %v261, %s266
        %v268 = vpop.permute.xlu0 %267
        %v269 = vlaneseq
        %v270 = vshrl.u32 %v269, 7
        %v271 = vsub.s32 6, %v270
        %v272 = vrot.slane %v189, %v271
        %274 = vbcast.lane.b32.xlu0 %v272, 256
        %v275 = vpop.permute.xlu0 %274
        %s277 = sor.u32 256, 8
        %278 = vbcast.lane.b32.xlu0 %v272, %s277
        %v279 = vpop.permute.xlu0 %278
        %v280 = vlaneseq
        %v281 = vshrl.u32 %v280, 7
        %v282 = vsub.s32 7, %v281
        %v283 = vrot.slane %v189, %v282
        %285 = vbcast.lane.b32.xlu0 %v283, 256
        %v286 = vpop.permute.xlu0 %285
        %s288 = sor.u32 256, 8
        %289 = vbcast.lane.b32.xlu0 %v283, %s288
        %v290 = vpop.permute.xlu0 %289
        %v291 = vlaneseq
        %v292 = vshrl.u32 %v291, 7
        %v293 = vsub.s32 0, %v292
        %v294 = vrot.slane %v190, %v293
        %296 = vbcast.lane.b32.xlu0 %v294, 256
        %v297 = vpop.permute.xlu0 %296
        %s299 = sor.u32 256, 8
        %300 = vbcast.lane.b32.xlu0 %v294, %s299
        %v301 = vpop.permute.xlu0 %300
        %v302 = vlaneseq
        %v303 = vshrl.u32 %v302, 7
        %v304 = vsub.s32 1, %v303
        %v305 = vrot.slane %v190, %v304
        %307 = vbcast.lane.b32.xlu0 %v305, 256
        %v308 = vpop.permute.xlu0 %307
        %s310 = sor.u32 256, 8
        %311 = vbcast.lane.b32.xlu0 %v305, %s310
        %v312 = vpop.permute.xlu0 %311
        %v313 = vlaneseq
        %v314 = vshrl.u32 %v313, 7
        %v315 = vsub.s32 2, %v314
        %v316 = vrot.slane %v190, %v315
        %318 = vbcast.lane.b32.xlu0 %v316, 256
        %v319 = vpop.permute.xlu0 %318
        %s321 = sor.u32 256, 8
        %322 = vbcast.lane.b32.xlu0 %v316, %s321
        %v323 = vpop.permute.xlu0 %322
        %v324 = vlaneseq
        %v325 = vshrl.u32 %v324, 7
        %v326 = vsub.s32 3, %v325
        %v327 = vrot.slane %v190, %v326
        %329 = vbcast.lane.b32.xlu0 %v327, 256
        %v330 = vpop.permute.xlu0 %329
        %s332 = sor.u32 256, 8
        %333 = vbcast.lane.b32.xlu0 %v327, %s332
        %v334 = vpop.permute.xlu0 %333
        %v335 = vlaneseq
        %v336 = vshrl.u32 %v335, 7
        %v337 = vsub.s32 4, %v336
        %v338 = vrot.slane %v190, %v337
        %340 = vbcast.lane.b32.xlu0 %v338, 256
        %v341 = vpop.permute.xlu0 %340
        %s343 = sor.u32 256, 8
        %344 = vbcast.lane.b32.xlu0 %v338, %s343
        %v345 = vpop.permute.xlu0 %344
        %v346 = vlaneseq
        %v347 = vshrl.u32 %v346, 7
        %v348 = vsub.s32 5, %v347
        %v349 = vrot.slane %v190, %v348
        %351 = vbcast.lane.b32.xlu0 %v349, 256
        %v352 = vpop.permute.xlu0 %351
        %s354 = sor.u32 256, 8
        %355 = vbcast.lane.b32.xlu0 %v349, %s354
        %v356 = vpop.permute.xlu0 %355
        %v357 = vlaneseq
        %v358 = vshrl.u32 %v357, 7
        %v359 = vsub.s32 6, %v358
        %v360 = vrot.slane %v190, %v359
        %362 = vbcast.lane.b32.xlu0 %v360, 256
        %v363 = vpop.permute.xlu0 %362
        %s365 = sor.u32 256, 8
        %366 = vbcast.lane.b32.xlu0 %v360, %s365
        %v367 = vpop.permute.xlu0 %366
        %v368 = vlaneseq
        %v369 = vshrl.u32 %v368, 7
        %v370 = vsub.s32 7, %v369
        %v371 = vrot.slane %v190, %v370
        %373 = vbcast.lane.b32.xlu0 %v371, 256
        %v374 = vpop.permute.xlu0 %373
        %s376 = sor.u32 256, 8
        %377 = vbcast.lane.b32.xlu0 %v371, %s376
        %v378 = vpop.permute.xlu0 %377
        %v379 = vlaneseq
        %v380 = vshrl.u32 %v379, 7
        %v381 = vsub.s32 0, %v380
        %v382 = vrot.slane %v193, %v381
        %384 = vbcast.lane.b32.xlu0 %v382, 256
        %v385 = vpop.permute.xlu0 %384
        %s387 = sor.u32 256, 8
        %388 = vbcast.lane.b32.xlu0 %v382, %s387
        %v389 = vpop.permute.xlu0 %388
        %v390 = vlaneseq
        %v391 = vshrl.u32 %v390, 7
        %v392 = vsub.s32 1, %v391
        %v393 = vrot.slane %v193, %v392
        %395 = vbcast.lane.b32.xlu0 %v393, 256
        %v396 = vpop.permute.xlu0 %395
        %s398 = sor.u32 256, 8
        %399 = vbcast.lane.b32.xlu0 %v393, %s398
        %v400 = vpop.permute.xlu0 %399
        %v401 = vlaneseq
        %v402 = vshrl.u32 %v401, 7
        %v403 = vsub.s32 2, %v402
        %v404 = vrot.slane %v193, %v403
        %406 = vbcast.lane.b32.xlu0 %v404, 256
        %v407 = vpop.permute.xlu0 %406
        %s409 = sor.u32 256, 8
        %410 = vbcast.lane.b32.xlu0 %v404, %s409
        %v411 = vpop.permute.xlu0 %410
        %v412 = vlaneseq
        %v413 = vshrl.u32 %v412, 7
        %v414 = vsub.s32 3, %v413
        %v415 = vrot.slane %v193, %v414
        %417 = vbcast.lane.b32.xlu0 %v415, 256
        %v418 = vpop.permute.xlu0 %417
        %s420 = sor.u32 256, 8
        %421 = vbcast.lane.b32.xlu0 %v415, %s420
        %v422 = vpop.permute.xlu0 %421
        %v423 = vlaneseq
        %v424 = vshrl.u32 %v423, 7
        %v425 = vsub.s32 4, %v424
        %v426 = vrot.slane %v193, %v425
        %428 = vbcast.lane.b32.xlu0 %v426, 256
        %v429 = vpop.permute.xlu0 %428
        %s431 = sor.u32 256, 8
        %432 = vbcast.lane.b32.xlu0 %v426, %s431
        %v433 = vpop.permute.xlu0 %432
        %v434 = vlaneseq
        %v435 = vshrl.u32 %v434, 7
        %v436 = vsub.s32 5, %v435
        %v437 = vrot.slane %v193, %v436
        %439 = vbcast.lane.b32.xlu0 %v437, 256
        %v440 = vpop.permute.xlu0 %439
        %s442 = sor.u32 256, 8
        %443 = vbcast.lane.b32.xlu0 %v437, %s442
        %v444 = vpop.permute.xlu0 %443
        %v445 = vlaneseq
        %v446 = vshrl.u32 %v445, 7
        %v447 = vsub.s32 6, %v446
        %v448 = vrot.slane %v193, %v447
        %450 = vbcast.lane.b32.xlu0 %v448, 256
        %v451 = vpop.permute.xlu0 %450
        %s453 = sor.u32 256, 8
        %454 = vbcast.lane.b32.xlu0 %v448, %s453
        %v455 = vpop.permute.xlu0 %454
        %v456 = vlaneseq
        %v457 = vshrl.u32 %v456, 7
        %v458 = vsub.s32 7, %v457
        %v459 = vrot.slane %v193, %v458
        %461 = vbcast.lane.b32.xlu0 %v459, 256
        %v462 = vpop.permute.xlu0 %461
        %s464 = sor.u32 256, 8
        %465 = vbcast.lane.b32.xlu0 %v459, %s464
        %v466 = vpop.permute.xlu0 %465
        %v467 = vlaneseq
        %v468 = vshrl.u32 %v467, 7
        %v469 = vsub.s32 0, %v468
        %v470 = vrot.slane %v194, %v469
        %472 = vbcast.lane.b32.xlu0 %v470, 256
        %v473 = vpop.permute.xlu0 %472
        %s475 = sor.u32 256, 8
        %476 = vbcast.lane.b32.xlu0 %v470, %s475
        %v477 = vpop.permute.xlu0 %476
        %v478 = vlaneseq
        %v479 = vshrl.u32 %v478, 7
        %v480 = vsub.s32 1, %v479
        %v481 = vrot.slane %v194, %v480
        %483 = vbcast.lane.b32.xlu0 %v481, 256
        %v484 = vpop.permute.xlu0 %483
        %s486 = sor.u32 256, 8
        %487 = vbcast.lane.b32.xlu0 %v481, %s486
        %v488 = vpop.permute.xlu0 %487
        %v489 = vlaneseq
        %v490 = vshrl.u32 %v489, 7
        %v491 = vsub.s32 2, %v490
        %v492 = vrot.slane %v194, %v491
        %494 = vbcast.lane.b32.xlu0 %v492, 256
        %v495 = vpop.permute.xlu0 %494
        %s497 = sor.u32 256, 8
        %498 = vbcast.lane.b32.xlu0 %v492, %s497
        %v499 = vpop.permute.xlu0 %498
        %v500 = vlaneseq
        %v501 = vshrl.u32 %v500, 7
        %v502 = vsub.s32 3, %v501
        %v503 = vrot.slane %v194, %v502
        %505 = vbcast.lane.b32.xlu0 %v503, 256
        %v506 = vpop.permute.xlu0 %505
        %s508 = sor.u32 256, 8
        %509 = vbcast.lane.b32.xlu0 %v503, %s508
        %v510 = vpop.permute.xlu0 %509
        %v511 = vlaneseq
        %v512 = vshrl.u32 %v511, 7
        %v513 = vsub.s32 4, %v512
        %v514 = vrot.slane %v194, %v513
        %516 = vbcast.lane.b32.xlu0 %v514, 256
        %v517 = vpop.permute.xlu0 %516
        %s519 = sor.u32 256, 8
        %520 = vbcast.lane.b32.xlu0 %v514, %s519
        %v521 = vpop.permute.xlu0 %520
        %v522 = vlaneseq
        %v523 = vshrl.u32 %v522, 7
        %v524 = vsub.s32 5, %v523
        %v525 = vrot.slane %v194, %v524
        %527 = vbcast.lane.b32.xlu0 %v525, 256
        %v528 = vpop.permute.xlu0 %527
        %s530 = sor.u32 256, 8
        %531 = vbcast.lane.b32.xlu0 %v525, %s530
        %v532 = vpop.permute.xlu0 %531
        %v533 = vlaneseq
        %v534 = vshrl.u32 %v533, 7
        %v535 = vsub.s32 6, %v534
        %v536 = vrot.slane %v194, %v535
        %538 = vbcast.lane.b32.xlu0 %v536, 256
        %v539 = vpop.permute.xlu0 %538
        %s541 = sor.u32 256, 8
        %542 = vbcast.lane.b32.xlu0 %v536, %s541
        %v543 = vpop.permute.xlu0 %542
        %v544 = vlaneseq
        %v545 = vshrl.u32 %v544, 7
        %v546 = vsub.s32 7, %v545
        %v547 = vrot.slane %v194, %v546
        %549 = vbcast.lane.b32.xlu0 %v547, 256
        %v550 = vpop.permute.xlu0 %549
        %s552 = sor.u32 256, 8
        %553 = vbcast.lane.b32.xlu0 %v547, %s552
        %v554 = vpop.permute.xlu0 %553
        %vm555 = vcmask 7168
        %v556 = vsel %vm555, %v209, %v385
        %v557 = vsel %vm555, %v213, %v389
        %v558 = vsel %vm555, %v220, %v396
        %v559 = vsel %vm555, %v224, %v400
        %v560 = vsel %vm555, %v231, %v407
        %v561 = vsel %vm555, %v235, %v411
        %v562 = vsel %vm555, %v242, %v418
        %v563 = vsel %vm555, %v246, %v422
        %v564 = vsel %vm555, %v253, %v429
        %v565 = vsel %vm555, %v257, %v433
        %v566 = vsel %vm555, %v264, %v440
        %v567 = vsel %vm555, %v268, %v444
        %v568 = vsel %vm555, %v275, %v451
        %v569 = vsel %vm555, %v279, %v455
        %v570 = vsel %vm555, %v286, %v462
        %v571 = vsel %vm555, %v290, %v466
        %v572 = vsel %vm555, %v297, %v473
        %v573 = vsel %vm555, %v301, %v477
        %v574 = vsel %vm555, %v308, %v484
        %v575 = vsel %vm555, %v312, %v488
        %v576 = vsel %vm555, %v319, %v495
        %v577 = vsel %vm555, %v323, %v499
        %v578 = vsel %vm555, %v330, %v506
        %v579 = vsel %vm555, %v334, %v510
        %v580 = vsel %vm555, %v341, %v517
        %v581 = vsel %vm555, %v345, %v521
        %v582 = vsel %vm555, %v352, %v528
        %v583 = vsel %vm555, %v356, %v532
        %v584 = vsel %vm555, %v363, %v539
        %v585 = vsel %vm555, %v367, %v543
        %v586 = vsel %vm555, %v374, %v550
        %v587 = vsel %vm555, %v378, %v554
        %v588 = vlaneseq
        %v589 = vshrl.u32 %v588, 7
        %v590 = vsub.s32 0, %v589
        %v591 = vrot.slane %v197, %v590
        %593 = vbcast.lane.b32.xlu0 %v591, 256
        %v594 = vpop.permute.xlu0 %593
        %s596 = sor.u32 256, 8
        %597 = vbcast.lane.b32.xlu0 %v591, %s596
        %v598 = vpop.permute.xlu0 %597
        %v599 = vlaneseq
        %v600 = vshrl.u32 %v599, 7
        %v601 = vsub.s32 1, %v600
        %v602 = vrot.slane %v197, %v601
        %604 = vbcast.lane.b32.xlu0 %v602, 256
        %v605 = vpop.permute.xlu0 %604
        %s607 = sor.u32 256, 8
        %608 = vbcast.lane.b32.xlu0 %v602, %s607
        %v609 = vpop.permute.xlu0 %608
        %v610 = vlaneseq
        %v611 = vshrl.u32 %v610, 7
        %v612 = vsub.s32 2, %v611
        %v613 = vrot.slane %v197, %v612
        %615 = vbcast.lane.b32.xlu0 %v613, 256
        %v616 = vpop.permute.xlu0 %615
        %s618 = sor.u32 256, 8
        %619 = vbcast.lane.b32.xlu0 %v613, %s618
        %v620 = vpop.permute.xlu0 %619
        %v621 = vlaneseq
        %v622 = vshrl.u32 %v621, 7
        %v623 = vsub.s32 3, %v622
        %v624 = vrot.slane %v197, %v623
        %626 = vbcast.lane.b32.xlu0 %v624, 256
        %v627 = vpop.permute.xlu0 %626
        %s629 = sor.u32 256, 8
        %630 = vbcast.lane.b32.xlu0 %v624, %s629
        %v631 = vpop.permute.xlu0 %630
        %v632 = vlaneseq
        %v633 = vshrl.u32 %v632, 7
        %v634 = vsub.s32 4, %v633
        %v635 = vrot.slane %v197, %v634
        %637 = vbcast.lane.b32.xlu0 %v635, 256
        %v638 = vpop.permute.xlu0 %637
        %s640 = sor.u32 256, 8
        %641 = vbcast.lane.b32.xlu0 %v635, %s640
        %v642 = vpop.permute.xlu0 %641
        %v643 = vlaneseq
        %v644 = vshrl.u32 %v643, 7
        %v645 = vsub.s32 5, %v644
        %v646 = vrot.slane %v197, %v645
        %648 = vbcast.lane.b32.xlu0 %v646, 256
        %v649 = vpop.permute.xlu0 %648
        %s651 = sor.u32 256, 8
        %652 = vbcast.lane.b32.xlu0 %v646, %s651
        %v653 = vpop.permute.xlu0 %652
        %v654 = vlaneseq
        %v655 = vshrl.u32 %v654, 7
        %v656 = vsub.s32 6, %v655
        %v657 = vrot.slane %v197, %v656
        %659 = vbcast.lane.b32.xlu0 %v657, 256
        %v660 = vpop.permute.xlu0 %659
        %s662 = sor.u32 256, 8
        %663 = vbcast.lane.b32.xlu0 %v657, %s662
        %v664 = vpop.permute.xlu0 %663
        %v665 = vlaneseq
        %v666 = vshrl.u32 %v665, 7
        %v667 = vsub.s32 7, %v666
        %v668 = vrot.slane %v197, %v667
        %670 = vbcast.lane.b32.xlu0 %v668, 256
        %v671 = vpop.permute.xlu0 %670
        %s673 = sor.u32 256, 8
        %674 = vbcast.lane.b32.xlu0 %v668, %s673
        %v675 = vpop.permute.xlu0 %674
        %v676 = vlaneseq
        %v677 = vshrl.u32 %v676, 7
        %v678 = vsub.s32 0, %v677
        %v679 = vrot.slane %v198, %v678
        %681 = vbcast.lane.b32.xlu0 %v679, 256
        %v682 = vpop.permute.xlu0 %681
        %s684 = sor.u32 256, 8
        %685 = vbcast.lane.b32.xlu0 %v679, %s684
        %v686 = vpop.permute.xlu0 %685
        %v687 = vlaneseq
        %v688 = vshrl.u32 %v687, 7
        %v689 = vsub.s32 1, %v688
        %v690 = vrot.slane %v198, %v689
        %692 = vbcast.lane.b32.xlu0 %v690, 256
        %v693 = vpop.permute.xlu0 %692
        %s695 = sor.u32 256, 8
        %696 = vbcast.lane.b32.xlu0 %v690, %s695
        %v697 = vpop.permute.xlu0 %696
        %v698 = vlaneseq
        %v699 = vshrl.u32 %v698, 7
        %v700 = vsub.s32 2, %v699
        %v701 = vrot.slane %v198, %v700
        %703 = vbcast.lane.b32.xlu0 %v701, 256
        %v704 = vpop.permute.xlu0 %703
        %s706 = sor.u32 256, 8
        %707 = vbcast.lane.b32.xlu0 %v701, %s706
        %v708 = vpop.permute.xlu0 %707
        %v709 = vlaneseq
        %v710 = vshrl.u32 %v709, 7
        %v711 = vsub.s32 3, %v710
        %v712 = vrot.slane %v198, %v711
        %714 = vbcast.lane.b32.xlu0 %v712, 256
        %v715 = vpop.permute.xlu0 %714
        %s717 = sor.u32 256, 8
        %718 = vbcast.lane.b32.xlu0 %v712, %s717
        %v719 = vpop.permute.xlu0 %718
        %v720 = vlaneseq
        %v721 = vshrl.u32 %v720, 7
        %v722 = vsub.s32 4, %v721
        %v723 = vrot.slane %v198, %v722
        %725 = vbcast.lane.b32.xlu0 %v723, 256
        %v726 = vpop.permute.xlu0 %725
        %s728 = sor.u32 256, 8
        %729 = vbcast.lane.b32.xlu0 %v723, %s728
        %v730 = vpop.permute.xlu0 %729
        %v731 = vlaneseq
        %v732 = vshrl.u32 %v731, 7
        %v733 = vsub.s32 5, %v732
        %v734 = vrot.slane %v198, %v733
        %736 = vbcast.lane.b32.xlu0 %v734, 256
        %v737 = vpop.permute.xlu0 %736
        %s739 = sor.u32 256, 8
        %740 = vbcast.lane.b32.xlu0 %v734, %s739
        %v741 = vpop.permute.xlu0 %740
        %v742 = vlaneseq
        %v743 = vshrl.u32 %v742, 7
        %v744 = vsub.s32 6, %v743
        %v745 = vrot.slane %v198, %v744
        %747 = vbcast.lane.b32.xlu0 %v745, 256
        %v748 = vpop.permute.xlu0 %747
        %s750 = sor.u32 256, 8
        %751 = vbcast.lane.b32.xlu0 %v745, %s750
        %v752 = vpop.permute.xlu0 %751
        %v753 = vlaneseq
        %v754 = vshrl.u32 %v753, 7
        %v755 = vsub.s32 7, %v754
        %v756 = vrot.slane %v198, %v755
        %758 = vbcast.lane.b32.xlu0 %v756, 256
        %v759 = vpop.permute.xlu0 %758
        %s761 = sor.u32 256, 8
        %762 = vbcast.lane.b32.xlu0 %v756, %s761
        %v763 = vpop.permute.xlu0 %762
        %v764 = vlaneseq
        %v765 = vshrl.u32 %v764, 7
        %v766 = vsub.s32 0, %v765
        %v767 = vrot.slane %v201, %v766
        %769 = vbcast.lane.b32.xlu0 %v767, 256
        %v770 = vpop.permute.xlu0 %769
        %s772 = sor.u32 256, 8
        %773 = vbcast.lane.b32.xlu0 %v767, %s772
        %v774 = vpop.permute.xlu0 %773
        %v775 = vlaneseq
        %v776 = vshrl.u32 %v775, 7
        %v777 = vsub.s32 1, %v776
        %v778 = vrot.slane %v201, %v777
        %780 = vbcast.lane.b32.xlu0 %v778, 256
        %v781 = vpop.permute.xlu0 %780
        %s783 = sor.u32 256, 8
        %784 = vbcast.lane.b32.xlu0 %v778, %s783
        %v785 = vpop.permute.xlu0 %784
        %v786 = vlaneseq
        %v787 = vshrl.u32 %v786, 7
        %v788 = vsub.s32 2, %v787
        %v789 = vrot.slane %v201, %v788
        %791 = vbcast.lane.b32.xlu0 %v789, 256
        %v792 = vpop.permute.xlu0 %791
        %s794 = sor.u32 256, 8
        %795 = vbcast.lane.b32.xlu0 %v789, %s794
        %v796 = vpop.permute.xlu0 %795
        %v797 = vlaneseq
        %v798 = vshrl.u32 %v797, 7
        %v799 = vsub.s32 3, %v798
        %v800 = vrot.slane %v201, %v799
        %802 = vbcast.lane.b32.xlu0 %v800, 256
        %v803 = vpop.permute.xlu0 %802
        %s805 = sor.u32 256, 8
        %806 = vbcast.lane.b32.xlu0 %v800, %s805
        %v807 = vpop.permute.xlu0 %806
        %v808 = vlaneseq
        %v809 = vshrl.u32 %v808, 7
        %v810 = vsub.s32 4, %v809
        %v811 = vrot.slane %v201, %v810
        %813 = vbcast.lane.b32.xlu0 %v811, 256
        %v814 = vpop.permute.xlu0 %813
        %s816 = sor.u32 256, 8
        %817 = vbcast.lane.b32.xlu0 %v811, %s816
        %v818 = vpop.permute.xlu0 %817
        %v819 = vlaneseq
        %v820 = vshrl.u32 %v819, 7
        %v821 = vsub.s32 5, %v820
        %v822 = vrot.slane %v201, %v821
        %824 = vbcast.lane.b32.xlu0 %v822, 256
        %v825 = vpop.permute.xlu0 %824
        %s827 = sor.u32 256, 8
        %828 = vbcast.lane.b32.xlu0 %v822, %s827
        %v829 = vpop.permute.xlu0 %828
        %v830 = vlaneseq
        %v831 = vshrl.u32 %v830, 7
        %v832 = vsub.s32 6, %v831
        %v833 = vrot.slane %v201, %v832
        %835 = vbcast.lane.b32.xlu0 %v833, 256
        %v836 = vpop.permute.xlu0 %835
        %s838 = sor.u32 256, 8
        %839 = vbcast.lane.b32.xlu0 %v833, %s838
        %v840 = vpop.permute.xlu0 %839
        %v841 = vlaneseq
        %v842 = vshrl.u32 %v841, 7
        %v843 = vsub.s32 7, %v842
        %v844 = vrot.slane %v201, %v843
        %846 = vbcast.lane.b32.xlu0 %v844, 256
        %v847 = vpop.permute.xlu0 %846
        %s849 = sor.u32 256, 8
        %850 = vbcast.lane.b32.xlu0 %v844, %s849
        %v851 = vpop.permute.xlu0 %850
        %v852 = vlaneseq
        %v853 = vshrl.u32 %v852, 7
        %v854 = vsub.s32 0, %v853
        %v855 = vrot.slane %v202, %v854
        %857 = vbcast.lane.b32.xlu0 %v855, 256
        %v858 = vpop.permute.xlu0 %857
        %s860 = sor.u32 256, 8
        %861 = vbcast.lane.b32.xlu0 %v855, %s860
        %v862 = vpop.permute.xlu0 %861
        %v863 = vlaneseq
        %v864 = vshrl.u32 %v863, 7
        %v865 = vsub.s32 1, %v864
        %v866 = vrot.slane %v202, %v865
        %868 = vbcast.lane.b32.xlu0 %v866, 256
        %v869 = vpop.permute.xlu0 %868
        %s871 = sor.u32 256, 8
        %872 = vbcast.lane.b32.xlu0 %v866, %s871
        %v873 = vpop.permute.xlu0 %872
        %v874 = vlaneseq
        %v875 = vshrl.u32 %v874, 7
        %v876 = vsub.s32 2, %v875
        %v877 = vrot.slane %v202, %v876
        %879 = vbcast.lane.b32.xlu0 %v877, 256
        %v880 = vpop.permute.xlu0 %879
        %s882 = sor.u32 256, 8
        %883 = vbcast.lane.b32.xlu0 %v877, %s882
        %v884 = vpop.permute.xlu0 %883
        %v885 = vlaneseq
        %v886 = vshrl.u32 %v885, 7
        %v887 = vsub.s32 3, %v886
        %v888 = vrot.slane %v202, %v887
        %890 = vbcast.lane.b32.xlu0 %v888, 256
        %v891 = vpop.permute.xlu0 %890
        %s893 = sor.u32 256, 8
        %894 = vbcast.lane.b32.xlu0 %v888, %s893
        %v895 = vpop.permute.xlu0 %894
        %v896 = vlaneseq
        %v897 = vshrl.u32 %v896, 7
        %v898 = vsub.s32 4, %v897
        %v899 = vrot.slane %v202, %v898
        %901 = vbcast.lane.b32.xlu0 %v899, 256
        %v902 = vpop.permute.xlu0 %901
        %s904 = sor.u32 256, 8
        %905 = vbcast.lane.b32.xlu0 %v899, %s904
        %v906 = vpop.permute.xlu0 %905
        %v907 = vlaneseq
        %v908 = vshrl.u32 %v907, 7
        %v909 = vsub.s32 5, %v908
        %v910 = vrot.slane %v202, %v909
        %912 = vbcast.lane.b32.xlu0 %v910, 256
        %v913 = vpop.permute.xlu0 %912
        %s915 = sor.u32 256, 8
        %916 = vbcast.lane.b32.xlu0 %v910, %s915
        %v917 = vpop.permute.xlu0 %916
        %v918 = vlaneseq
        %v919 = vshrl.u32 %v918, 7
        %v920 = vsub.s32 6, %v919
        %v921 = vrot.slane %v202, %v920
        %923 = vbcast.lane.b32.xlu0 %v921, 256
        %v924 = vpop.permute.xlu0 %923
        %s926 = sor.u32 256, 8
        %927 = vbcast.lane.b32.xlu0 %v921, %s926
        %v928 = vpop.permute.xlu0 %927
        %v929 = vlaneseq
        %v930 = vshrl.u32 %v929, 7
        %v931 = vsub.s32 7, %v930
        %v932 = vrot.slane %v202, %v931
        %934 = vbcast.lane.b32.xlu0 %v932, 256
        %v935 = vpop.permute.xlu0 %934
        %s937 = sor.u32 256, 8
        %938 = vbcast.lane.b32.xlu0 %v932, %s937
        %v939 = vpop.permute.xlu0 %938
        %v940 = vsel %vm555, %v594, %v770
        %v941 = vsel %vm555, %v598, %v774
        %v942 = vsel %vm555, %v605, %v781
        %v943 = vsel %vm555, %v609, %v785
        %v944 = vsel %vm555, %v616, %v792
        %v945 = vsel %vm555, %v620, %v796
        %v946 = vsel %vm555, %v627, %v803
        %v947 = vsel %vm555, %v631, %v807
        %v948 = vsel %vm555, %v638, %v814
        %v949 = vsel %vm555, %v642, %v818
        %v950 = vsel %vm555, %v649, %v825
        %v951 = vsel %vm555, %v653, %v829
        %v952 = vsel %vm555, %v660, %v836
        %v953 = vsel %vm555, %v664, %v840
        %v954 = vsel %vm555, %v671, %v847
        %v955 = vsel %vm555, %v675, %v851
        %v956 = vsel %vm555, %v682, %v858
        %v957 = vsel %vm555, %v686, %v862
        %v958 = vsel %vm555, %v693, %v869
        %v959 = vsel %vm555, %v697, %v873
        %v960 = vsel %vm555, %v704, %v880
        %v961 = vsel %vm555, %v708, %v884
        %v962 = vsel %vm555, %v715, %v891
        %v963 = vsel %vm555, %v719, %v895
        %v964 = vsel %vm555, %v726, %v902
        %v965 = vsel %vm555, %v730, %v906
        %v966 = vsel %vm555, %v737, %v913
        %v967 = vsel %vm555, %v741, %v917
        %v968 = vsel %vm555, %v748, %v924
        %v969 = vsel %vm555, %v752, %v928
        %v970 = vsel %vm555, %v759, %v935
        %v971 = vsel %vm555, %v763, %v939
        %v972 = vcombine.high %v556, 0.0
        %v974 = vunpack.c.l.s4 1983009808
        %v975 = vunpack.c.0.s8 %v974
        %v976 = vlaneseq
        %v977 = vshrl.u32 %v976, 7
        %v978 = vsub.s32 %v975, %v977
        %v979 = vrot.slane %v556, %v978
        %v981 = vunpack.c.l.s4 1983009808
        %v982 = vunpack.c.0.s8 %v981
        %v983 = vlaneseq
        %v984 = vshrl.u32 %v983, 7
        %v985 = vsub.s32 %v982, %v984
        %v986 = vrot.slane %v972, %v985
        %v987 = vcombine.high %v979, 0.0
        %v989 = vunpack.c.l.s4 1934713408
        %v990 = vunpack.c.0.s8 %v989
        %v991 = vlaneseq
        %v992 = vshrl.u32 %v991, 7
        %v993 = vsub.s32 %v990, %v992
        %v994 = vrot.slane %v979, %v993
        %v996 = vunpack.c.l.s4 1934713408
        %v997 = vunpack.c.0.s8 %v996
        %v998 = vlaneseq
        %v999 = vshrl.u32 %v998, 7
        %v1000 = vsub.s32 %v997, %v999
        %v1001 = vrot.slane %v987, %v1000
        %v1002 = vcombine.high %v986, 0.0
        %v1004 = vunpack.c.l.s4 1934713408
        %v1005 = vunpack.c.0.s8 %v1004
        %v1006 = vlaneseq
        %v1007 = vshrl.u32 %v1006, 7
        %v1008 = vsub.s32 %v1005, %v1007
        %v1009 = vrot.slane %v986, %v1008
        %v1011 = vunpack.c.l.s4 1934713408
        %v1012 = vunpack.c.0.s8 %v1011
        %v1013 = vlaneseq
        %v1014 = vshrl.u32 %v1013, 7
        %v1015 = vsub.s32 %v1012, %v1014
        %v1016 = vrot.slane %v1002, %v1015
        %v1017 = vcombine.high %v994, 0.0
        %v1018 = vcombine.high %v1001, 0.0
        %v1019 = vcombine.high %v1009, 0.0
        %v1020 = vcombine.high %v1016, 0.0
        %v1021 = vcombine.high %v557, 0.0
        %v1023 = vunpack.c.l.s4 1983009808
        %v1024 = vunpack.c.0.s8 %v1023
        %v1025 = vlaneseq
        %v1026 = vshrl.u32 %v1025, 7
        %v1027 = vsub.s32 %v1024, %v1026
        %v1028 = vrot.slane %v557, %v1027
        %v1030 = vunpack.c.l.s4 1983009808
        %v1031 = vunpack.c.0.s8 %v1030
        %v1032 = vlaneseq
        %v1033 = vshrl.u32 %v1032, 7
        %v1034 = vsub.s32 %v1031, %v1033
        %v1035 = vrot.slane %v1021, %v1034
        %v1036 = vcombine.high %v1028, 0.0
        %v1038 = vunpack.c.l.s4 1934713408
        %v1039 = vunpack.c.0.s8 %v1038
        %v1040 = vlaneseq
        %v1041 = vshrl.u32 %v1040, 7
        %v1042 = vsub.s32 %v1039, %v1041
        %v1043 = vrot.slane %v1028, %v1042
        %v1045 = vunpack.c.l.s4 1934713408
        %v1046 = vunpack.c.0.s8 %v1045
        %v1047 = vlaneseq
        %v1048 = vshrl.u32 %v1047, 7
        %v1049 = vsub.s32 %v1046, %v1048
        %v1050 = vrot.slane %v1036, %v1049
        %v1051 = vcombine.high %v1035, 0.0
        %v1053 = vunpack.c.l.s4 1934713408
        %v1054 = vunpack.c.0.s8 %v1053
        %v1055 = vlaneseq
        %v1056 = vshrl.u32 %v1055, 7
        %v1057 = vsub.s32 %v1054, %v1056
        %v1058 = vrot.slane %v1035, %v1057
        %v1060 = vunpack.c.l.s4 1934713408
        %v1061 = vunpack.c.0.s8 %v1060
        %v1062 = vlaneseq
        %v1063 = vshrl.u32 %v1062, 7
        %v1064 = vsub.s32 %v1061, %v1063
        %v1065 = vrot.slane %v1051, %v1064
        %v1066 = vcombine.high %v1043, 0.0
        %v1067 = vcombine.high %v1050, 0.0
        %v1068 = vcombine.high %v1058, 0.0
        %v1069 = vcombine.high %v1065, 0.0
        %v1070 = vcombine.high %v558, 0.0
        %v1072 = vunpack.c.l.s4 1983009808
        %v1073 = vunpack.c.0.s8 %v1072
        %v1074 = vlaneseq
        %v1075 = vshrl.u32 %v1074, 7
        %v1076 = vsub.s32 %v1073, %v1075
        %v1077 = vrot.slane %v558, %v1076
        %v1079 = vunpack.c.l.s4 1983009808
        %v1080 = vunpack.c.0.s8 %v1079
        %v1081 = vlaneseq
        %v1082 = vshrl.u32 %v1081, 7
        %v1083 = vsub.s32 %v1080, %v1082
        %v1084 = vrot.slane %v1070, %v1083
        %v1085 = vcombine.high %v1077, 0.0
        %v1087 = vunpack.c.l.s4 1934713408
        %v1088 = vunpack.c.0.s8 %v1087
        %v1089 = vlaneseq
        %v1090 = vshrl.u32 %v1089, 7
        %v1091 = vsub.s32 %v1088, %v1090
        %v1092 = vrot.slane %v1077, %v1091
        %v1094 = vunpack.c.l.s4 1934713408
        %v1095 = vunpack.c.0.s8 %v1094
        %v1096 = vlaneseq
        %v1097 = vshrl.u32 %v1096, 7
        %v1098 = vsub.s32 %v1095, %v1097
        %v1099 = vrot.slane %v1085, %v1098
        %v1100 = vcombine.high %v1084, 0.0
        %v1102 = vunpack.c.l.s4 1934713408
        %v1103 = vunpack.c.0.s8 %v1102
        %v1104 = vlaneseq
        %v1105 = vshrl.u32 %v1104, 7
        %v1106 = vsub.s32 %v1103, %v1105
        %v1107 = vrot.slane %v1084, %v1106
        %v1109 = vunpack.c.l.s4 1934713408
        %v1110 = vunpack.c.0.s8 %v1109
        %v1111 = vlaneseq
        %v1112 = vshrl.u32 %v1111, 7
        %v1113 = vsub.s32 %v1110, %v1112
        %v1114 = vrot.slane %v1100, %v1113
        %v1115 = vcombine.high %v1092, 0.0
        %v1116 = vcombine.high %v1099, 0.0
        %v1117 = vcombine.high %v1107, 0.0
        %v1118 = vcombine.high %v1114, 0.0
        %v1119 = vcombine.high %v559, 0.0
        %v1121 = vunpack.c.l.s4 1983009808
        %v1122 = vunpack.c.0.s8 %v1121
        %v1123 = vlaneseq
        %v1124 = vshrl.u32 %v1123, 7
        %v1125 = vsub.s32 %v1122, %v1124
        %v1126 = vrot.slane %v559, %v1125
        %v1128 = vunpack.c.l.s4 1983009808
        %v1129 = vunpack.c.0.s8 %v1128
        %v1130 = vlaneseq
        %v1131 = vshrl.u32 %v1130, 7
        %v1132 = vsub.s32 %v1129, %v1131
        %v1133 = vrot.slane %v1119, %v1132
        %v1134 = vcombine.high %v1126, 0.0
        %v1136 = vunpack.c.l.s4 1934713408
        %v1137 = vunpack.c.0.s8 %v1136
        %v1138 = vlaneseq
        %v1139 = vshrl.u32 %v1138, 7
        %v1140 = vsub.s32 %v1137, %v1139
        %v1141 = vrot.slane %v1126, %v1140
        %v1143 = vunpack.c.l.s4 1934713408
        %v1144 = vunpack.c.0.s8 %v1143
        %v1145 = vlaneseq
        %v1146 = vshrl.u32 %v1145, 7
        %v1147 = vsub.s32 %v1144, %v1146
        %v1148 = vrot.slane %v1134, %v1147
        %v1149 = vcombine.high %v1133, 0.0
        %v1151 = vunpack.c.l.s4 1934713408
        %v1152 = vunpack.c.0.s8 %v1151
        %v1153 = vlaneseq
        %v1154 = vshrl.u32 %v1153, 7
        %v1155 = vsub.s32 %v1152, %v1154
        %v1156 = vrot.slane %v1133, %v1155
        %v1158 = vunpack.c.l.s4 1934713408
        %v1159 = vunpack.c.0.s8 %v1158
        %v1160 = vlaneseq
        %v1161 = vshrl.u32 %v1160, 7
        %v1162 = vsub.s32 %v1159, %v1161
        %v1163 = vrot.slane %v1149, %v1162
        %v1164 = vcombine.high %v1141, 0.0
        %v1165 = vcombine.high %v1148, 0.0
        %v1166 = vcombine.high %v1156, 0.0
        %v1167 = vcombine.high %v1163, 0.0
        %v1168 = vcombine.high %v560, 0.0
        %v1170 = vunpack.c.l.s4 1983009808
        %v1171 = vunpack.c.0.s8 %v1170
        %v1172 = vlaneseq
        %v1173 = vshrl.u32 %v1172, 7
        %v1174 = vsub.s32 %v1171, %v1173
        %v1175 = vrot.slane %v560, %v1174
        %v1177 = vunpack.c.l.s4 1983009808
        %v1178 = vunpack.c.0.s8 %v1177
        %v1179 = vlaneseq
        %v1180 = vshrl.u32 %v1179, 7
        %v1181 = vsub.s32 %v1178, %v1180
        %v1182 = vrot.slane %v1168, %v1181
        %v1183 = vcombine.high %v1175, 0.0
        %v1185 = vunpack.c.l.s4 1934713408
        %v1186 = vunpack.c.0.s8 %v1185
        %v1187 = vlaneseq
        %v1188 = vshrl.u32 %v1187, 7
        %v1189 = vsub.s32 %v1186, %v1188
        %v1190 = vrot.slane %v1175, %v1189
        %v1192 = vunpack.c.l.s4 1934713408
        %v1193 = vunpack.c.0.s8 %v1192
        %v1194 = vlaneseq
        %v1195 = vshrl.u32 %v1194, 7
        %v1196 = vsub.s32 %v1193, %v1195
        %v1197 = vrot.slane %v1183, %v1196
        %v1198 = vcombine.high %v1182, 0.0
        %v1200 = vunpack.c.l.s4 1934713408
        %v1201 = vunpack.c.0.s8 %v1200
        %v1202 = vlaneseq
        %v1203 = vshrl.u32 %v1202, 7
        %v1204 = vsub.s32 %v1201, %v1203
        %v1205 = vrot.slane %v1182, %v1204
        %v1207 = vunpack.c.l.s4 1934713408
        %v1208 = vunpack.c.0.s8 %v1207
        %v1209 = vlaneseq
        %v1210 = vshrl.u32 %v1209, 7
        %v1211 = vsub.s32 %v1208, %v1210
        %v1212 = vrot.slane %v1198, %v1211
        %v1213 = vcombine.high %v1190, 0.0
        %v1214 = vcombine.high %v1197, 0.0
        %v1215 = vcombine.high %v1205, 0.0
        %v1216 = vcombine.high %v1212, 0.0
        %v1217 = vcombine.high %v561, 0.0
        %v1219 = vunpack.c.l.s4 1983009808
        %v1220 = vunpack.c.0.s8 %v1219
        %v1221 = vlaneseq
        %v1222 = vshrl.u32 %v1221, 7
        %v1223 = vsub.s32 %v1220, %v1222
        %v1224 = vrot.slane %v561, %v1223
        %v1226 = vunpack.c.l.s4 1983009808
        %v1227 = vunpack.c.0.s8 %v1226
        %v1228 = vlaneseq
        %v1229 = vshrl.u32 %v1228, 7
        %v1230 = vsub.s32 %v1227, %v1229
        %v1231 = vrot.slane %v1217, %v1230
        %v1232 = vcombine.high %v1224, 0.0
        %v1234 = vunpack.c.l.s4 1934713408
        %v1235 = vunpack.c.0.s8 %v1234
        %v1236 = vlaneseq
        %v1237 = vshrl.u32 %v1236, 7
        %v1238 = vsub.s32 %v1235, %v1237
        %v1239 = vrot.slane %v1224, %v1238
        %v1241 = vunpack.c.l.s4 1934713408
        %v1242 = vunpack.c.0.s8 %v1241
        %v1243 = vlaneseq
        %v1244 = vshrl.u32 %v1243, 7
        %v1245 = vsub.s32 %v1242, %v1244
        %v1246 = vrot.slane %v1232, %v1245
        %v1247 = vcombine.high %v1231, 0.0
        %v1249 = vunpack.c.l.s4 1934713408
        %v1250 = vunpack.c.0.s8 %v1249
        %v1251 = vlaneseq
        %v1252 = vshrl.u32 %v1251, 7
        %v1253 = vsub.s32 %v1250, %v1252
        %v1254 = vrot.slane %v1231, %v1253
        %v1256 = vunpack.c.l.s4 1934713408
        %v1257 = vunpack.c.0.s8 %v1256
        %v1258 = vlaneseq
        %v1259 = vshrl.u32 %v1258, 7
        %v1260 = vsub.s32 %v1257, %v1259
        %v1261 = vrot.slane %v1247, %v1260
        %v1262 = vcombine.high %v1239, 0.0
        %v1263 = vcombine.high %v1246, 0.0
        %v1264 = vcombine.high %v1254, 0.0
        %v1265 = vcombine.high %v1261, 0.0
        %v1266 = vcombine.high %v562, 0.0
        %v1268 = vunpack.c.l.s4 1983009808
        %v1269 = vunpack.c.0.s8 %v1268
        %v1270 = vlaneseq
        %v1271 = vshrl.u32 %v1270, 7
        %v1272 = vsub.s32 %v1269, %v1271
        %v1273 = vrot.slane %v562, %v1272
        %v1275 = vunpack.c.l.s4 1983009808
        %v1276 = vunpack.c.0.s8 %v1275
        %v1277 = vlaneseq
        %v1278 = vshrl.u32 %v1277, 7
        %v1279 = vsub.s32 %v1276, %v1278
        %v1280 = vrot.slane %v1266, %v1279
        %v1281 = vcombine.high %v1273, 0.0
        %v1283 = vunpack.c.l.s4 1934713408
        %v1284 = vunpack.c.0.s8 %v1283
        %v1285 = vlaneseq
        %v1286 = vshrl.u32 %v1285, 7
        %v1287 = vsub.s32 %v1284, %v1286
        %v1288 = vrot.slane %v1273, %v1287
        %v1290 = vunpack.c.l.s4 1934713408
        %v1291 = vunpack.c.0.s8 %v1290
        %v1292 = vlaneseq
        %v1293 = vshrl.u32 %v1292, 7
        %v1294 = vsub.s32 %v1291, %v1293
        %v1295 = vrot.slane %v1281, %v1294
        %v1296 = vcombine.high %v1280, 0.0
        %v1298 = vunpack.c.l.s4 1934713408
        %v1299 = vunpack.c.0.s8 %v1298
        %v1300 = vlaneseq
        %v1301 = vshrl.u32 %v1300, 7
        %v1302 = vsub.s32 %v1299, %v1301
        %v1303 = vrot.slane %v1280, %v1302
        %v1305 = vunpack.c.l.s4 1934713408
        %v1306 = vunpack.c.0.s8 %v1305
        %v1307 = vlaneseq
        %v1308 = vshrl.u32 %v1307, 7
        %v1309 = vsub.s32 %v1306, %v1308
        %v1310 = vrot.slane %v1296, %v1309
        %v1311 = vcombine.high %v1288, 0.0
        %v1312 = vcombine.high %v1295, 0.0
        %v1313 = vcombine.high %v1303, 0.0
        %v1314 = vcombine.high %v1310, 0.0
        %v1315 = vcombine.high %v563, 0.0
        %v1317 = vunpack.c.l.s4 1983009808
        %v1318 = vunpack.c.0.s8 %v1317
        %v1319 = vlaneseq
        %v1320 = vshrl.u32 %v1319, 7
        %v1321 = vsub.s32 %v1318, %v1320
        %v1322 = vrot.slane %v563, %v1321
        %v1324 = vunpack.c.l.s4 1983009808
        %v1325 = vunpack.c.0.s8 %v1324
        %v1326 = vlaneseq
        %v1327 = vshrl.u32 %v1326, 7
        %v1328 = vsub.s32 %v1325, %v1327
        %v1329 = vrot.slane %v1315, %v1328
        %v1330 = vcombine.high %v1322, 0.0
        %v1332 = vunpack.c.l.s4 1934713408
        %v1333 = vunpack.c.0.s8 %v1332
        %v1334 = vlaneseq
        %v1335 = vshrl.u32 %v1334, 7
        %v1336 = vsub.s32 %v1333, %v1335
        %v1337 = vrot.slane %v1322, %v1336
        %v1339 = vunpack.c.l.s4 1934713408
        %v1340 = vunpack.c.0.s8 %v1339
        %v1341 = vlaneseq
        %v1342 = vshrl.u32 %v1341, 7
        %v1343 = vsub.s32 %v1340, %v1342
        %v1344 = vrot.slane %v1330, %v1343
        %v1345 = vcombine.high %v1329, 0.0
        %v1347 = vunpack.c.l.s4 1934713408
        %v1348 = vunpack.c.0.s8 %v1347
        %v1349 = vlaneseq
        %v1350 = vshrl.u32 %v1349, 7
        %v1351 = vsub.s32 %v1348, %v1350
        %v1352 = vrot.slane %v1329, %v1351
        %v1354 = vunpack.c.l.s4 1934713408
        %v1355 = vunpack.c.0.s8 %v1354
        %v1356 = vlaneseq
        %v1357 = vshrl.u32 %v1356, 7
        %v1358 = vsub.s32 %v1355, %v1357
        %v1359 = vrot.slane %v1345, %v1358
        %v1360 = vcombine.high %v1337, 0.0
        %v1361 = vcombine.high %v1344, 0.0
        %v1362 = vcombine.high %v1352, 0.0
        %v1363 = vcombine.high %v1359, 0.0
        %v1364 = vcombine.high %v564, 0.0
        %v1366 = vunpack.c.l.s4 1983009808
        %v1367 = vunpack.c.0.s8 %v1366
        %v1368 = vlaneseq
        %v1369 = vshrl.u32 %v1368, 7
        %v1370 = vsub.s32 %v1367, %v1369
        %v1371 = vrot.slane %v564, %v1370
        %v1373 = vunpack.c.l.s4 1983009808
        %v1374 = vunpack.c.0.s8 %v1373
        %v1375 = vlaneseq
        %v1376 = vshrl.u32 %v1375, 7
        %v1377 = vsub.s32 %v1374, %v1376
        %v1378 = vrot.slane %v1364, %v1377
        %v1379 = vcombine.high %v1371, 0.0
        %v1381 = vunpack.c.l.s4 1934713408
        %v1382 = vunpack.c.0.s8 %v1381
        %v1383 = vlaneseq
        %v1384 = vshrl.u32 %v1383, 7
        %v1385 = vsub.s32 %v1382, %v1384
        %v1386 = vrot.slane %v1371, %v1385
        %v1388 = vunpack.c.l.s4 1934713408
        %v1389 = vunpack.c.0.s8 %v1388
        %v1390 = vlaneseq
        %v1391 = vshrl.u32 %v1390, 7
        %v1392 = vsub.s32 %v1389, %v1391
        %v1393 = vrot.slane %v1379, %v1392
        %v1394 = vcombine.high %v1378, 0.0
        %v1396 = vunpack.c.l.s4 1934713408
        %v1397 = vunpack.c.0.s8 %v1396
        %v1398 = vlaneseq
        %v1399 = vshrl.u32 %v1398, 7
        %v1400 = vsub.s32 %v1397, %v1399
        %v1401 = vrot.slane %v1378, %v1400
        %v1403 = vunpack.c.l.s4 1934713408
        %v1404 = vunpack.c.0.s8 %v1403
        %v1405 = vlaneseq
        %v1406 = vshrl.u32 %v1405, 7
        %v1407 = vsub.s32 %v1404, %v1406
        %v1408 = vrot.slane %v1394, %v1407
        %v1409 = vcombine.high %v1386, 0.0
        %v1410 = vcombine.high %v1393, 0.0
        %v1411 = vcombine.high %v1401, 0.0
        %v1412 = vcombine.high %v1408, 0.0
        %v1413 = vcombine.high %v565, 0.0
        %v1415 = vunpack.c.l.s4 1983009808
        %v1416 = vunpack.c.0.s8 %v1415
        %v1417 = vlaneseq
        %v1418 = vshrl.u32 %v1417, 7
        %v1419 = vsub.s32 %v1416, %v1418
        %v1420 = vrot.slane %v565, %v1419
        %v1422 = vunpack.c.l.s4 1983009808
        %v1423 = vunpack.c.0.s8 %v1422
        %v1424 = vlaneseq
        %v1425 = vshrl.u32 %v1424, 7
        %v1426 = vsub.s32 %v1423, %v1425
        %v1427 = vrot.slane %v1413, %v1426
        %v1428 = vcombine.high %v1420, 0.0
        %v1430 = vunpack.c.l.s4 1934713408
        %v1431 = vunpack.c.0.s8 %v1430
        %v1432 = vlaneseq
        %v1433 = vshrl.u32 %v1432, 7
        %v1434 = vsub.s32 %v1431, %v1433
        %v1435 = vrot.slane %v1420, %v1434
        %v1437 = vunpack.c.l.s4 1934713408
        %v1438 = vunpack.c.0.s8 %v1437
        %v1439 = vlaneseq
        %v1440 = vshrl.u32 %v1439, 7
        %v1441 = vsub.s32 %v1438, %v1440
        %v1442 = vrot.slane %v1428, %v1441
        %v1443 = vcombine.high %v1427, 0.0
        %v1445 = vunpack.c.l.s4 1934713408
        %v1446 = vunpack.c.0.s8 %v1445
        %v1447 = vlaneseq
        %v1448 = vshrl.u32 %v1447, 7
        %v1449 = vsub.s32 %v1446, %v1448
        %v1450 = vrot.slane %v1427, %v1449
        %v1452 = vunpack.c.l.s4 1934713408
        %v1453 = vunpack.c.0.s8 %v1452
        %v1454 = vlaneseq
        %v1455 = vshrl.u32 %v1454, 7
        %v1456 = vsub.s32 %v1453, %v1455
        %v1457 = vrot.slane %v1443, %v1456
        %v1458 = vcombine.high %v1435, 0.0
        %v1459 = vcombine.high %v1442, 0.0
        %v1460 = vcombine.high %v1450, 0.0
        %v1461 = vcombine.high %v1457, 0.0
        %v1462 = vcombine.high %v566, 0.0
        %v1464 = vunpack.c.l.s4 1983009808
        %v1465 = vunpack.c.0.s8 %v1464
        %v1466 = vlaneseq
        %v1467 = vshrl.u32 %v1466, 7
        %v1468 = vsub.s32 %v1465, %v1467
        %v1469 = vrot.slane %v566, %v1468
        %v1471 = vunpack.c.l.s4 1983009808
        %v1472 = vunpack.c.0.s8 %v1471
        %v1473 = vlaneseq
        %v1474 = vshrl.u32 %v1473, 7
        %v1475 = vsub.s32 %v1472, %v1474
        %v1476 = vrot.slane %v1462, %v1475
        %v1477 = vcombine.high %v1469, 0.0
        %v1479 = vunpack.c.l.s4 1934713408
        %v1480 = vunpack.c.0.s8 %v1479
        %v1481 = vlaneseq
        %v1482 = vshrl.u32 %v1481, 7
        %v1483 = vsub.s32 %v1480, %v1482
        %v1484 = vrot.slane %v1469, %v1483
        %v1486 = vunpack.c.l.s4 1934713408
        %v1487 = vunpack.c.0.s8 %v1486
        %v1488 = vlaneseq
        %v1489 = vshrl.u32 %v1488, 7
        %v1490 = vsub.s32 %v1487, %v1489
        %v1491 = vrot.slane %v1477, %v1490
        %v1492 = vcombine.high %v1476, 0.0
        %v1494 = vunpack.c.l.s4 1934713408
        %v1495 = vunpack.c.0.s8 %v1494
        %v1496 = vlaneseq
        %v1497 = vshrl.u32 %v1496, 7
        %v1498 = vsub.s32 %v1495, %v1497
        %v1499 = vrot.slane %v1476, %v1498
        %v1501 = vunpack.c.l.s4 1934713408
        %v1502 = vunpack.c.0.s8 %v1501
        %v1503 = vlaneseq
        %v1504 = vshrl.u32 %v1503, 7
        %v1505 = vsub.s32 %v1502, %v1504
        %v1506 = vrot.slane %v1492, %v1505
        %v1507 = vcombine.high %v1484, 0.0
        %v1508 = vcombine.high %v1491, 0.0
        %v1509 = vcombine.high %v1499, 0.0
        %v1510 = vcombine.high %v1506, 0.0
        %v1511 = vcombine.high %v567, 0.0
        %v1513 = vunpack.c.l.s4 1983009808
        %v1514 = vunpack.c.0.s8 %v1513
        %v1515 = vlaneseq
        %v1516 = vshrl.u32 %v1515, 7
        %v1517 = vsub.s32 %v1514, %v1516
        %v1518 = vrot.slane %v567, %v1517
        %v1520 = vunpack.c.l.s4 1983009808
        %v1521 = vunpack.c.0.s8 %v1520
        %v1522 = vlaneseq
        %v1523 = vshrl.u32 %v1522, 7
        %v1524 = vsub.s32 %v1521, %v1523
        %v1525 = vrot.slane %v1511, %v1524
        %v1526 = vcombine.high %v1518, 0.0
        %v1528 = vunpack.c.l.s4 1934713408
        %v1529 = vunpack.c.0.s8 %v1528
        %v1530 = vlaneseq
        %v1531 = vshrl.u32 %v1530, 7
        %v1532 = vsub.s32 %v1529, %v1531
        %v1533 = vrot.slane %v1518, %v1532
        %v1535 = vunpack.c.l.s4 1934713408
        %v1536 = vunpack.c.0.s8 %v1535
        %v1537 = vlaneseq
        %v1538 = vshrl.u32 %v1537, 7
        %v1539 = vsub.s32 %v1536, %v1538
        %v1540 = vrot.slane %v1526, %v1539
        %v1541 = vcombine.high %v1525, 0.0
        %v1543 = vunpack.c.l.s4 1934713408
        %v1544 = vunpack.c.0.s8 %v1543
        %v1545 = vlaneseq
        %v1546 = vshrl.u32 %v1545, 7
        %v1547 = vsub.s32 %v1544, %v1546
        %v1548 = vrot.slane %v1525, %v1547
        %v1550 = vunpack.c.l.s4 1934713408
        %v1551 = vunpack.c.0.s8 %v1550
        %v1552 = vlaneseq
        %v1553 = vshrl.u32 %v1552, 7
        %v1554 = vsub.s32 %v1551, %v1553
        %v1555 = vrot.slane %v1541, %v1554
        %v1556 = vcombine.high %v1533, 0.0
        %v1557 = vcombine.high %v1540, 0.0
        %v1558 = vcombine.high %v1548, 0.0
        %v1559 = vcombine.high %v1555, 0.0
        %v1560 = vcombine.high %v568, 0.0
        %v1562 = vunpack.c.l.s4 1983009808
        %v1563 = vunpack.c.0.s8 %v1562
        %v1564 = vlaneseq
        %v1565 = vshrl.u32 %v1564, 7
        %v1566 = vsub.s32 %v1563, %v1565
        %v1567 = vrot.slane %v568, %v1566
        %v1569 = vunpack.c.l.s4 1983009808
        %v1570 = vunpack.c.0.s8 %v1569
        %v1571 = vlaneseq
        %v1572 = vshrl.u32 %v1571, 7
        %v1573 = vsub.s32 %v1570, %v1572
        %v1574 = vrot.slane %v1560, %v1573
        %v1575 = vcombine.high %v1567, 0.0
        %v1577 = vunpack.c.l.s4 1934713408
        %v1578 = vunpack.c.0.s8 %v1577
        %v1579 = vlaneseq
        %v1580 = vshrl.u32 %v1579, 7
        %v1581 = vsub.s32 %v1578, %v1580
        %v1582 = vrot.slane %v1567, %v1581
        %v1584 = vunpack.c.l.s4 1934713408
        %v1585 = vunpack.c.0.s8 %v1584
        %v1586 = vlaneseq
        %v1587 = vshrl.u32 %v1586, 7
        %v1588 = vsub.s32 %v1585, %v1587
        %v1589 = vrot.slane %v1575, %v1588
        %v1590 = vcombine.high %v1574, 0.0
        %v1592 = vunpack.c.l.s4 1934713408
        %v1593 = vunpack.c.0.s8 %v1592
        %v1594 = vlaneseq
        %v1595 = vshrl.u32 %v1594, 7
        %v1596 = vsub.s32 %v1593, %v1595
        %v1597 = vrot.slane %v1574, %v1596
        %v1599 = vunpack.c.l.s4 1934713408
        %v1600 = vunpack.c.0.s8 %v1599
        %v1601 = vlaneseq
        %v1602 = vshrl.u32 %v1601, 7
        %v1603 = vsub.s32 %v1600, %v1602
        %v1604 = vrot.slane %v1590, %v1603
        %v1605 = vcombine.high %v1582, 0.0
        %v1606 = vcombine.high %v1589, 0.0
        %v1607 = vcombine.high %v1597, 0.0
        %v1608 = vcombine.high %v1604, 0.0
        %v1609 = vcombine.high %v569, 0.0
        %v1611 = vunpack.c.l.s4 1983009808
        %v1612 = vunpack.c.0.s8 %v1611
        %v1613 = vlaneseq
        %v1614 = vshrl.u32 %v1613, 7
        %v1615 = vsub.s32 %v1612, %v1614
        %v1616 = vrot.slane %v569, %v1615
        %v1618 = vunpack.c.l.s4 1983009808
        %v1619 = vunpack.c.0.s8 %v1618
        %v1620 = vlaneseq
        %v1621 = vshrl.u32 %v1620, 7
        %v1622 = vsub.s32 %v1619, %v1621
        %v1623 = vrot.slane %v1609, %v1622
        %v1624 = vcombine.high %v1616, 0.0
        %v1626 = vunpack.c.l.s4 1934713408
        %v1627 = vunpack.c.0.s8 %v1626
        %v1628 = vlaneseq
        %v1629 = vshrl.u32 %v1628, 7
        %v1630 = vsub.s32 %v1627, %v1629
        %v1631 = vrot.slane %v1616, %v1630
        %v1633 = vunpack.c.l.s4 1934713408
        %v1634 = vunpack.c.0.s8 %v1633
        %v1635 = vlaneseq
        %v1636 = vshrl.u32 %v1635, 7
        %v1637 = vsub.s32 %v1634, %v1636
        %v1638 = vrot.slane %v1624, %v1637
        %v1639 = vcombine.high %v1623, 0.0
        %v1641 = vunpack.c.l.s4 1934713408
        %v1642 = vunpack.c.0.s8 %v1641
        %v1643 = vlaneseq
        %v1644 = vshrl.u32 %v1643, 7
        %v1645 = vsub.s32 %v1642, %v1644
        %v1646 = vrot.slane %v1623, %v1645
        %v1648 = vunpack.c.l.s4 1934713408
        %v1649 = vunpack.c.0.s8 %v1648
        %v1650 = vlaneseq
        %v1651 = vshrl.u32 %v1650, 7
        %v1652 = vsub.s32 %v1649, %v1651
        %v1653 = vrot.slane %v1639, %v1652
        %v1654 = vcombine.high %v1631, 0.0
        %v1655 = vcombine.high %v1638, 0.0
        %v1656 = vcombine.high %v1646, 0.0
        %v1657 = vcombine.high %v1653, 0.0
        %v1658 = vcombine.high %v570, 0.0
        %v1660 = vunpack.c.l.s4 1983009808
        %v1661 = vunpack.c.0.s8 %v1660
        %v1662 = vlaneseq
        %v1663 = vshrl.u32 %v1662, 7
        %v1664 = vsub.s32 %v1661, %v1663
        %v1665 = vrot.slane %v570, %v1664
        %v1667 = vunpack.c.l.s4 1983009808
        %v1668 = vunpack.c.0.s8 %v1667
        %v1669 = vlaneseq
        %v1670 = vshrl.u32 %v1669, 7
        %v1671 = vsub.s32 %v1668, %v1670
        %v1672 = vrot.slane %v1658, %v1671
        %v1673 = vcombine.high %v1665, 0.0
        %v1675 = vunpack.c.l.s4 1934713408
        %v1676 = vunpack.c.0.s8 %v1675
        %v1677 = vlaneseq
        %v1678 = vshrl.u32 %v1677, 7
        %v1679 = vsub.s32 %v1676, %v1678
        %v1680 = vrot.slane %v1665, %v1679
        %v1682 = vunpack.c.l.s4 1934713408
        %v1683 = vunpack.c.0.s8 %v1682
        %v1684 = vlaneseq
        %v1685 = vshrl.u32 %v1684, 7
        %v1686 = vsub.s32 %v1683, %v1685
        %v1687 = vrot.slane %v1673, %v1686
        %v1688 = vcombine.high %v1672, 0.0
        %v1690 = vunpack.c.l.s4 1934713408
        %v1691 = vunpack.c.0.s8 %v1690
        %v1692 = vlaneseq
        %v1693 = vshrl.u32 %v1692, 7
        %v1694 = vsub.s32 %v1691, %v1693
        %v1695 = vrot.slane %v1672, %v1694
        %v1697 = vunpack.c.l.s4 1934713408
        %v1698 = vunpack.c.0.s8 %v1697
        %v1699 = vlaneseq
        %v1700 = vshrl.u32 %v1699, 7
        %v1701 = vsub.s32 %v1698, %v1700
        %v1702 = vrot.slane %v1688, %v1701
        %v1703 = vcombine.high %v1680, 0.0
        %v1704 = vcombine.high %v1687, 0.0
        %v1705 = vcombine.high %v1695, 0.0
        %v1706 = vcombine.high %v1702, 0.0
        %v1707 = vcombine.high %v571, 0.0
        %v1709 = vunpack.c.l.s4 1983009808
        %v1710 = vunpack.c.0.s8 %v1709
        %v1711 = vlaneseq
        %v1712 = vshrl.u32 %v1711, 7
        %v1713 = vsub.s32 %v1710, %v1712
        %v1714 = vrot.slane %v571, %v1713
        %v1716 = vunpack.c.l.s4 1983009808
        %v1717 = vunpack.c.0.s8 %v1716
        %v1718 = vlaneseq
        %v1719 = vshrl.u32 %v1718, 7
        %v1720 = vsub.s32 %v1717, %v1719
        %v1721 = vrot.slane %v1707, %v1720
        %v1722 = vcombine.high %v1714, 0.0
        %v1724 = vunpack.c.l.s4 1934713408
        %v1725 = vunpack.c.0.s8 %v1724
        %v1726 = vlaneseq
        %v1727 = vshrl.u32 %v1726, 7
        %v1728 = vsub.s32 %v1725, %v1727
        %v1729 = vrot.slane %v1714, %v1728
        %v1731 = vunpack.c.l.s4 1934713408
        %v1732 = vunpack.c.0.s8 %v1731
        %v1733 = vlaneseq
        %v1734 = vshrl.u32 %v1733, 7
        %v1735 = vsub.s32 %v1732, %v1734
        %v1736 = vrot.slane %v1722, %v1735
        %v1737 = vcombine.high %v1721, 0.0
        %v1739 = vunpack.c.l.s4 1934713408
        %v1740 = vunpack.c.0.s8 %v1739
        %v1741 = vlaneseq
        %v1742 = vshrl.u32 %v1741, 7
        %v1743 = vsub.s32 %v1740, %v1742
        %v1744 = vrot.slane %v1721, %v1743
        %v1746 = vunpack.c.l.s4 1934713408
        %v1747 = vunpack.c.0.s8 %v1746
        %v1748 = vlaneseq
        %v1749 = vshrl.u32 %v1748, 7
        %v1750 = vsub.s32 %v1747, %v1749
        %v1751 = vrot.slane %v1737, %v1750
        %v1752 = vcombine.high %v1729, 0.0
        %v1753 = vcombine.high %v1736, 0.0
        %v1754 = vcombine.high %v1744, 0.0
        %v1755 = vcombine.high %v1751, 0.0
        %v1756 = vcombine.high %v572, 0.0
        %v1758 = vunpack.c.l.s4 1983009808
        %v1759 = vunpack.c.0.s8 %v1758
        %v1760 = vlaneseq
        %v1761 = vshrl.u32 %v1760, 7
        %v1762 = vsub.s32 %v1759, %v1761
        %v1763 = vrot.slane %v572, %v1762
        %v1765 = vunpack.c.l.s4 1983009808
        %v1766 = vunpack.c.0.s8 %v1765
        %v1767 = vlaneseq
        %v1768 = vshrl.u32 %v1767, 7
        %v1769 = vsub.s32 %v1766, %v1768
        %v1770 = vrot.slane %v1756, %v1769
        %v1771 = vcombine.high %v1763, 0.0
        %v1773 = vunpack.c.l.s4 1934713408
        %v1774 = vunpack.c.0.s8 %v1773
        %v1775 = vlaneseq
        %v1776 = vshrl.u32 %v1775, 7
        %v1777 = vsub.s32 %v1774, %v1776
        %v1778 = vrot.slane %v1763, %v1777
        %v1780 = vunpack.c.l.s4 1934713408
        %v1781 = vunpack.c.0.s8 %v1780
        %v1782 = vlaneseq
        %v1783 = vshrl.u32 %v1782, 7
        %v1784 = vsub.s32 %v1781, %v1783
        %v1785 = vrot.slane %v1771, %v1784
        %v1786 = vcombine.high %v1770, 0.0
        %v1788 = vunpack.c.l.s4 1934713408
        %v1789 = vunpack.c.0.s8 %v1788
        %v1790 = vlaneseq
        %v1791 = vshrl.u32 %v1790, 7
        %v1792 = vsub.s32 %v1789, %v1791
        %v1793 = vrot.slane %v1770, %v1792
        %v1795 = vunpack.c.l.s4 1934713408
        %v1796 = vunpack.c.0.s8 %v1795
        %v1797 = vlaneseq
        %v1798 = vshrl.u32 %v1797, 7
        %v1799 = vsub.s32 %v1796, %v1798
        %v1800 = vrot.slane %v1786, %v1799
        %v1801 = vcombine.high %v1778, 0.0
        %v1802 = vcombine.high %v1785, 0.0
        %v1803 = vcombine.high %v1793, 0.0
        %v1804 = vcombine.high %v1800, 0.0
        %v1805 = vcombine.high %v573, 0.0
        %v1807 = vunpack.c.l.s4 1983009808
        %v1808 = vunpack.c.0.s8 %v1807
        %v1809 = vlaneseq
        %v1810 = vshrl.u32 %v1809, 7
        %v1811 = vsub.s32 %v1808, %v1810
        %v1812 = vrot.slane %v573, %v1811
        %v1814 = vunpack.c.l.s4 1983009808
        %v1815 = vunpack.c.0.s8 %v1814
        %v1816 = vlaneseq
        %v1817 = vshrl.u32 %v1816, 7
        %v1818 = vsub.s32 %v1815, %v1817
        %v1819 = vrot.slane %v1805, %v1818
        %v1820 = vcombine.high %v1812, 0.0
        %v1822 = vunpack.c.l.s4 1934713408
        %v1823 = vunpack.c.0.s8 %v1822
        %v1824 = vlaneseq
        %v1825 = vshrl.u32 %v1824, 7
        %v1826 = vsub.s32 %v1823, %v1825
        %v1827 = vrot.slane %v1812, %v1826
        %v1829 = vunpack.c.l.s4 1934713408
        %v1830 = vunpack.c.0.s8 %v1829
        %v1831 = vlaneseq
        %v1832 = vshrl.u32 %v1831, 7
        %v1833 = vsub.s32 %v1830, %v1832
        %v1834 = vrot.slane %v1820, %v1833
        %v1835 = vcombine.high %v1819, 0.0
        %v1837 = vunpack.c.l.s4 1934713408
        %v1838 = vunpack.c.0.s8 %v1837
        %v1839 = vlaneseq
        %v1840 = vshrl.u32 %v1839, 7
        %v1841 = vsub.s32 %v1838, %v1840
        %v1842 = vrot.slane %v1819, %v1841
        %v1844 = vunpack.c.l.s4 1934713408
        %v1845 = vunpack.c.0.s8 %v1844
        %v1846 = vlaneseq
        %v1847 = vshrl.u32 %v1846, 7
        %v1848 = vsub.s32 %v1845, %v1847
        %v1849 = vrot.slane %v1835, %v1848
        %v1850 = vcombine.high %v1827, 0.0
        %v1851 = vcombine.high %v1834, 0.0
        %v1852 = vcombine.high %v1842, 0.0
        %v1853 = vcombine.high %v1849, 0.0
        %v1854 = vcombine.high %v574, 0.0
        %v1856 = vunpack.c.l.s4 1983009808
        %v1857 = vunpack.c.0.s8 %v1856
        %v1858 = vlaneseq
        %v1859 = vshrl.u32 %v1858, 7
        %v1860 = vsub.s32 %v1857, %v1859
        %v1861 = vrot.slane %v574, %v1860
        %v1863 = vunpack.c.l.s4 1983009808
        %v1864 = vunpack.c.0.s8 %v1863
        %v1865 = vlaneseq
        %v1866 = vshrl.u32 %v1865, 7
        %v1867 = vsub.s32 %v1864, %v1866
        %v1868 = vrot.slane %v1854, %v1867
        %v1869 = vcombine.high %v1861, 0.0
        %v1871 = vunpack.c.l.s4 1934713408
        %v1872 = vunpack.c.0.s8 %v1871
        %v1873 = vlaneseq
        %v1874 = vshrl.u32 %v1873, 7
        %v1875 = vsub.s32 %v1872, %v1874
        %v1876 = vrot.slane %v1861, %v1875
        %v1878 = vunpack.c.l.s4 1934713408
        %v1879 = vunpack.c.0.s8 %v1878
        %v1880 = vlaneseq
        %v1881 = vshrl.u32 %v1880, 7
        %v1882 = vsub.s32 %v1879, %v1881
        %v1883 = vrot.slane %v1869, %v1882
        %v1884 = vcombine.high %v1868, 0.0
        %v1886 = vunpack.c.l.s4 1934713408
        %v1887 = vunpack.c.0.s8 %v1886
        %v1888 = vlaneseq
        %v1889 = vshrl.u32 %v1888, 7
        %v1890 = vsub.s32 %v1887, %v1889
        %v1891 = vrot.slane %v1868, %v1890
        %v1893 = vunpack.c.l.s4 1934713408
        %v1894 = vunpack.c.0.s8 %v1893
        %v1895 = vlaneseq
        %v1896 = vshrl.u32 %v1895, 7
        %v1897 = vsub.s32 %v1894, %v1896
        %v1898 = vrot.slane %v1884, %v1897
        %v1899 = vcombine.high %v1876, 0.0
        %v1900 = vcombine.high %v1883, 0.0
        %v1901 = vcombine.high %v1891, 0.0
        %v1902 = vcombine.high %v1898, 0.0
        %v1903 = vcombine.high %v575, 0.0
        %v1905 = vunpack.c.l.s4 1983009808
        %v1906 = vunpack.c.0.s8 %v1905
        %v1907 = vlaneseq
        %v1908 = vshrl.u32 %v1907, 7
        %v1909 = vsub.s32 %v1906, %v1908
        %v1910 = vrot.slane %v575, %v1909
        %v1912 = vunpack.c.l.s4 1983009808
        %v1913 = vunpack.c.0.s8 %v1912
        %v1914 = vlaneseq
        %v1915 = vshrl.u32 %v1914, 7
        %v1916 = vsub.s32 %v1913, %v1915
        %v1917 = vrot.slane %v1903, %v1916
        %v1918 = vcombine.high %v1910, 0.0
        %v1920 = vunpack.c.l.s4 1934713408
        %v1921 = vunpack.c.0.s8 %v1920
        %v1922 = vlaneseq
        %v1923 = vshrl.u32 %v1922, 7
        %v1924 = vsub.s32 %v1921, %v1923
        %v1925 = vrot.slane %v1910, %v1924
        %v1927 = vunpack.c.l.s4 1934713408
        %v1928 = vunpack.c.0.s8 %v1927
        %v1929 = vlaneseq
        %v1930 = vshrl.u32 %v1929, 7
        %v1931 = vsub.s32 %v1928, %v1930
        %v1932 = vrot.slane %v1918, %v1931
        %v1933 = vcombine.high %v1917, 0.0
        %v1935 = vunpack.c.l.s4 1934713408
        %v1936 = vunpack.c.0.s8 %v1935
        %v1937 = vlaneseq
        %v1938 = vshrl.u32 %v1937, 7
        %v1939 = vsub.s32 %v1936, %v1938
        %v1940 = vrot.slane %v1917, %v1939
        %v1942 = vunpack.c.l.s4 1934713408
        %v1943 = vunpack.c.0.s8 %v1942
        %v1944 = vlaneseq
        %v1945 = vshrl.u32 %v1944, 7
        %v1946 = vsub.s32 %v1943, %v1945
        %v1947 = vrot.slane %v1933, %v1946
        %v1948 = vcombine.high %v1925, 0.0
        %v1949 = vcombine.high %v1932, 0.0
        %v1950 = vcombine.high %v1940, 0.0
        %v1951 = vcombine.high %v1947, 0.0
        %v1952 = vcombine.high %v576, 0.0
        %v1954 = vunpack.c.l.s4 1983009808
        %v1955 = vunpack.c.0.s8 %v1954
        %v1956 = vlaneseq
        %v1957 = vshrl.u32 %v1956, 7
        %v1958 = vsub.s32 %v1955, %v1957
        %v1959 = vrot.slane %v576, %v1958
        %v1961 = vunpack.c.l.s4 1983009808
        %v1962 = vunpack.c.0.s8 %v1961
        %v1963 = vlaneseq
        %v1964 = vshrl.u32 %v1963, 7
        %v1965 = vsub.s32 %v1962, %v1964
        %v1966 = vrot.slane %v1952, %v1965
        %v1967 = vcombine.high %v1959, 0.0
        %v1969 = vunpack.c.l.s4 1934713408
        %v1970 = vunpack.c.0.s8 %v1969
        %v1971 = vlaneseq
        %v1972 = vshrl.u32 %v1971, 7
        %v1973 = vsub.s32 %v1970, %v1972
        %v1974 = vrot.slane %v1959, %v1973
        %v1976 = vunpack.c.l.s4 1934713408
        %v1977 = vunpack.c.0.s8 %v1976
        %v1978 = vlaneseq
        %v1979 = vshrl.u32 %v1978, 7
        %v1980 = vsub.s32 %v1977, %v1979
        %v1981 = vrot.slane %v1967, %v1980
        %v1982 = vcombine.high %v1966, 0.0
        %v1984 = vunpack.c.l.s4 1934713408
        %v1985 = vunpack.c.0.s8 %v1984
        %v1986 = vlaneseq
        %v1987 = vshrl.u32 %v1986, 7
        %v1988 = vsub.s32 %v1985, %v1987
        %v1989 = vrot.slane %v1966, %v1988
        %v1991 = vunpack.c.l.s4 1934713408
        %v1992 = vunpack.c.0.s8 %v1991
        %v1993 = vlaneseq
        %v1994 = vshrl.u32 %v1993, 7
        %v1995 = vsub.s32 %v1992, %v1994
        %v1996 = vrot.slane %v1982, %v1995
        %v1997 = vcombine.high %v1974, 0.0
        %v1998 = vcombine.high %v1981, 0.0
        %v1999 = vcombine.high %v1989, 0.0
        %v2000 = vcombine.high %v1996, 0.0
        %v2001 = vcombine.high %v577, 0.0
        %v2003 = vunpack.c.l.s4 1983009808
        %v2004 = vunpack.c.0.s8 %v2003
        %v2005 = vlaneseq
        %v2006 = vshrl.u32 %v2005, 7
        %v2007 = vsub.s32 %v2004, %v2006
        %v2008 = vrot.slane %v577, %v2007
        %v2010 = vunpack.c.l.s4 1983009808
        %v2011 = vunpack.c.0.s8 %v2010
        %v2012 = vlaneseq
        %v2013 = vshrl.u32 %v2012, 7
        %v2014 = vsub.s32 %v2011, %v2013
        %v2015 = vrot.slane %v2001, %v2014
        %v2016 = vcombine.high %v2008, 0.0
        %v2018 = vunpack.c.l.s4 1934713408
        %v2019 = vunpack.c.0.s8 %v2018
        %v2020 = vlaneseq
        %v2021 = vshrl.u32 %v2020, 7
        %v2022 = vsub.s32 %v2019, %v2021
        %v2023 = vrot.slane %v2008, %v2022
        %v2025 = vunpack.c.l.s4 1934713408
        %v2026 = vunpack.c.0.s8 %v2025
        %v2027 = vlaneseq
        %v2028 = vshrl.u32 %v2027, 7
        %v2029 = vsub.s32 %v2026, %v2028
        %v2030 = vrot.slane %v2016, %v2029
        %v2031 = vcombine.high %v2015, 0.0
        %v2033 = vunpack.c.l.s4 1934713408
        %v2034 = vunpack.c.0.s8 %v2033
        %v2035 = vlaneseq
        %v2036 = vshrl.u32 %v2035, 7
        %v2037 = vsub.s32 %v2034, %v2036
        %v2038 = vrot.slane %v2015, %v2037
        %v2040 = vunpack.c.l.s4 1934713408
        %v2041 = vunpack.c.0.s8 %v2040
        %v2042 = vlaneseq
        %v2043 = vshrl.u32 %v2042, 7
        %v2044 = vsub.s32 %v2041, %v2043
        %v2045 = vrot.slane %v2031, %v2044
        %v2046 = vcombine.high %v2023, 0.0
        %v2047 = vcombine.high %v2030, 0.0
        %v2048 = vcombine.high %v2038, 0.0
        %v2049 = vcombine.high %v2045, 0.0
        %v2050 = vcombine.high %v578, 0.0
        %v2052 = vunpack.c.l.s4 1983009808
        %v2053 = vunpack.c.0.s8 %v2052
        %v2054 = vlaneseq
        %v2055 = vshrl.u32 %v2054, 7
        %v2056 = vsub.s32 %v2053, %v2055
        %v2057 = vrot.slane %v578, %v2056
        %v2059 = vunpack.c.l.s4 1983009808
        %v2060 = vunpack.c.0.s8 %v2059
        %v2061 = vlaneseq
        %v2062 = vshrl.u32 %v2061, 7
        %v2063 = vsub.s32 %v2060, %v2062
        %v2064 = vrot.slane %v2050, %v2063
        %v2065 = vcombine.high %v2057, 0.0
        %v2067 = vunpack.c.l.s4 1934713408
        %v2068 = vunpack.c.0.s8 %v2067
        %v2069 = vlaneseq
        %v2070 = vshrl.u32 %v2069, 7
        %v2071 = vsub.s32 %v2068, %v2070
        %v2072 = vrot.slane %v2057, %v2071
        %v2074 = vunpack.c.l.s4 1934713408
        %v2075 = vunpack.c.0.s8 %v2074
        %v2076 = vlaneseq
        %v2077 = vshrl.u32 %v2076, 7
        %v2078 = vsub.s32 %v2075, %v2077
        %v2079 = vrot.slane %v2065, %v2078
        %v2080 = vcombine.high %v2064, 0.0
        %v2082 = vunpack.c.l.s4 1934713408
        %v2083 = vunpack.c.0.s8 %v2082
        %v2084 = vlaneseq
        %v2085 = vshrl.u32 %v2084, 7
        %v2086 = vsub.s32 %v2083, %v2085
        %v2087 = vrot.slane %v2064, %v2086
        %v2089 = vunpack.c.l.s4 1934713408
        %v2090 = vunpack.c.0.s8 %v2089
        %v2091 = vlaneseq
        %v2092 = vshrl.u32 %v2091, 7
        %v2093 = vsub.s32 %v2090, %v2092
        %v2094 = vrot.slane %v2080, %v2093
        %v2095 = vcombine.high %v2072, 0.0
        %v2096 = vcombine.high %v2079, 0.0
        %v2097 = vcombine.high %v2087, 0.0
        %v2098 = vcombine.high %v2094, 0.0
        %v2099 = vcombine.high %v579, 0.0
        %v2101 = vunpack.c.l.s4 1983009808
        %v2102 = vunpack.c.0.s8 %v2101
        %v2103 = vlaneseq
        %v2104 = vshrl.u32 %v2103, 7
        %v2105 = vsub.s32 %v2102, %v2104
        %v2106 = vrot.slane %v579, %v2105
        %v2108 = vunpack.c.l.s4 1983009808
        %v2109 = vunpack.c.0.s8 %v2108
        %v2110 = vlaneseq
        %v2111 = vshrl.u32 %v2110, 7
        %v2112 = vsub.s32 %v2109, %v2111
        %v2113 = vrot.slane %v2099, %v2112
        %v2114 = vcombine.high %v2106, 0.0
        %v2116 = vunpack.c.l.s4 1934713408
        %v2117 = vunpack.c.0.s8 %v2116
        %v2118 = vlaneseq
        %v2119 = vshrl.u32 %v2118, 7
        %v2120 = vsub.s32 %v2117, %v2119
        %v2121 = vrot.slane %v2106, %v2120
        %v2123 = vunpack.c.l.s4 1934713408
        %v2124 = vunpack.c.0.s8 %v2123
        %v2125 = vlaneseq
        %v2126 = vshrl.u32 %v2125, 7
        %v2127 = vsub.s32 %v2124, %v2126
        %v2128 = vrot.slane %v2114, %v2127
        %v2129 = vcombine.high %v2113, 0.0
        %v2131 = vunpack.c.l.s4 1934713408
        %v2132 = vunpack.c.0.s8 %v2131
        %v2133 = vlaneseq
        %v2134 = vshrl.u32 %v2133, 7
        %v2135 = vsub.s32 %v2132, %v2134
        %v2136 = vrot.slane %v2113, %v2135
        %v2138 = vunpack.c.l.s4 1934713408
        %v2139 = vunpack.c.0.s8 %v2138
        %v2140 = vlaneseq
        %v2141 = vshrl.u32 %v2140, 7
        %v2142 = vsub.s32 %v2139, %v2141
        %v2143 = vrot.slane %v2129, %v2142
        %v2144 = vcombine.high %v2121, 0.0
        %v2145 = vcombine.high %v2128, 0.0
        %v2146 = vcombine.high %v2136, 0.0
        %v2147 = vcombine.high %v2143, 0.0
        %v2148 = vcombine.high %v580, 0.0
        %v2150 = vunpack.c.l.s4 1983009808
        %v2151 = vunpack.c.0.s8 %v2150
        %v2152 = vlaneseq
        %v2153 = vshrl.u32 %v2152, 7
        %v2154 = vsub.s32 %v2151, %v2153
        %v2155 = vrot.slane %v580, %v2154
        %v2157 = vunpack.c.l.s4 1983009808
        %v2158 = vunpack.c.0.s8 %v2157
        %v2159 = vlaneseq
        %v2160 = vshrl.u32 %v2159, 7
        %v2161 = vsub.s32 %v2158, %v2160
        %v2162 = vrot.slane %v2148, %v2161
        %v2163 = vcombine.high %v2155, 0.0
        %v2165 = vunpack.c.l.s4 1934713408
        %v2166 = vunpack.c.0.s8 %v2165
        %v2167 = vlaneseq
        %v2168 = vshrl.u32 %v2167, 7
        %v2169 = vsub.s32 %v2166, %v2168
        %v2170 = vrot.slane %v2155, %v2169
        %v2172 = vunpack.c.l.s4 1934713408
        %v2173 = vunpack.c.0.s8 %v2172
        %v2174 = vlaneseq
        %v2175 = vshrl.u32 %v2174, 7
        %v2176 = vsub.s32 %v2173, %v2175
        %v2177 = vrot.slane %v2163, %v2176
        %v2178 = vcombine.high %v2162, 0.0
        %v2180 = vunpack.c.l.s4 1934713408
        %v2181 = vunpack.c.0.s8 %v2180
        %v2182 = vlaneseq
        %v2183 = vshrl.u32 %v2182, 7
        %v2184 = vsub.s32 %v2181, %v2183
        %v2185 = vrot.slane %v2162, %v2184
        %v2187 = vunpack.c.l.s4 1934713408
        %v2188 = vunpack.c.0.s8 %v2187
        %v2189 = vlaneseq
        %v2190 = vshrl.u32 %v2189, 7
        %v2191 = vsub.s32 %v2188, %v2190
        %v2192 = vrot.slane %v2178, %v2191
        %v2193 = vcombine.high %v2170, 0.0
        %v2194 = vcombine.high %v2177, 0.0
        %v2195 = vcombine.high %v2185, 0.0
        %v2196 = vcombine.high %v2192, 0.0
        %v2197 = vcombine.high %v581, 0.0
        %v2199 = vunpack.c.l.s4 1983009808
        %v2200 = vunpack.c.0.s8 %v2199
        %v2201 = vlaneseq
        %v2202 = vshrl.u32 %v2201, 7
        %v2203 = vsub.s32 %v2200, %v2202
        %v2204 = vrot.slane %v581, %v2203
        %v2206 = vunpack.c.l.s4 1983009808
        %v2207 = vunpack.c.0.s8 %v2206
        %v2208 = vlaneseq
        %v2209 = vshrl.u32 %v2208, 7
        %v2210 = vsub.s32 %v2207, %v2209
        %v2211 = vrot.slane %v2197, %v2210
        %v2212 = vcombine.high %v2204, 0.0
        %v2214 = vunpack.c.l.s4 1934713408
        %v2215 = vunpack.c.0.s8 %v2214
        %v2216 = vlaneseq
        %v2217 = vshrl.u32 %v2216, 7
        %v2218 = vsub.s32 %v2215, %v2217
        %v2219 = vrot.slane %v2204, %v2218
        %v2221 = vunpack.c.l.s4 1934713408
        %v2222 = vunpack.c.0.s8 %v2221
        %v2223 = vlaneseq
        %v2224 = vshrl.u32 %v2223, 7
        %v2225 = vsub.s32 %v2222, %v2224
        %v2226 = vrot.slane %v2212, %v2225
        %v2227 = vcombine.high %v2211, 0.0
        %v2229 = vunpack.c.l.s4 1934713408
        %v2230 = vunpack.c.0.s8 %v2229
        %v2231 = vlaneseq
        %v2232 = vshrl.u32 %v2231, 7
        %v2233 = vsub.s32 %v2230, %v2232
        %v2234 = vrot.slane %v2211, %v2233
        %v2236 = vunpack.c.l.s4 1934713408
        %v2237 = vunpack.c.0.s8 %v2236
        %v2238 = vlaneseq
        %v2239 = vshrl.u32 %v2238, 7
        %v2240 = vsub.s32 %v2237, %v2239
        %v2241 = vrot.slane %v2227, %v2240
        %v2242 = vcombine.high %v2219, 0.0
        %v2243 = vcombine.high %v2226, 0.0
        %v2244 = vcombine.high %v2234, 0.0
        %v2245 = vcombine.high %v2241, 0.0
        %v2246 = vcombine.high %v582, 0.0
        %v2248 = vunpack.c.l.s4 1983009808
        %v2249 = vunpack.c.0.s8 %v2248
        %v2250 = vlaneseq
        %v2251 = vshrl.u32 %v2250, 7
        %v2252 = vsub.s32 %v2249, %v2251
        %v2253 = vrot.slane %v582, %v2252
        %v2255 = vunpack.c.l.s4 1983009808
        %v2256 = vunpack.c.0.s8 %v2255
        %v2257 = vlaneseq
        %v2258 = vshrl.u32 %v2257, 7
        %v2259 = vsub.s32 %v2256, %v2258
        %v2260 = vrot.slane %v2246, %v2259
        %v2261 = vcombine.high %v2253, 0.0
        %v2263 = vunpack.c.l.s4 1934713408
        %v2264 = vunpack.c.0.s8 %v2263
        %v2265 = vlaneseq
        %v2266 = vshrl.u32 %v2265, 7
        %v2267 = vsub.s32 %v2264, %v2266
        %v2268 = vrot.slane %v2253, %v2267
        %v2270 = vunpack.c.l.s4 1934713408
        %v2271 = vunpack.c.0.s8 %v2270
        %v2272 = vlaneseq
        %v2273 = vshrl.u32 %v2272, 7
        %v2274 = vsub.s32 %v2271, %v2273
        %v2275 = vrot.slane %v2261, %v2274
        %v2276 = vcombine.high %v2260, 0.0
        %v2278 = vunpack.c.l.s4 1934713408
        %v2279 = vunpack.c.0.s8 %v2278
        %v2280 = vlaneseq
        %v2281 = vshrl.u32 %v2280, 7
        %v2282 = vsub.s32 %v2279, %v2281
        %v2283 = vrot.slane %v2260, %v2282
        %v2285 = vunpack.c.l.s4 1934713408
        %v2286 = vunpack.c.0.s8 %v2285
        %v2287 = vlaneseq
        %v2288 = vshrl.u32 %v2287, 7
        %v2289 = vsub.s32 %v2286, %v2288
        %v2290 = vrot.slane %v2276, %v2289
        %v2291 = vcombine.high %v2268, 0.0
        %v2292 = vcombine.high %v2275, 0.0
        %v2293 = vcombine.high %v2283, 0.0
        %v2294 = vcombine.high %v2290, 0.0
        %v2295 = vcombine.high %v583, 0.0
        %v2297 = vunpack.c.l.s4 1983009808
        %v2298 = vunpack.c.0.s8 %v2297
        %v2299 = vlaneseq
        %v2300 = vshrl.u32 %v2299, 7
        %v2301 = vsub.s32 %v2298, %v2300
        %v2302 = vrot.slane %v583, %v2301
        %v2304 = vunpack.c.l.s4 1983009808
        %v2305 = vunpack.c.0.s8 %v2304
        %v2306 = vlaneseq
        %v2307 = vshrl.u32 %v2306, 7
        %v2308 = vsub.s32 %v2305, %v2307
        %v2309 = vrot.slane %v2295, %v2308
        %v2310 = vcombine.high %v2302, 0.0
        %v2312 = vunpack.c.l.s4 1934713408
        %v2313 = vunpack.c.0.s8 %v2312
        %v2314 = vlaneseq
        %v2315 = vshrl.u32 %v2314, 7
        %v2316 = vsub.s32 %v2313, %v2315
        %v2317 = vrot.slane %v2302, %v2316
        %v2319 = vunpack.c.l.s4 1934713408
        %v2320 = vunpack.c.0.s8 %v2319
        %v2321 = vlaneseq
        %v2322 = vshrl.u32 %v2321, 7
        %v2323 = vsub.s32 %v2320, %v2322
        %v2324 = vrot.slane %v2310, %v2323
        %v2325 = vcombine.high %v2309, 0.0
        %v2327 = vunpack.c.l.s4 1934713408
        %v2328 = vunpack.c.0.s8 %v2327
        %v2329 = vlaneseq
        %v2330 = vshrl.u32 %v2329, 7
        %v2331 = vsub.s32 %v2328, %v2330
        %v2332 = vrot.slane %v2309, %v2331
        %v2334 = vunpack.c.l.s4 1934713408
        %v2335 = vunpack.c.0.s8 %v2334
        %v2336 = vlaneseq
        %v2337 = vshrl.u32 %v2336, 7
        %v2338 = vsub.s32 %v2335, %v2337
        %v2339 = vrot.slane %v2325, %v2338
        %v2340 = vcombine.high %v2317, 0.0
        %v2341 = vcombine.high %v2324, 0.0
        %v2342 = vcombine.high %v2332, 0.0
        %v2343 = vcombine.high %v2339, 0.0
        %v2344 = vcombine.high %v584, 0.0
        %v2346 = vunpack.c.l.s4 1983009808
        %v2347 = vunpack.c.0.s8 %v2346
        %v2348 = vlaneseq
        %v2349 = vshrl.u32 %v2348, 7
        %v2350 = vsub.s32 %v2347, %v2349
        %v2351 = vrot.slane %v584, %v2350
        %v2353 = vunpack.c.l.s4 1983009808
        %v2354 = vunpack.c.0.s8 %v2353
        %v2355 = vlaneseq
        %v2356 = vshrl.u32 %v2355, 7
        %v2357 = vsub.s32 %v2354, %v2356
        %v2358 = vrot.slane %v2344, %v2357
        %v2359 = vcombine.high %v2351, 0.0
        %v2361 = vunpack.c.l.s4 1934713408
        %v2362 = vunpack.c.0.s8 %v2361
        %v2363 = vlaneseq
        %v2364 = vshrl.u32 %v2363, 7
        %v2365 = vsub.s32 %v2362, %v2364
        %v2366 = vrot.slane %v2351, %v2365
        %v2368 = vunpack.c.l.s4 1934713408
        %v2369 = vunpack.c.0.s8 %v2368
        %v2370 = vlaneseq
        %v2371 = vshrl.u32 %v2370, 7
        %v2372 = vsub.s32 %v2369, %v2371
        %v2373 = vrot.slane %v2359, %v2372
        %v2374 = vcombine.high %v2358, 0.0
        %v2376 = vunpack.c.l.s4 1934713408
        %v2377 = vunpack.c.0.s8 %v2376
        %v2378 = vlaneseq
        %v2379 = vshrl.u32 %v2378, 7
        %v2380 = vsub.s32 %v2377, %v2379
        %v2381 = vrot.slane %v2358, %v2380
        %v2383 = vunpack.c.l.s4 1934713408
        %v2384 = vunpack.c.0.s8 %v2383
        %v2385 = vlaneseq
        %v2386 = vshrl.u32 %v2385, 7
        %v2387 = vsub.s32 %v2384, %v2386
        %v2388 = vrot.slane %v2374, %v2387
        %v2389 = vcombine.high %v2366, 0.0
        %v2390 = vcombine.high %v2373, 0.0
        %v2391 = vcombine.high %v2381, 0.0
        %v2392 = vcombine.high %v2388, 0.0
        %v2393 = vcombine.high %v585, 0.0
        %v2395 = vunpack.c.l.s4 1983009808
        %v2396 = vunpack.c.0.s8 %v2395
        %v2397 = vlaneseq
        %v2398 = vshrl.u32 %v2397, 7
        %v2399 = vsub.s32 %v2396, %v2398
        %v2400 = vrot.slane %v585, %v2399
        %v2402 = vunpack.c.l.s4 1983009808
        %v2403 = vunpack.c.0.s8 %v2402
        %v2404 = vlaneseq
        %v2405 = vshrl.u32 %v2404, 7
        %v2406 = vsub.s32 %v2403, %v2405
        %v2407 = vrot.slane %v2393, %v2406
        %v2408 = vcombine.high %v2400, 0.0
        %v2410 = vunpack.c.l.s4 1934713408
        %v2411 = vunpack.c.0.s8 %v2410
        %v2412 = vlaneseq
        %v2413 = vshrl.u32 %v2412, 7
        %v2414 = vsub.s32 %v2411, %v2413
        %v2415 = vrot.slane %v2400, %v2414
        %v2417 = vunpack.c.l.s4 1934713408
        %v2418 = vunpack.c.0.s8 %v2417
        %v2419 = vlaneseq
        %v2420 = vshrl.u32 %v2419, 7
        %v2421 = vsub.s32 %v2418, %v2420
        %v2422 = vrot.slane %v2408, %v2421
        %v2423 = vcombine.high %v2407, 0.0
        %v2425 = vunpack.c.l.s4 1934713408
        %v2426 = vunpack.c.0.s8 %v2425
        %v2427 = vlaneseq
        %v2428 = vshrl.u32 %v2427, 7
        %v2429 = vsub.s32 %v2426, %v2428
        %v2430 = vrot.slane %v2407, %v2429
        %v2432 = vunpack.c.l.s4 1934713408
        %v2433 = vunpack.c.0.s8 %v2432
        %v2434 = vlaneseq
        %v2435 = vshrl.u32 %v2434, 7
        %v2436 = vsub.s32 %v2433, %v2435
        %v2437 = vrot.slane %v2423, %v2436
        %v2438 = vcombine.high %v2415, 0.0
        %v2439 = vcombine.high %v2422, 0.0
        %v2440 = vcombine.high %v2430, 0.0
        %v2441 = vcombine.high %v2437, 0.0
        %v2442 = vcombine.high %v586, 0.0
        %v2444 = vunpack.c.l.s4 1983009808
        %v2445 = vunpack.c.0.s8 %v2444
        %v2446 = vlaneseq
        %v2447 = vshrl.u32 %v2446, 7
        %v2448 = vsub.s32 %v2445, %v2447
        %v2449 = vrot.slane %v586, %v2448
        %v2451 = vunpack.c.l.s4 1983009808
        %v2452 = vunpack.c.0.s8 %v2451
        %v2453 = vlaneseq
        %v2454 = vshrl.u32 %v2453, 7
        %v2455 = vsub.s32 %v2452, %v2454
        %v2456 = vrot.slane %v2442, %v2455
        %v2457 = vcombine.high %v2449, 0.0
        %v2459 = vunpack.c.l.s4 1934713408
        %v2460 = vunpack.c.0.s8 %v2459
        %v2461 = vlaneseq
        %v2462 = vshrl.u32 %v2461, 7
        %v2463 = vsub.s32 %v2460, %v2462
        %v2464 = vrot.slane %v2449, %v2463
        %v2466 = vunpack.c.l.s4 1934713408
        %v2467 = vunpack.c.0.s8 %v2466
        %v2468 = vlaneseq
        %v2469 = vshrl.u32 %v2468, 7
        %v2470 = vsub.s32 %v2467, %v2469
        %v2471 = vrot.slane %v2457, %v2470
        %v2472 = vcombine.high %v2456, 0.0
        %v2474 = vunpack.c.l.s4 1934713408
        %v2475 = vunpack.c.0.s8 %v2474
        %v2476 = vlaneseq
        %v2477 = vshrl.u32 %v2476, 7
        %v2478 = vsub.s32 %v2475, %v2477
        %v2479 = vrot.slane %v2456, %v2478
        %v2481 = vunpack.c.l.s4 1934713408
        %v2482 = vunpack.c.0.s8 %v2481
        %v2483 = vlaneseq
        %v2484 = vshrl.u32 %v2483, 7
        %v2485 = vsub.s32 %v2482, %v2484
        %v2486 = vrot.slane %v2472, %v2485
        %v2487 = vcombine.high %v2464, 0.0
        %v2488 = vcombine.high %v2471, 0.0
        %v2489 = vcombine.high %v2479, 0.0
        %v2490 = vcombine.high %v2486, 0.0
        %v2491 = vcombine.high %v587, 0.0
        %v2493 = vunpack.c.l.s4 1983009808
        %v2494 = vunpack.c.0.s8 %v2493
        %v2495 = vlaneseq
        %v2496 = vshrl.u32 %v2495, 7
        %v2497 = vsub.s32 %v2494, %v2496
        %v2498 = vrot.slane %v587, %v2497
        %v2500 = vunpack.c.l.s4 1983009808
        %v2501 = vunpack.c.0.s8 %v2500
        %v2502 = vlaneseq
        %v2503 = vshrl.u32 %v2502, 7
        %v2504 = vsub.s32 %v2501, %v2503
        %v2505 = vrot.slane %v2491, %v2504
        %v2506 = vcombine.high %v2498, 0.0
        %v2508 = vunpack.c.l.s4 1934713408
        %v2509 = vunpack.c.0.s8 %v2508
        %v2510 = vlaneseq
        %v2511 = vshrl.u32 %v2510, 7
        %v2512 = vsub.s32 %v2509, %v2511
        %v2513 = vrot.slane %v2498, %v2512
        %v2515 = vunpack.c.l.s4 1934713408
        %v2516 = vunpack.c.0.s8 %v2515
        %v2517 = vlaneseq
        %v2518 = vshrl.u32 %v2517, 7
        %v2519 = vsub.s32 %v2516, %v2518
        %v2520 = vrot.slane %v2506, %v2519
        %v2521 = vcombine.high %v2505, 0.0
        %v2523 = vunpack.c.l.s4 1934713408
        %v2524 = vunpack.c.0.s8 %v2523
        %v2525 = vlaneseq
        %v2526 = vshrl.u32 %v2525, 7
        %v2527 = vsub.s32 %v2524, %v2526
        %v2528 = vrot.slane %v2505, %v2527
        %v2530 = vunpack.c.l.s4 1934713408
        %v2531 = vunpack.c.0.s8 %v2530
        %v2532 = vlaneseq
        %v2533 = vshrl.u32 %v2532, 7
        %v2534 = vsub.s32 %v2531, %v2533
        %v2535 = vrot.slane %v2521, %v2534
        %v2536 = vcombine.high %v2513, 0.0
        %v2537 = vcombine.high %v2520, 0.0
        %v2538 = vcombine.high %v2528, 0.0
        %v2539 = vcombine.high %v2535, 0.0
        %2556 = vrot.lane.b32.xlu0 %v1017, 2
        %v2557 = vpop.permute.xlu0 %2556
        %2558 = vrot.lane.b32.xlu0 %v1115, 2
        %v2559 = vpop.permute.xlu0 %2558
        %2560 = vrot.lane.b32.xlu0 %v1213, 2
        %v2561 = vpop.permute.xlu0 %2560
        %2562 = vrot.lane.b32.xlu0 %v1311, 2
        %v2563 = vpop.permute.xlu0 %2562
        %2564 = vrot.lane.b32.xlu0 %v1409, 2
        %v2565 = vpop.permute.xlu0 %2564
        %2566 = vrot.lane.b32.xlu0 %v1507, 2
        %v2567 = vpop.permute.xlu0 %2566
        %2568 = vrot.lane.b32.xlu0 %v1605, 2
        %v2569 = vpop.permute.xlu0 %2568
        %2570 = vrot.lane.b32.xlu0 %v1703, 2
        %v2571 = vpop.permute.xlu0 %2570
        %2572 = vrot.lane.b32.xlu0 %v1801, 2
        %v2573 = vpop.permute.xlu0 %2572
        %2574 = vrot.lane.b32.xlu0 %v1899, 2
        %v2575 = vpop.permute.xlu0 %2574
        %2576 = vrot.lane.b32.xlu0 %v1997, 2
        %v2577 = vpop.permute.xlu0 %2576
        %2578 = vrot.lane.b32.xlu0 %v2095, 2
        %v2579 = vpop.permute.xlu0 %2578
        %2580 = vrot.lane.b32.xlu0 %v2193, 2
        %v2581 = vpop.permute.xlu0 %2580
        %2582 = vrot.lane.b32.xlu0 %v2291, 2
        %v2583 = vpop.permute.xlu0 %2582
        %2584 = vrot.lane.b32.xlu0 %v2389, 2
        %v2585 = vpop.permute.xlu0 %2584
        %2586 = vrot.lane.b32.xlu0 %v2487, 2
        %v2587 = vpop.permute.xlu0 %2586
        %2620 = vrot.lane.b32.xlu0 %v1001, 4
        %v2621 = vpop.permute.xlu0 %2620
        %2622 = vrot.lane.b32.xlu0 %v1099, 4
        %v2623 = vpop.permute.xlu0 %2622
        %2624 = vrot.lane.b32.xlu0 %v1197, 4
        %v2625 = vpop.permute.xlu0 %2624
        %2626 = vrot.lane.b32.xlu0 %v1295, 4
        %v2627 = vpop.permute.xlu0 %2626
        %2628 = vrot.lane.b32.xlu0 %v1393, 4
        %v2629 = vpop.permute.xlu0 %2628
        %2630 = vrot.lane.b32.xlu0 %v1491, 4
        %v2631 = vpop.permute.xlu0 %2630
        %2632 = vrot.lane.b32.xlu0 %v1589, 4
        %v2633 = vpop.permute.xlu0 %2632
        %2634 = vrot.lane.b32.xlu0 %v1687, 4
        %v2635 = vpop.permute.xlu0 %2634
        %2636 = vrot.lane.b32.xlu0 %v1785, 4
        %v2637 = vpop.permute.xlu0 %2636
        %2638 = vrot.lane.b32.xlu0 %v1883, 4
        %v2639 = vpop.permute.xlu0 %2638
        %2640 = vrot.lane.b32.xlu0 %v1981, 4
        %v2641 = vpop.permute.xlu0 %2640
        %2642 = vrot.lane.b32.xlu0 %v2079, 4
        %v2643 = vpop.permute.xlu0 %2642
        %2644 = vrot.lane.b32.xlu0 %v2177, 4
        %v2645 = vpop.permute.xlu0 %2644
        %2646 = vrot.lane.b32.xlu0 %v2275, 4
        %v2647 = vpop.permute.xlu0 %2646
        %2648 = vrot.lane.b32.xlu0 %v2373, 4
        %v2649 = vpop.permute.xlu0 %2648
        %2650 = vrot.lane.b32.xlu0 %v2471, 4
        %v2651 = vpop.permute.xlu0 %2650
        %2684 = vrot.lane.b32.xlu0 %v1018, 6
        %v2685 = vpop.permute.xlu0 %2684
        %2686 = vrot.lane.b32.xlu0 %v1116, 6
        %v2687 = vpop.permute.xlu0 %2686
        %2688 = vrot.lane.b32.xlu0 %v1214, 6
        %v2689 = vpop.permute.xlu0 %2688
        %2690 = vrot.lane.b32.xlu0 %v1312, 6
        %v2691 = vpop.permute.xlu0 %2690
        %2692 = vrot.lane.b32.xlu0 %v1410, 6
        %v2693 = vpop.permute.xlu0 %2692
        %2694 = vrot.lane.b32.xlu0 %v1508, 6
        %v2695 = vpop.permute.xlu0 %2694
        %2696 = vrot.lane.b32.xlu0 %v1606, 6
        %v2697 = vpop.permute.xlu0 %2696
        %2698 = vrot.lane.b32.xlu0 %v1704, 6
        %v2699 = vpop.permute.xlu0 %2698
        %2700 = vrot.lane.b32.xlu0 %v1802, 6
        %v2701 = vpop.permute.xlu0 %2700
        %2702 = vrot.lane.b32.xlu0 %v1900, 6
        %v2703 = vpop.permute.xlu0 %2702
        %2704 = vrot.lane.b32.xlu0 %v1998, 6
        %v2705 = vpop.permute.xlu0 %2704
        %2706 = vrot.lane.b32.xlu0 %v2096, 6
        %v2707 = vpop.permute.xlu0 %2706
        %2708 = vrot.lane.b32.xlu0 %v2194, 6
        %v2709 = vpop.permute.xlu0 %2708
        %2710 = vrot.lane.b32.xlu0 %v2292, 6
        %v2711 = vpop.permute.xlu0 %2710
        %2712 = vrot.lane.b32.xlu0 %v2390, 6
        %v2713 = vpop.permute.xlu0 %2712
        %2714 = vrot.lane.b32.xlu0 %v2488, 6
        %v2715 = vpop.permute.xlu0 %2714
        %2748 = vrot.lane.b32.xlu0 %v1009, 8
        %v2749 = vpop.permute.xlu0 %2748
        %2750 = vrot.lane.b32.xlu0 %v1107, 8
        %v2751 = vpop.permute.xlu0 %2750
        %2752 = vrot.lane.b32.xlu0 %v1205, 8
        %v2753 = vpop.permute.xlu0 %2752
        %2754 = vrot.lane.b32.xlu0 %v1303, 8
        %v2755 = vpop.permute.xlu0 %2754
        %2756 = vrot.lane.b32.xlu0 %v1401, 8
        %v2757 = vpop.permute.xlu0 %2756
        %2758 = vrot.lane.b32.xlu0 %v1499, 8
        %v2759 = vpop.permute.xlu0 %2758
        %2760 = vrot.lane.b32.xlu0 %v1597, 8
        %v2761 = vpop.permute.xlu0 %2760
        %2762 = vrot.lane.b32.xlu0 %v1695, 8
        %v2763 = vpop.permute.xlu0 %2762
        %2764 = vrot.lane.b32.xlu0 %v1793, 8
        %v2765 = vpop.permute.xlu0 %2764
        %2766 = vrot.lane.b32.xlu0 %v1891, 8
        %v2767 = vpop.permute.xlu0 %2766
        %2768 = vrot.lane.b32.xlu0 %v1989, 8
        %v2769 = vpop.permute.xlu0 %2768
        %2770 = vrot.lane.b32.xlu0 %v2087, 8
        %v2771 = vpop.permute.xlu0 %2770
        %2772 = vrot.lane.b32.xlu0 %v2185, 8
        %v2773 = vpop.permute.xlu0 %2772
        %2774 = vrot.lane.b32.xlu0 %v2283, 8
        %v2775 = vpop.permute.xlu0 %2774
        %2776 = vrot.lane.b32.xlu0 %v2381, 8
        %v2777 = vpop.permute.xlu0 %2776
        %2778 = vrot.lane.b32.xlu0 %v2479, 8
        %v2779 = vpop.permute.xlu0 %2778
        %2812 = vrot.lane.b32.xlu0 %v1019, 10
        %v2813 = vpop.permute.xlu0 %2812
        %2814 = vrot.lane.b32.xlu0 %v1117, 10
        %v2815 = vpop.permute.xlu0 %2814
        %2816 = vrot.lane.b32.xlu0 %v1215, 10
        %v2817 = vpop.permute.xlu0 %2816
        %2818 = vrot.lane.b32.xlu0 %v1313, 10
        %v2819 = vpop.permute.xlu0 %2818
        %2820 = vrot.lane.b32.xlu0 %v1411, 10
        %v2821 = vpop.permute.xlu0 %2820
        %2822 = vrot.lane.b32.xlu0 %v1509, 10
        %v2823 = vpop.permute.xlu0 %2822
        %2824 = vrot.lane.b32.xlu0 %v1607, 10
        %v2825 = vpop.permute.xlu0 %2824
        %2826 = vrot.lane.b32.xlu0 %v1705, 10
        %v2827 = vpop.permute.xlu0 %2826
        %2828 = vrot.lane.b32.xlu0 %v1803, 10
        %v2829 = vpop.permute.xlu0 %2828
        %2830 = vrot.lane.b32.xlu0 %v1901, 10
        %v2831 = vpop.permute.xlu0 %2830
        %2832 = vrot.lane.b32.xlu0 %v1999, 10
        %v2833 = vpop.permute.xlu0 %2832
        %2834 = vrot.lane.b32.xlu0 %v2097, 10
        %v2835 = vpop.permute.xlu0 %2834
        %2836 = vrot.lane.b32.xlu0 %v2195, 10
        %v2837 = vpop.permute.xlu0 %2836
        %2838 = vrot.lane.b32.xlu0 %v2293, 10
        %v2839 = vpop.permute.xlu0 %2838
        %2840 = vrot.lane.b32.xlu0 %v2391, 10
        %v2841 = vpop.permute.xlu0 %2840
        %2842 = vrot.lane.b32.xlu0 %v2489, 10
        %v2843 = vpop.permute.xlu0 %2842
        %2876 = vrot.lane.b32.xlu0 %v1016, 12
        %v2877 = vpop.permute.xlu0 %2876
        %2878 = vrot.lane.b32.xlu0 %v1114, 12
        %v2879 = vpop.permute.xlu0 %2878
        %2880 = vrot.lane.b32.xlu0 %v1212, 12
        %v2881 = vpop.permute.xlu0 %2880
        %2882 = vrot.lane.b32.xlu0 %v1310, 12
        %v2883 = vpop.permute.xlu0 %2882
        %2884 = vrot.lane.b32.xlu0 %v1408, 12
        %v2885 = vpop.permute.xlu0 %2884
        %2886 = vrot.lane.b32.xlu0 %v1506, 12
        %v2887 = vpop.permute.xlu0 %2886
        %2888 = vrot.lane.b32.xlu0 %v1604, 12
        %v2889 = vpop.permute.xlu0 %2888
        %2890 = vrot.lane.b32.xlu0 %v1702, 12
        %v2891 = vpop.permute.xlu0 %2890
        %2892 = vrot.lane.b32.xlu0 %v1800, 12
        %v2893 = vpop.permute.xlu0 %2892
        %2894 = vrot.lane.b32.xlu0 %v1898, 12
        %v2895 = vpop.permute.xlu0 %2894
        %2896 = vrot.lane.b32.xlu0 %v1996, 12
        %v2897 = vpop.permute.xlu0 %2896
        %2898 = vrot.lane.b32.xlu0 %v2094, 12
        %v2899 = vpop.permute.xlu0 %2898
        %2900 = vrot.lane.b32.xlu0 %v2192, 12
        %v2901 = vpop.permute.xlu0 %2900
        %2902 = vrot.lane.b32.xlu0 %v2290, 12
        %v2903 = vpop.permute.xlu0 %2902
        %2904 = vrot.lane.b32.xlu0 %v2388, 12
        %v2905 = vpop.permute.xlu0 %2904
        %2906 = vrot.lane.b32.xlu0 %v2486, 12
        %v2907 = vpop.permute.xlu0 %2906
        %2940 = vrot.lane.b32.xlu0 %v1020, 14
        %v2941 = vpop.permute.xlu0 %2940
        %2942 = vrot.lane.b32.xlu0 %v1118, 14
        %v2943 = vpop.permute.xlu0 %2942
        %2944 = vrot.lane.b32.xlu0 %v1216, 14
        %v2945 = vpop.permute.xlu0 %2944
        %2946 = vrot.lane.b32.xlu0 %v1314, 14
        %v2947 = vpop.permute.xlu0 %2946
        %2948 = vrot.lane.b32.xlu0 %v1412, 14
        %v2949 = vpop.permute.xlu0 %2948
        %2950 = vrot.lane.b32.xlu0 %v1510, 14
        %v2951 = vpop.permute.xlu0 %2950
        %2952 = vrot.lane.b32.xlu0 %v1608, 14
        %v2953 = vpop.permute.xlu0 %2952
        %2954 = vrot.lane.b32.xlu0 %v1706, 14
        %v2955 = vpop.permute.xlu0 %2954
        %2956 = vrot.lane.b32.xlu0 %v1804, 14
        %v2957 = vpop.permute.xlu0 %2956
        %2958 = vrot.lane.b32.xlu0 %v1902, 14
        %v2959 = vpop.permute.xlu0 %2958
        %2960 = vrot.lane.b32.xlu0 %v2000, 14
        %v2961 = vpop.permute.xlu0 %2960
        %2962 = vrot.lane.b32.xlu0 %v2098, 14
        %v2963 = vpop.permute.xlu0 %2962
        %2964 = vrot.lane.b32.xlu0 %v2196, 14
        %v2965 = vpop.permute.xlu0 %2964
        %2966 = vrot.lane.b32.xlu0 %v2294, 14
        %v2967 = vpop.permute.xlu0 %2966
        %2968 = vrot.lane.b32.xlu0 %v2392, 14
        %v2969 = vpop.permute.xlu0 %2968
        %2970 = vrot.lane.b32.xlu0 %v2490, 14
        %v2971 = vpop.permute.xlu0 %2970
        %3004 = vrot.lane.b32.xlu0 %v1043, 16
        %v3005 = vpop.permute.xlu0 %3004
        %3006 = vrot.lane.b32.xlu0 %v1141, 16
        %v3007 = vpop.permute.xlu0 %3006
        %3008 = vrot.lane.b32.xlu0 %v1239, 16
        %v3009 = vpop.permute.xlu0 %3008
        %3010 = vrot.lane.b32.xlu0 %v1337, 16
        %v3011 = vpop.permute.xlu0 %3010
        %3012 = vrot.lane.b32.xlu0 %v1435, 16
        %v3013 = vpop.permute.xlu0 %3012
        %3014 = vrot.lane.b32.xlu0 %v1533, 16
        %v3015 = vpop.permute.xlu0 %3014
        %3016 = vrot.lane.b32.xlu0 %v1631, 16
        %v3017 = vpop.permute.xlu0 %3016
        %3018 = vrot.lane.b32.xlu0 %v1729, 16
        %v3019 = vpop.permute.xlu0 %3018
        %3020 = vrot.lane.b32.xlu0 %v1827, 16
        %v3021 = vpop.permute.xlu0 %3020
        %3022 = vrot.lane.b32.xlu0 %v1925, 16
        %v3023 = vpop.permute.xlu0 %3022
        %3024 = vrot.lane.b32.xlu0 %v2023, 16
        %v3025 = vpop.permute.xlu0 %3024
        %3026 = vrot.lane.b32.xlu0 %v2121, 16
        %v3027 = vpop.permute.xlu0 %3026
        %3028 = vrot.lane.b32.xlu0 %v2219, 16
        %v3029 = vpop.permute.xlu0 %3028
        %3030 = vrot.lane.b32.xlu0 %v2317, 16
        %v3031 = vpop.permute.xlu0 %3030
        %3032 = vrot.lane.b32.xlu0 %v2415, 16
        %v3033 = vpop.permute.xlu0 %3032
        %3034 = vrot.lane.b32.xlu0 %v2513, 16
        %v3035 = vpop.permute.xlu0 %3034
        %3068 = vrot.lane.b32.xlu0 %v1066, 18
        %v3069 = vpop.permute.xlu0 %3068
        %3070 = vrot.lane.b32.xlu0 %v1164, 18
        %v3071 = vpop.permute.xlu0 %3070
        %3072 = vrot.lane.b32.xlu0 %v1262, 18
        %v3073 = vpop.permute.xlu0 %3072
        %3074 = vrot.lane.b32.xlu0 %v1360, 18
        %v3075 = vpop.permute.xlu0 %3074
        %3076 = vrot.lane.b32.xlu0 %v1458, 18
        %v3077 = vpop.permute.xlu0 %3076
        %3078 = vrot.lane.b32.xlu0 %v1556, 18
        %v3079 = vpop.permute.xlu0 %3078
        %3080 = vrot.lane.b32.xlu0 %v1654, 18
        %v3081 = vpop.permute.xlu0 %3080
        %3082 = vrot.lane.b32.xlu0 %v1752, 18
        %v3083 = vpop.permute.xlu0 %3082
        %3084 = vrot.lane.b32.xlu0 %v1850, 18
        %v3085 = vpop.permute.xlu0 %3084
        %3086 = vrot.lane.b32.xlu0 %v1948, 18
        %v3087 = vpop.permute.xlu0 %3086
        %3088 = vrot.lane.b32.xlu0 %v2046, 18
        %v3089 = vpop.permute.xlu0 %3088
        %3090 = vrot.lane.b32.xlu0 %v2144, 18
        %v3091 = vpop.permute.xlu0 %3090
        %3092 = vrot.lane.b32.xlu0 %v2242, 18
        %v3093 = vpop.permute.xlu0 %3092
        %3094 = vrot.lane.b32.xlu0 %v2340, 18
        %v3095 = vpop.permute.xlu0 %3094
        %3096 = vrot.lane.b32.xlu0 %v2438, 18
        %v3097 = vpop.permute.xlu0 %3096
        %3098 = vrot.lane.b32.xlu0 %v2536, 18
        %v3099 = vpop.permute.xlu0 %3098
        %3132 = vrot.lane.b32.xlu0 %v1050, 20
        %v3133 = vpop.permute.xlu0 %3132
        %3134 = vrot.lane.b32.xlu0 %v1148, 20
        %v3135 = vpop.permute.xlu0 %3134
        %3136 = vrot.lane.b32.xlu0 %v1246, 20
        %v3137 = vpop.permute.xlu0 %3136
        %3138 = vrot.lane.b32.xlu0 %v1344, 20
        %v3139 = vpop.permute.xlu0 %3138
        %3140 = vrot.lane.b32.xlu0 %v1442, 20
        %v3141 = vpop.permute.xlu0 %3140
        %3142 = vrot.lane.b32.xlu0 %v1540, 20
        %v3143 = vpop.permute.xlu0 %3142
        %3144 = vrot.lane.b32.xlu0 %v1638, 20
        %v3145 = vpop.permute.xlu0 %3144
        %3146 = vrot.lane.b32.xlu0 %v1736, 20
        %v3147 = vpop.permute.xlu0 %3146
        %3148 = vrot.lane.b32.xlu0 %v1834, 20
        %v3149 = vpop.permute.xlu0 %3148
        %3150 = vrot.lane.b32.xlu0 %v1932, 20
        %v3151 = vpop.permute.xlu0 %3150
        %3152 = vrot.lane.b32.xlu0 %v2030, 20
        %v3153 = vpop.permute.xlu0 %3152
        %3154 = vrot.lane.b32.xlu0 %v2128, 20
        %v3155 = vpop.permute.xlu0 %3154
        %3156 = vrot.lane.b32.xlu0 %v2226, 20
        %v3157 = vpop.permute.xlu0 %3156
        %3158 = vrot.lane.b32.xlu0 %v2324, 20
        %v3159 = vpop.permute.xlu0 %3158
        %3160 = vrot.lane.b32.xlu0 %v2422, 20
        %v3161 = vpop.permute.xlu0 %3160
        %3162 = vrot.lane.b32.xlu0 %v2520, 20
        %v3163 = vpop.permute.xlu0 %3162
        %3196 = vrot.lane.b32.xlu0 %v1067, 22
        %v3197 = vpop.permute.xlu0 %3196
        %3198 = vrot.lane.b32.xlu0 %v1165, 22
        %v3199 = vpop.permute.xlu0 %3198
        %3200 = vrot.lane.b32.xlu0 %v1263, 22
        %v3201 = vpop.permute.xlu0 %3200
        %3202 = vrot.lane.b32.xlu0 %v1361, 22
        %v3203 = vpop.permute.xlu0 %3202
        %3204 = vrot.lane.b32.xlu0 %v1459, 22
        %v3205 = vpop.permute.xlu0 %3204
        %3206 = vrot.lane.b32.xlu0 %v1557, 22
        %v3207 = vpop.permute.xlu0 %3206
        %3208 = vrot.lane.b32.xlu0 %v1655, 22
        %v3209 = vpop.permute.xlu0 %3208
        %3210 = vrot.lane.b32.xlu0 %v1753, 22
        %v3211 = vpop.permute.xlu0 %3210
        %3212 = vrot.lane.b32.xlu0 %v1851, 22
        %v3213 = vpop.permute.xlu0 %3212
        %3214 = vrot.lane.b32.xlu0 %v1949, 22
        %v3215 = vpop.permute.xlu0 %3214
        %3216 = vrot.lane.b32.xlu0 %v2047, 22
        %v3217 = vpop.permute.xlu0 %3216
        %3218 = vrot.lane.b32.xlu0 %v2145, 22
        %v3219 = vpop.permute.xlu0 %3218
        %3220 = vrot.lane.b32.xlu0 %v2243, 22
        %v3221 = vpop.permute.xlu0 %3220
        %3222 = vrot.lane.b32.xlu0 %v2341, 22
        %v3223 = vpop.permute.xlu0 %3222
        %3224 = vrot.lane.b32.xlu0 %v2439, 22
        %v3225 = vpop.permute.xlu0 %3224
        %3226 = vrot.lane.b32.xlu0 %v2537, 22
        %v3227 = vpop.permute.xlu0 %3226
        %3260 = vrot.lane.b32.xlu0 %v1058, 24
        %v3261 = vpop.permute.xlu0 %3260
        %3262 = vrot.lane.b32.xlu0 %v1156, 24
        %v3263 = vpop.permute.xlu0 %3262
        %3264 = vrot.lane.b32.xlu0 %v1254, 24
        %v3265 = vpop.permute.xlu0 %3264
        %3266 = vrot.lane.b32.xlu0 %v1352, 24
        %v3267 = vpop.permute.xlu0 %3266
        %3268 = vrot.lane.b32.xlu0 %v1450, 24
        %v3269 = vpop.permute.xlu0 %3268
        %3270 = vrot.lane.b32.xlu0 %v1548, 24
        %v3271 = vpop.permute.xlu0 %3270
        %3272 = vrot.lane.b32.xlu0 %v1646, 24
        %v3273 = vpop.permute.xlu0 %3272
        %3274 = vrot.lane.b32.xlu0 %v1744, 24
        %v3275 = vpop.permute.xlu0 %3274
        %3276 = vrot.lane.b32.xlu0 %v1842, 24
        %v3277 = vpop.permute.xlu0 %3276
        %3278 = vrot.lane.b32.xlu0 %v1940, 24
        %v3279 = vpop.permute.xlu0 %3278
        %3280 = vrot.lane.b32.xlu0 %v2038, 24
        %v3281 = vpop.permute.xlu0 %3280
        %3282 = vrot.lane.b32.xlu0 %v2136, 24
        %v3283 = vpop.permute.xlu0 %3282
        %3284 = vrot.lane.b32.xlu0 %v2234, 24
        %v3285 = vpop.permute.xlu0 %3284
        %3286 = vrot.lane.b32.xlu0 %v2332, 24
        %v3287 = vpop.permute.xlu0 %3286
        %3288 = vrot.lane.b32.xlu0 %v2430, 24
        %v3289 = vpop.permute.xlu0 %3288
        %3290 = vrot.lane.b32.xlu0 %v2528, 24
        %v3291 = vpop.permute.xlu0 %3290
        %3324 = vrot.lane.b32.xlu0 %v1068, 26
        %v3325 = vpop.permute.xlu0 %3324
        %3326 = vrot.lane.b32.xlu0 %v1166, 26
        %v3327 = vpop.permute.xlu0 %3326
        %3328 = vrot.lane.b32.xlu0 %v1264, 26
        %v3329 = vpop.permute.xlu0 %3328
        %3330 = vrot.lane.b32.xlu0 %v1362, 26
        %v3331 = vpop.permute.xlu0 %3330
        %3332 = vrot.lane.b32.xlu0 %v1460, 26
        %v3333 = vpop.permute.xlu0 %3332
        %3334 = vrot.lane.b32.xlu0 %v1558, 26
        %v3335 = vpop.permute.xlu0 %3334
        %3336 = vrot.lane.b32.xlu0 %v1656, 26
        %v3337 = vpop.permute.xlu0 %3336
        %3338 = vrot.lane.b32.xlu0 %v1754, 26
        %v3339 = vpop.permute.xlu0 %3338
        %3340 = vrot.lane.b32.xlu0 %v1852, 26
        %v3341 = vpop.permute.xlu0 %3340
        %3342 = vrot.lane.b32.xlu0 %v1950, 26
        %v3343 = vpop.permute.xlu0 %3342
        %3344 = vrot.lane.b32.xlu0 %v2048, 26
        %v3345 = vpop.permute.xlu0 %3344
        %3346 = vrot.lane.b32.xlu0 %v2146, 26
        %v3347 = vpop.permute.xlu0 %3346
        %3348 = vrot.lane.b32.xlu0 %v2244, 26
        %v3349 = vpop.permute.xlu0 %3348
        %3350 = vrot.lane.b32.xlu0 %v2342, 26
        %v3351 = vpop.permute.xlu0 %3350
        %3352 = vrot.lane.b32.xlu0 %v2440, 26
        %v3353 = vpop.permute.xlu0 %3352
        %3354 = vrot.lane.b32.xlu0 %v2538, 26
        %v3355 = vpop.permute.xlu0 %3354
        %3388 = vrot.lane.b32.xlu0 %v1065, 28
        %v3389 = vpop.permute.xlu0 %3388
        %3390 = vrot.lane.b32.xlu0 %v1163, 28
        %v3391 = vpop.permute.xlu0 %3390
        %3392 = vrot.lane.b32.xlu0 %v1261, 28
        %v3393 = vpop.permute.xlu0 %3392
        %3394 = vrot.lane.b32.xlu0 %v1359, 28
        %v3395 = vpop.permute.xlu0 %3394
        %3396 = vrot.lane.b32.xlu0 %v1457, 28
        %v3397 = vpop.permute.xlu0 %3396
        %3398 = vrot.lane.b32.xlu0 %v1555, 28
        %v3399 = vpop.permute.xlu0 %3398
        %3400 = vrot.lane.b32.xlu0 %v1653, 28
        %v3401 = vpop.permute.xlu0 %3400
        %3402 = vrot.lane.b32.xlu0 %v1751, 28
        %v3403 = vpop.permute.xlu0 %3402
        %3404 = vrot.lane.b32.xlu0 %v1849, 28
        %v3405 = vpop.permute.xlu0 %3404
        %3406 = vrot.lane.b32.xlu0 %v1947, 28
        %v3407 = vpop.permute.xlu0 %3406
        %3408 = vrot.lane.b32.xlu0 %v2045, 28
        %v3409 = vpop.permute.xlu0 %3408
        %3410 = vrot.lane.b32.xlu0 %v2143, 28
        %v3411 = vpop.permute.xlu0 %3410
        %3412 = vrot.lane.b32.xlu0 %v2241, 28
        %v3413 = vpop.permute.xlu0 %3412
        %3414 = vrot.lane.b32.xlu0 %v2339, 28
        %v3415 = vpop.permute.xlu0 %3414
        %3416 = vrot.lane.b32.xlu0 %v2437, 28
        %v3417 = vpop.permute.xlu0 %3416
        %3418 = vrot.lane.b32.xlu0 %v2535, 28
        %v3419 = vpop.permute.xlu0 %3418
        %3452 = vrot.lane.b32.xlu0 %v1069, 30
        %v3453 = vpop.permute.xlu0 %3452
        %3454 = vrot.lane.b32.xlu0 %v1167, 30
        %v3455 = vpop.permute.xlu0 %3454
        %3456 = vrot.lane.b32.xlu0 %v1265, 30
        %v3457 = vpop.permute.xlu0 %3456
        %3458 = vrot.lane.b32.xlu0 %v1363, 30
        %v3459 = vpop.permute.xlu0 %3458
        %3460 = vrot.lane.b32.xlu0 %v1461, 30
        %v3461 = vpop.permute.xlu0 %3460
        %3462 = vrot.lane.b32.xlu0 %v1559, 30
        %v3463 = vpop.permute.xlu0 %3462
        %3464 = vrot.lane.b32.xlu0 %v1657, 30
        %v3465 = vpop.permute.xlu0 %3464
        %3466 = vrot.lane.b32.xlu0 %v1755, 30
        %v3467 = vpop.permute.xlu0 %3466
        %3468 = vrot.lane.b32.xlu0 %v1853, 30
        %v3469 = vpop.permute.xlu0 %3468
        %3470 = vrot.lane.b32.xlu0 %v1951, 30
        %v3471 = vpop.permute.xlu0 %3470
        %3472 = vrot.lane.b32.xlu0 %v2049, 30
        %v3473 = vpop.permute.xlu0 %3472
        %3474 = vrot.lane.b32.xlu0 %v2147, 30
        %v3475 = vpop.permute.xlu0 %3474
        %3476 = vrot.lane.b32.xlu0 %v2245, 30
        %v3477 = vpop.permute.xlu0 %3476
        %3478 = vrot.lane.b32.xlu0 %v2343, 30
        %v3479 = vpop.permute.xlu0 %3478
        %3480 = vrot.lane.b32.xlu0 %v2441, 30
        %v3481 = vpop.permute.xlu0 %3480
        %3482 = vrot.lane.b32.xlu0 %v2539, 30
        %v3483 = vpop.permute.xlu0 %3482
        %vm3500 = vcmask 15360
        %v3501 = vsel %vm3500, %v994, %v2557
        %v3502 = vsel %vm3500, %v1092, %v2559
        %v3503 = vsel %vm3500, %v1190, %v2561
        %v3504 = vsel %vm3500, %v1288, %v2563
        %v3505 = vsel %vm3500, %v1386, %v2565
        %v3506 = vsel %vm3500, %v1484, %v2567
        %v3507 = vsel %vm3500, %v1582, %v2569
        %v3508 = vsel %vm3500, %v1680, %v2571
        %v3509 = vsel %vm3500, %v1778, %v2573
        %v3510 = vsel %vm3500, %v1876, %v2575
        %v3511 = vsel %vm3500, %v1974, %v2577
        %v3512 = vsel %vm3500, %v2072, %v2579
        %v3513 = vsel %vm3500, %v2170, %v2581
        %v3514 = vsel %vm3500, %v2268, %v2583
        %v3515 = vsel %vm3500, %v2366, %v2585
        %v3516 = vsel %vm3500, %v2464, %v2587
        %vm3517 = vcmask 31744
        %v3518 = vsel %vm3517, %v3501, %v2621
        %v3519 = vsel %vm3517, %v3502, %v2623
        %v3520 = vsel %vm3517, %v3503, %v2625
        %v3521 = vsel %vm3517, %v3504, %v2627
        %v3522 = vsel %vm3517, %v3505, %v2629
        %v3523 = vsel %vm3517, %v3506, %v2631
        %v3524 = vsel %vm3517, %v3507, %v2633
        %v3525 = vsel %vm3517, %v3508, %v2635
        %v3526 = vsel %vm3517, %v3509, %v2637
        %v3527 = vsel %vm3517, %v3510, %v2639
        %v3528 = vsel %vm3517, %v3511, %v2641
        %v3529 = vsel %vm3517, %v3512, %v2643
        %v3530 = vsel %vm3517, %v3513, %v2645
        %v3531 = vsel %vm3517, %v3514, %v2647
        %v3532 = vsel %vm3517, %v3515, %v2649
        %v3533 = vsel %vm3517, %v3516, %v2651
        %vm3534 = vcmask 48128
        %v3535 = vsel %vm3534, %v3518, %v2685
        %v3536 = vsel %vm3534, %v3519, %v2687
        %v3537 = vsel %vm3534, %v3520, %v2689
        %v3538 = vsel %vm3534, %v3521, %v2691
        %v3539 = vsel %vm3534, %v3522, %v2693
        %v3540 = vsel %vm3534, %v3523, %v2695
        %v3541 = vsel %vm3534, %v3524, %v2697
        %v3542 = vsel %vm3534, %v3525, %v2699
        %v3543 = vsel %vm3534, %v3526, %v2701
        %v3544 = vsel %vm3534, %v3527, %v2703
        %v3545 = vsel %vm3534, %v3528, %v2705
        %v3546 = vsel %vm3534, %v3529, %v2707
        %v3547 = vsel %vm3534, %v3530, %v2709
        %v3548 = vsel %vm3534, %v3531, %v2711
        %v3549 = vsel %vm3534, %v3532, %v2713
        %v3550 = vsel %vm3534, %v3533, %v2715
        %vm3551 = vcmask 64512
        %v3552 = vsel %vm3551, %v3535, %v2749
        %v3553 = vsel %vm3551, %v3536, %v2751
        %v3554 = vsel %vm3551, %v3537, %v2753
        %v3555 = vsel %vm3551, %v3538, %v2755
        %v3556 = vsel %vm3551, %v3539, %v2757
        %v3557 = vsel %vm3551, %v3540, %v2759
        %v3558 = vsel %vm3551, %v3541, %v2761
        %v3559 = vsel %vm3551, %v3542, %v2763
        %v3560 = vsel %vm3551, %v3543, %v2765
        %v3561 = vsel %vm3551, %v3544, %v2767
        %v3562 = vsel %vm3551, %v3545, %v2769
        %v3563 = vsel %vm3551, %v3546, %v2771
        %v3564 = vsel %vm3551, %v3547, %v2773
        %v3565 = vsel %vm3551, %v3548, %v2775
        %v3566 = vsel %vm3551, %v3549, %v2777
        %v3567 = vsel %vm3551, %v3550, %v2779
        %vm3568 = vcmask 80896
        %v3569 = vsel %vm3568, %v3552, %v2813
        %v3570 = vsel %vm3568, %v3553, %v2815
        %v3571 = vsel %vm3568, %v3554, %v2817
        %v3572 = vsel %vm3568, %v3555, %v2819
        %v3573 = vsel %vm3568, %v3556, %v2821
        %v3574 = vsel %vm3568, %v3557, %v2823
        %v3575 = vsel %vm3568, %v3558, %v2825
        %v3576 = vsel %vm3568, %v3559, %v2827
        %v3577 = vsel %vm3568, %v3560, %v2829
        %v3578 = vsel %vm3568, %v3561, %v2831
        %v3579 = vsel %vm3568, %v3562, %v2833
        %v3580 = vsel %vm3568, %v3563, %v2835
        %v3581 = vsel %vm3568, %v3564, %v2837
        %v3582 = vsel %vm3568, %v3565, %v2839
        %v3583 = vsel %vm3568, %v3566, %v2841
        %v3584 = vsel %vm3568, %v3567, %v2843
        %vm3585 = vcmask 97280
        %v3586 = vsel %vm3585, %v3569, %v2877
        %v3587 = vsel %vm3585, %v3570, %v2879
        %v3588 = vsel %vm3585, %v3571, %v2881
        %v3589 = vsel %vm3585, %v3572, %v2883
        %v3590 = vsel %vm3585, %v3573, %v2885
        %v3591 = vsel %vm3585, %v3574, %v2887
        %v3592 = vsel %vm3585, %v3575, %v2889
        %v3593 = vsel %vm3585, %v3576, %v2891
        %v3594 = vsel %vm3585, %v3577, %v2893
        %v3595 = vsel %vm3585, %v3578, %v2895
        %v3596 = vsel %vm3585, %v3579, %v2897
        %v3597 = vsel %vm3585, %v3580, %v2899
        %v3598 = vsel %vm3585, %v3581, %v2901
        %v3599 = vsel %vm3585, %v3582, %v2903
        %v3600 = vsel %vm3585, %v3583, %v2905
        %v3601 = vsel %vm3585, %v3584, %v2907
        %vm3602 = vcmask 113664
        %v3603 = vsel %vm3602, %v3586, %v2941
        %v3604 = vsel %vm3602, %v3587, %v2943
        %v3605 = vsel %vm3602, %v3588, %v2945
        %v3606 = vsel %vm3602, %v3589, %v2947
        %v3607 = vsel %vm3602, %v3590, %v2949
        %v3608 = vsel %vm3602, %v3591, %v2951
        %v3609 = vsel %vm3602, %v3592, %v2953
        %v3610 = vsel %vm3602, %v3593, %v2955
        %v3611 = vsel %vm3602, %v3594, %v2957
        %v3612 = vsel %vm3602, %v3595, %v2959
        %v3613 = vsel %vm3602, %v3596, %v2961
        %v3614 = vsel %vm3602, %v3597, %v2963
        %v3615 = vsel %vm3602, %v3598, %v2965
        %v3616 = vsel %vm3602, %v3599, %v2967
        %v3617 = vsel %vm3602, %v3600, %v2969
        %v3618 = vsel %vm3602, %v3601, %v2971
        %vm3619 = vcmask 130048
        %v3620 = vsel %vm3619, %v3603, %v3005
        %v3621 = vsel %vm3619, %v3604, %v3007
        %v3622 = vsel %vm3619, %v3605, %v3009
        %v3623 = vsel %vm3619, %v3606, %v3011
        %v3624 = vsel %vm3619, %v3607, %v3013
        %v3625 = vsel %vm3619, %v3608, %v3015
        %v3626 = vsel %vm3619, %v3609, %v3017
        %v3627 = vsel %vm3619, %v3610, %v3019
        %v3628 = vsel %vm3619, %v3611, %v3021
        %v3629 = vsel %vm3619, %v3612, %v3023
        %v3630 = vsel %vm3619, %v3613, %v3025
        %v3631 = vsel %vm3619, %v3614, %v3027
        %v3632 = vsel %vm3619, %v3615, %v3029
        %v3633 = vsel %vm3619, %v3616, %v3031
        %v3634 = vsel %vm3619, %v3617, %v3033
        %v3635 = vsel %vm3619, %v3618, %v3035
        %vm3636 = vcmask 146432
        %v3637 = vsel %vm3636, %v3620, %v3069
        %v3638 = vsel %vm3636, %v3621, %v3071
        %v3639 = vsel %vm3636, %v3622, %v3073
        %v3640 = vsel %vm3636, %v3623, %v3075
        %v3641 = vsel %vm3636, %v3624, %v3077
        %v3642 = vsel %vm3636, %v3625, %v3079
        %v3643 = vsel %vm3636, %v3626, %v3081
        %v3644 = vsel %vm3636, %v3627, %v3083
        %v3645 = vsel %vm3636, %v3628, %v3085
        %v3646 = vsel %vm3636, %v3629, %v3087
        %v3647 = vsel %vm3636, %v3630, %v3089
        %v3648 = vsel %vm3636, %v3631, %v3091
        %v3649 = vsel %vm3636, %v3632, %v3093
        %v3650 = vsel %vm3636, %v3633, %v3095
        %v3651 = vsel %vm3636, %v3634, %v3097
        %v3652 = vsel %vm3636, %v3635, %v3099
        %vm3653 = vcmask 162816
        %v3654 = vsel %vm3653, %v3637, %v3133
        %v3655 = vsel %vm3653, %v3638, %v3135
        %v3656 = vsel %vm3653, %v3639, %v3137
        %v3657 = vsel %vm3653, %v3640, %v3139
        %v3658 = vsel %vm3653, %v3641, %v3141
        %v3659 = vsel %vm3653, %v3642, %v3143
        %v3660 = vsel %vm3653, %v3643, %v3145
        %v3661 = vsel %vm3653, %v3644, %v3147
        %v3662 = vsel %vm3653, %v3645, %v3149
        %v3663 = vsel %vm3653, %v3646, %v3151
        %v3664 = vsel %vm3653, %v3647, %v3153
        %v3665 = vsel %vm3653, %v3648, %v3155
        %v3666 = vsel %vm3653, %v3649, %v3157
        %v3667 = vsel %vm3653, %v3650, %v3159
        %v3668 = vsel %vm3653, %v3651, %v3161
        %v3669 = vsel %vm3653, %v3652, %v3163
        %vm3670 = vcmask 179200
        %v3671 = vsel %vm3670, %v3654, %v3197
        %v3672 = vsel %vm3670, %v3655, %v3199
        %v3673 = vsel %vm3670, %v3656, %v3201
        %v3674 = vsel %vm3670, %v3657, %v3203
        %v3675 = vsel %vm3670, %v3658, %v3205
        %v3676 = vsel %vm3670, %v3659, %v3207
        %v3677 = vsel %vm3670, %v3660, %v3209
        %v3678 = vsel %vm3670, %v3661, %v3211
        %v3679 = vsel %vm3670, %v3662, %v3213
        %v3680 = vsel %vm3670, %v3663, %v3215
        %v3681 = vsel %vm3670, %v3664, %v3217
        %v3682 = vsel %vm3670, %v3665, %v3219
        %v3683 = vsel %vm3670, %v3666, %v3221
        %v3684 = vsel %vm3670, %v3667, %v3223
        %v3685 = vsel %vm3670, %v3668, %v3225
        %v3686 = vsel %vm3670, %v3669, %v3227
        %vm3687 = vcmask 195584
        %v3688 = vsel %vm3687, %v3671, %v3261
        %v3689 = vsel %vm3687, %v3672, %v3263
        %v3690 = vsel %vm3687, %v3673, %v3265
        %v3691 = vsel %vm3687, %v3674, %v3267
        %v3692 = vsel %vm3687, %v3675, %v3269
        %v3693 = vsel %vm3687, %v3676, %v3271
        %v3694 = vsel %vm3687, %v3677, %v3273
        %v3695 = vsel %vm3687, %v3678, %v3275
        %v3696 = vsel %vm3687, %v3679, %v3277
        %v3697 = vsel %vm3687, %v3680, %v3279
        %v3698 = vsel %vm3687, %v3681, %v3281
        %v3699 = vsel %vm3687, %v3682, %v3283
        %v3700 = vsel %vm3687, %v3683, %v3285
        %v3701 = vsel %vm3687, %v3684, %v3287
        %v3702 = vsel %vm3687, %v3685, %v3289
        %v3703 = vsel %vm3687, %v3686, %v3291
        %vm3704 = vcmask 211968
        %v3705 = vsel %vm3704, %v3688, %v3325
        %v3706 = vsel %vm3704, %v3689, %v3327
        %v3707 = vsel %vm3704, %v3690, %v3329
        %v3708 = vsel %vm3704, %v3691, %v3331
        %v3709 = vsel %vm3704, %v3692, %v3333
        %v3710 = vsel %vm3704, %v3693, %v3335
        %v3711 = vsel %vm3704, %v3694, %v3337
        %v3712 = vsel %vm3704, %v3695, %v3339
        %v3713 = vsel %vm3704, %v3696, %v3341
        %v3714 = vsel %vm3704, %v3697, %v3343
        %v3715 = vsel %vm3704, %v3698, %v3345
        %v3716 = vsel %vm3704, %v3699, %v3347
        %v3717 = vsel %vm3704, %v3700, %v3349
        %v3718 = vsel %vm3704, %v3701, %v3351
        %v3719 = vsel %vm3704, %v3702, %v3353
        %v3720 = vsel %vm3704, %v3703, %v3355
        %vm3721 = vcmask 228352
        %v3722 = vsel %vm3721, %v3705, %v3389
        %v3723 = vsel %vm3721, %v3706, %v3391
        %v3724 = vsel %vm3721, %v3707, %v3393
        %v3725 = vsel %vm3721, %v3708, %v3395
        %v3726 = vsel %vm3721, %v3709, %v3397
        %v3727 = vsel %vm3721, %v3710, %v3399
        %v3728 = vsel %vm3721, %v3711, %v3401
        %v3729 = vsel %vm3721, %v3712, %v3403
        %v3730 = vsel %vm3721, %v3713, %v3405
        %v3731 = vsel %vm3721, %v3714, %v3407
        %v3732 = vsel %vm3721, %v3715, %v3409
        %v3733 = vsel %vm3721, %v3716, %v3411
        %v3734 = vsel %vm3721, %v3717, %v3413
        %v3735 = vsel %vm3721, %v3718, %v3415
        %v3736 = vsel %vm3721, %v3719, %v3417
        %v3737 = vsel %vm3721, %v3720, %v3419
        %vm3738 = vcmask 244736
        %v3739 = vsel %vm3738, %v3722, %v3453
        %v3740 = vsel %vm3738, %v3723, %v3455
        %v3741 = vsel %vm3738, %v3724, %v3457
        %v3742 = vsel %vm3738, %v3725, %v3459
        %v3743 = vsel %vm3738, %v3726, %v3461
        %v3744 = vsel %vm3738, %v3727, %v3463
        %v3745 = vsel %vm3738, %v3728, %v3465
        %v3746 = vsel %vm3738, %v3729, %v3467
        %v3747 = vsel %vm3738, %v3730, %v3469
        %v3748 = vsel %vm3738, %v3731, %v3471
        %v3749 = vsel %vm3738, %v3732, %v3473
        %v3750 = vsel %vm3738, %v3733, %v3475
        %v3751 = vsel %vm3738, %v3734, %v3477
        %v3752 = vsel %vm3738, %v3735, %v3479
        %v3753 = vsel %vm3738, %v3736, %v3481
        %v3754 = vsel %vm3738, %v3737, %v3483
        %v3755 = vcombine.high %v940, 0.0
        %v3757 = vunpack.c.l.s4 1983009808
        %v3758 = vunpack.c.0.s8 %v3757
        %v3759 = vlaneseq
        %v3760 = vshrl.u32 %v3759, 7
        %v3761 = vsub.s32 %v3758, %v3760
        %v3762 = vrot.slane %v940, %v3761
        %v3764 = vunpack.c.l.s4 1983009808
        %v3765 = vunpack.c.0.s8 %v3764
        %v3766 = vlaneseq
        %v3767 = vshrl.u32 %v3766, 7
        %v3768 = vsub.s32 %v3765, %v3767
        %v3769 = vrot.slane %v3755, %v3768
        %v3770 = vcombine.high %v3762, 0.0
        %v3772 = vunpack.c.l.s4 1934713408
        %v3773 = vunpack.c.0.s8 %v3772
        %v3774 = vlaneseq
        %v3775 = vshrl.u32 %v3774, 7
        %v3776 = vsub.s32 %v3773, %v3775
        %v3777 = vrot.slane %v3762, %v3776
        %v3779 = vunpack.c.l.s4 1934713408
        %v3780 = vunpack.c.0.s8 %v3779
        %v3781 = vlaneseq
        %v3782 = vshrl.u32 %v3781, 7
        %v3783 = vsub.s32 %v3780, %v3782
        %v3784 = vrot.slane %v3770, %v3783
        %v3785 = vcombine.high %v3769, 0.0
        %v3787 = vunpack.c.l.s4 1934713408
        %v3788 = vunpack.c.0.s8 %v3787
        %v3789 = vlaneseq
        %v3790 = vshrl.u32 %v3789, 7
        %v3791 = vsub.s32 %v3788, %v3790
        %v3792 = vrot.slane %v3769, %v3791
        %v3794 = vunpack.c.l.s4 1934713408
        %v3795 = vunpack.c.0.s8 %v3794
        %v3796 = vlaneseq
        %v3797 = vshrl.u32 %v3796, 7
        %v3798 = vsub.s32 %v3795, %v3797
        %v3799 = vrot.slane %v3785, %v3798
        %v3800 = vcombine.high %v3777, 0.0
        %v3801 = vcombine.high %v3784, 0.0
        %v3802 = vcombine.high %v3792, 0.0
        %v3803 = vcombine.high %v3799, 0.0
        %v3804 = vcombine.high %v941, 0.0
        %v3806 = vunpack.c.l.s4 1983009808
        %v3807 = vunpack.c.0.s8 %v3806
        %v3808 = vlaneseq
        %v3809 = vshrl.u32 %v3808, 7
        %v3810 = vsub.s32 %v3807, %v3809
        %v3811 = vrot.slane %v941, %v3810
        %v3813 = vunpack.c.l.s4 1983009808
        %v3814 = vunpack.c.0.s8 %v3813
        %v3815 = vlaneseq
        %v3816 = vshrl.u32 %v3815, 7
        %v3817 = vsub.s32 %v3814, %v3816
        %v3818 = vrot.slane %v3804, %v3817
        %v3819 = vcombine.high %v3811, 0.0
        %v3821 = vunpack.c.l.s4 1934713408
        %v3822 = vunpack.c.0.s8 %v3821
        %v3823 = vlaneseq
        %v3824 = vshrl.u32 %v3823, 7
        %v3825 = vsub.s32 %v3822, %v3824
        %v3826 = vrot.slane %v3811, %v3825
        %v3828 = vunpack.c.l.s4 1934713408
        %v3829 = vunpack.c.0.s8 %v3828
        %v3830 = vlaneseq
        %v3831 = vshrl.u32 %v3830, 7
        %v3832 = vsub.s32 %v3829, %v3831
        %v3833 = vrot.slane %v3819, %v3832
        %v3834 = vcombine.high %v3818, 0.0
        %v3836 = vunpack.c.l.s4 1934713408
        %v3837 = vunpack.c.0.s8 %v3836
        %v3838 = vlaneseq
        %v3839 = vshrl.u32 %v3838, 7
        %v3840 = vsub.s32 %v3837, %v3839
        %v3841 = vrot.slane %v3818, %v3840
        %v3843 = vunpack.c.l.s4 1934713408
        %v3844 = vunpack.c.0.s8 %v3843
        %v3845 = vlaneseq
        %v3846 = vshrl.u32 %v3845, 7
        %v3847 = vsub.s32 %v3844, %v3846
        %v3848 = vrot.slane %v3834, %v3847
        %v3849 = vcombine.high %v3826, 0.0
        %v3850 = vcombine.high %v3833, 0.0
        %v3851 = vcombine.high %v3841, 0.0
        %v3852 = vcombine.high %v3848, 0.0
        %v3853 = vcombine.high %v942, 0.0
        %v3855 = vunpack.c.l.s4 1983009808
        %v3856 = vunpack.c.0.s8 %v3855
        %v3857 = vlaneseq
        %v3858 = vshrl.u32 %v3857, 7
        %v3859 = vsub.s32 %v3856, %v3858
        %v3860 = vrot.slane %v942, %v3859
        %v3862 = vunpack.c.l.s4 1983009808
        %v3863 = vunpack.c.0.s8 %v3862
        %v3864 = vlaneseq
        %v3865 = vshrl.u32 %v3864, 7
        %v3866 = vsub.s32 %v3863, %v3865
        %v3867 = vrot.slane %v3853, %v3866
        %v3868 = vcombine.high %v3860, 0.0
        %v3870 = vunpack.c.l.s4 1934713408
        %v3871 = vunpack.c.0.s8 %v3870
        %v3872 = vlaneseq
        %v3873 = vshrl.u32 %v3872, 7
        %v3874 = vsub.s32 %v3871, %v3873
        %v3875 = vrot.slane %v3860, %v3874
        %v3877 = vunpack.c.l.s4 1934713408
        %v3878 = vunpack.c.0.s8 %v3877
        %v3879 = vlaneseq
        %v3880 = vshrl.u32 %v3879, 7
        %v3881 = vsub.s32 %v3878, %v3880
        %v3882 = vrot.slane %v3868, %v3881
        %v3883 = vcombine.high %v3867, 0.0
        %v3885 = vunpack.c.l.s4 1934713408
        %v3886 = vunpack.c.0.s8 %v3885
        %v3887 = vlaneseq
        %v3888 = vshrl.u32 %v3887, 7
        %v3889 = vsub.s32 %v3886, %v3888
        %v3890 = vrot.slane %v3867, %v3889
        %v3892 = vunpack.c.l.s4 1934713408
        %v3893 = vunpack.c.0.s8 %v3892
        %v3894 = vlaneseq
        %v3895 = vshrl.u32 %v3894, 7
        %v3896 = vsub.s32 %v3893, %v3895
        %v3897 = vrot.slane %v3883, %v3896
        %v3898 = vcombine.high %v3875, 0.0
        %v3899 = vcombine.high %v3882, 0.0
        %v3900 = vcombine.high %v3890, 0.0
        %v3901 = vcombine.high %v3897, 0.0
        %v3902 = vcombine.high %v943, 0.0
        %v3904 = vunpack.c.l.s4 1983009808
        %v3905 = vunpack.c.0.s8 %v3904
        %v3906 = vlaneseq
        %v3907 = vshrl.u32 %v3906, 7
        %v3908 = vsub.s32 %v3905, %v3907
        %v3909 = vrot.slane %v943, %v3908
        %v3911 = vunpack.c.l.s4 1983009808
        %v3912 = vunpack.c.0.s8 %v3911
        %v3913 = vlaneseq
        %v3914 = vshrl.u32 %v3913, 7
        %v3915 = vsub.s32 %v3912, %v3914
        %v3916 = vrot.slane %v3902, %v3915
        %v3917 = vcombine.high %v3909, 0.0
        %v3919 = vunpack.c.l.s4 1934713408
        %v3920 = vunpack.c.0.s8 %v3919
        %v3921 = vlaneseq
        %v3922 = vshrl.u32 %v3921, 7
        %v3923 = vsub.s32 %v3920, %v3922
        %v3924 = vrot.slane %v3909, %v3923
        %v3926 = vunpack.c.l.s4 1934713408
        %v3927 = vunpack.c.0.s8 %v3926
        %v3928 = vlaneseq
        %v3929 = vshrl.u32 %v3928, 7
        %v3930 = vsub.s32 %v3927, %v3929
        %v3931 = vrot.slane %v3917, %v3930
        %v3932 = vcombine.high %v3916, 0.0
        %v3934 = vunpack.c.l.s4 1934713408
        %v3935 = vunpack.c.0.s8 %v3934
        %v3936 = vlaneseq
        %v3937 = vshrl.u32 %v3936, 7
        %v3938 = vsub.s32 %v3935, %v3937
        %v3939 = vrot.slane %v3916, %v3938
        %v3941 = vunpack.c.l.s4 1934713408
        %v3942 = vunpack.c.0.s8 %v3941
        %v3943 = vlaneseq
        %v3944 = vshrl.u32 %v3943, 7
        %v3945 = vsub.s32 %v3942, %v3944
        %v3946 = vrot.slane %v3932, %v3945
        %v3947 = vcombine.high %v3924, 0.0
        %v3948 = vcombine.high %v3931, 0.0
        %v3949 = vcombine.high %v3939, 0.0
        %v3950 = vcombine.high %v3946, 0.0
        %v3951 = vcombine.high %v944, 0.0
        %v3953 = vunpack.c.l.s4 1983009808
        %v3954 = vunpack.c.0.s8 %v3953
        %v3955 = vlaneseq
        %v3956 = vshrl.u32 %v3955, 7
        %v3957 = vsub.s32 %v3954, %v3956
        %v3958 = vrot.slane %v944, %v3957
        %v3960 = vunpack.c.l.s4 1983009808
        %v3961 = vunpack.c.0.s8 %v3960
        %v3962 = vlaneseq
        %v3963 = vshrl.u32 %v3962, 7
        %v3964 = vsub.s32 %v3961, %v3963
        %v3965 = vrot.slane %v3951, %v3964
        %v3966 = vcombine.high %v3958, 0.0
        %v3968 = vunpack.c.l.s4 1934713408
        %v3969 = vunpack.c.0.s8 %v3968
        %v3970 = vlaneseq
        %v3971 = vshrl.u32 %v3970, 7
        %v3972 = vsub.s32 %v3969, %v3971
        %v3973 = vrot.slane %v3958, %v3972
        %v3975 = vunpack.c.l.s4 1934713408
        %v3976 = vunpack.c.0.s8 %v3975
        %v3977 = vlaneseq
        %v3978 = vshrl.u32 %v3977, 7
        %v3979 = vsub.s32 %v3976, %v3978
        %v3980 = vrot.slane %v3966, %v3979
        %v3981 = vcombine.high %v3965, 0.0
        %v3983 = vunpack.c.l.s4 1934713408
        %v3984 = vunpack.c.0.s8 %v3983
        %v3985 = vlaneseq
        %v3986 = vshrl.u32 %v3985, 7
        %v3987 = vsub.s32 %v3984, %v3986
        %v3988 = vrot.slane %v3965, %v3987
        %v3990 = vunpack.c.l.s4 1934713408
        %v3991 = vunpack.c.0.s8 %v3990
        %v3992 = vlaneseq
        %v3993 = vshrl.u32 %v3992, 7
        %v3994 = vsub.s32 %v3991, %v3993
        %v3995 = vrot.slane %v3981, %v3994
        %v3996 = vcombine.high %v3973, 0.0
        %v3997 = vcombine.high %v3980, 0.0
        %v3998 = vcombine.high %v3988, 0.0
        %v3999 = vcombine.high %v3995, 0.0
        %v4000 = vcombine.high %v945, 0.0
        %v4002 = vunpack.c.l.s4 1983009808
        %v4003 = vunpack.c.0.s8 %v4002
        %v4004 = vlaneseq
        %v4005 = vshrl.u32 %v4004, 7
        %v4006 = vsub.s32 %v4003, %v4005
        %v4007 = vrot.slane %v945, %v4006
        %v4009 = vunpack.c.l.s4 1983009808
        %v4010 = vunpack.c.0.s8 %v4009
        %v4011 = vlaneseq
        %v4012 = vshrl.u32 %v4011, 7
        %v4013 = vsub.s32 %v4010, %v4012
        %v4014 = vrot.slane %v4000, %v4013
        %v4015 = vcombine.high %v4007, 0.0
        %v4017 = vunpack.c.l.s4 1934713408
        %v4018 = vunpack.c.0.s8 %v4017
        %v4019 = vlaneseq
        %v4020 = vshrl.u32 %v4019, 7
        %v4021 = vsub.s32 %v4018, %v4020
        %v4022 = vrot.slane %v4007, %v4021
        %v4024 = vunpack.c.l.s4 1934713408
        %v4025 = vunpack.c.0.s8 %v4024
        %v4026 = vlaneseq
        %v4027 = vshrl.u32 %v4026, 7
        %v4028 = vsub.s32 %v4025, %v4027
        %v4029 = vrot.slane %v4015, %v4028
        %v4030 = vcombine.high %v4014, 0.0
        %v4032 = vunpack.c.l.s4 1934713408
        %v4033 = vunpack.c.0.s8 %v4032
        %v4034 = vlaneseq
        %v4035 = vshrl.u32 %v4034, 7
        %v4036 = vsub.s32 %v4033, %v4035
        %v4037 = vrot.slane %v4014, %v4036
        %v4039 = vunpack.c.l.s4 1934713408
        %v4040 = vunpack.c.0.s8 %v4039
        %v4041 = vlaneseq
        %v4042 = vshrl.u32 %v4041, 7
        %v4043 = vsub.s32 %v4040, %v4042
        %v4044 = vrot.slane %v4030, %v4043
        %v4045 = vcombine.high %v4022, 0.0
        %v4046 = vcombine.high %v4029, 0.0
        %v4047 = vcombine.high %v4037, 0.0
        %v4048 = vcombine.high %v4044, 0.0
        %v4049 = vcombine.high %v946, 0.0
        %v4051 = vunpack.c.l.s4 1983009808
        %v4052 = vunpack.c.0.s8 %v4051
        %v4053 = vlaneseq
        %v4054 = vshrl.u32 %v4053, 7
        %v4055 = vsub.s32 %v4052, %v4054
        %v4056 = vrot.slane %v946, %v4055
        %v4058 = vunpack.c.l.s4 1983009808
        %v4059 = vunpack.c.0.s8 %v4058
        %v4060 = vlaneseq
        %v4061 = vshrl.u32 %v4060, 7
        %v4062 = vsub.s32 %v4059, %v4061
        %v4063 = vrot.slane %v4049, %v4062
        %v4064 = vcombine.high %v4056, 0.0
        %v4066 = vunpack.c.l.s4 1934713408
        %v4067 = vunpack.c.0.s8 %v4066
        %v4068 = vlaneseq
        %v4069 = vshrl.u32 %v4068, 7
        %v4070 = vsub.s32 %v4067, %v4069
        %v4071 = vrot.slane %v4056, %v4070
        %v4073 = vunpack.c.l.s4 1934713408
        %v4074 = vunpack.c.0.s8 %v4073
        %v4075 = vlaneseq
        %v4076 = vshrl.u32 %v4075, 7
        %v4077 = vsub.s32 %v4074, %v4076
        %v4078 = vrot.slane %v4064, %v4077
        %v4079 = vcombine.high %v4063, 0.0
        %v4081 = vunpack.c.l.s4 1934713408
        %v4082 = vunpack.c.0.s8 %v4081
        %v4083 = vlaneseq
        %v4084 = vshrl.u32 %v4083, 7
        %v4085 = vsub.s32 %v4082, %v4084
        %v4086 = vrot.slane %v4063, %v4085
        %v4088 = vunpack.c.l.s4 1934713408
        %v4089 = vunpack.c.0.s8 %v4088
        %v4090 = vlaneseq
        %v4091 = vshrl.u32 %v4090, 7
        %v4092 = vsub.s32 %v4089, %v4091
        %v4093 = vrot.slane %v4079, %v4092
        %v4094 = vcombine.high %v4071, 0.0
        %v4095 = vcombine.high %v4078, 0.0
        %v4096 = vcombine.high %v4086, 0.0
        %v4097 = vcombine.high %v4093, 0.0
        %v4098 = vcombine.high %v947, 0.0
        %v4100 = vunpack.c.l.s4 1983009808
        %v4101 = vunpack.c.0.s8 %v4100
        %v4102 = vlaneseq
        %v4103 = vshrl.u32 %v4102, 7
        %v4104 = vsub.s32 %v4101, %v4103
        %v4105 = vrot.slane %v947, %v4104
        %v4107 = vunpack.c.l.s4 1983009808
        %v4108 = vunpack.c.0.s8 %v4107
        %v4109 = vlaneseq
        %v4110 = vshrl.u32 %v4109, 7
        %v4111 = vsub.s32 %v4108, %v4110
        %v4112 = vrot.slane %v4098, %v4111
        %v4113 = vcombine.high %v4105, 0.0
        %v4115 = vunpack.c.l.s4 1934713408
        %v4116 = vunpack.c.0.s8 %v4115
        %v4117 = vlaneseq
        %v4118 = vshrl.u32 %v4117, 7
        %v4119 = vsub.s32 %v4116, %v4118
        %v4120 = vrot.slane %v4105, %v4119
        %v4122 = vunpack.c.l.s4 1934713408
        %v4123 = vunpack.c.0.s8 %v4122
        %v4124 = vlaneseq
        %v4125 = vshrl.u32 %v4124, 7
        %v4126 = vsub.s32 %v4123, %v4125
        %v4127 = vrot.slane %v4113, %v4126
        %v4128 = vcombine.high %v4112, 0.0
        %v4130 = vunpack.c.l.s4 1934713408
        %v4131 = vunpack.c.0.s8 %v4130
        %v4132 = vlaneseq
        %v4133 = vshrl.u32 %v4132, 7
        %v4134 = vsub.s32 %v4131, %v4133
        %v4135 = vrot.slane %v4112, %v4134
        %v4137 = vunpack.c.l.s4 1934713408
        %v4138 = vunpack.c.0.s8 %v4137
        %v4139 = vlaneseq
        %v4140 = vshrl.u32 %v4139, 7
        %v4141 = vsub.s32 %v4138, %v4140
        %v4142 = vrot.slane %v4128, %v4141
        %v4143 = vcombine.high %v4120, 0.0
        %v4144 = vcombine.high %v4127, 0.0
        %v4145 = vcombine.high %v4135, 0.0
        %v4146 = vcombine.high %v4142, 0.0
        %v4147 = vcombine.high %v948, 0.0
        %v4149 = vunpack.c.l.s4 1983009808
        %v4150 = vunpack.c.0.s8 %v4149
        %v4151 = vlaneseq
        %v4152 = vshrl.u32 %v4151, 7
        %v4153 = vsub.s32 %v4150, %v4152
        %v4154 = vrot.slane %v948, %v4153
        %v4156 = vunpack.c.l.s4 1983009808
        %v4157 = vunpack.c.0.s8 %v4156
        %v4158 = vlaneseq
        %v4159 = vshrl.u32 %v4158, 7
        %v4160 = vsub.s32 %v4157, %v4159
        %v4161 = vrot.slane %v4147, %v4160
        %v4162 = vcombine.high %v4154, 0.0
        %v4164 = vunpack.c.l.s4 1934713408
        %v4165 = vunpack.c.0.s8 %v4164
        %v4166 = vlaneseq
        %v4167 = vshrl.u32 %v4166, 7
        %v4168 = vsub.s32 %v4165, %v4167
        %v4169 = vrot.slane %v4154, %v4168
        %v4171 = vunpack.c.l.s4 1934713408
        %v4172 = vunpack.c.0.s8 %v4171
        %v4173 = vlaneseq
        %v4174 = vshrl.u32 %v4173, 7
        %v4175 = vsub.s32 %v4172, %v4174
        %v4176 = vrot.slane %v4162, %v4175
        %v4177 = vcombine.high %v4161, 0.0
        %v4179 = vunpack.c.l.s4 1934713408
        %v4180 = vunpack.c.0.s8 %v4179
        %v4181 = vlaneseq
        %v4182 = vshrl.u32 %v4181, 7
        %v4183 = vsub.s32 %v4180, %v4182
        %v4184 = vrot.slane %v4161, %v4183
        %v4186 = vunpack.c.l.s4 1934713408
        %v4187 = vunpack.c.0.s8 %v4186
        %v4188 = vlaneseq
        %v4189 = vshrl.u32 %v4188, 7
        %v4190 = vsub.s32 %v4187, %v4189
        %v4191 = vrot.slane %v4177, %v4190
        %v4192 = vcombine.high %v4169, 0.0
        %v4193 = vcombine.high %v4176, 0.0
        %v4194 = vcombine.high %v4184, 0.0
        %v4195 = vcombine.high %v4191, 0.0
        %v4196 = vcombine.high %v949, 0.0
        %v4198 = vunpack.c.l.s4 1983009808
        %v4199 = vunpack.c.0.s8 %v4198
        %v4200 = vlaneseq
        %v4201 = vshrl.u32 %v4200, 7
        %v4202 = vsub.s32 %v4199, %v4201
        %v4203 = vrot.slane %v949, %v4202
        %v4205 = vunpack.c.l.s4 1983009808
        %v4206 = vunpack.c.0.s8 %v4205
        %v4207 = vlaneseq
        %v4208 = vshrl.u32 %v4207, 7
        %v4209 = vsub.s32 %v4206, %v4208
        %v4210 = vrot.slane %v4196, %v4209
        %v4211 = vcombine.high %v4203, 0.0
        %v4213 = vunpack.c.l.s4 1934713408
        %v4214 = vunpack.c.0.s8 %v4213
        %v4215 = vlaneseq
        %v4216 = vshrl.u32 %v4215, 7
        %v4217 = vsub.s32 %v4214, %v4216
        %v4218 = vrot.slane %v4203, %v4217
        %v4220 = vunpack.c.l.s4 1934713408
        %v4221 = vunpack.c.0.s8 %v4220
        %v4222 = vlaneseq
        %v4223 = vshrl.u32 %v4222, 7
        %v4224 = vsub.s32 %v4221, %v4223
        %v4225 = vrot.slane %v4211, %v4224
        %v4226 = vcombine.high %v4210, 0.0
        %v4228 = vunpack.c.l.s4 1934713408
        %v4229 = vunpack.c.0.s8 %v4228
        %v4230 = vlaneseq
        %v4231 = vshrl.u32 %v4230, 7
        %v4232 = vsub.s32 %v4229, %v4231
        %v4233 = vrot.slane %v4210, %v4232
        %v4235 = vunpack.c.l.s4 1934713408
        %v4236 = vunpack.c.0.s8 %v4235
        %v4237 = vlaneseq
        %v4238 = vshrl.u32 %v4237, 7
        %v4239 = vsub.s32 %v4236, %v4238
        %v4240 = vrot.slane %v4226, %v4239
        %v4241 = vcombine.high %v4218, 0.0
        %v4242 = vcombine.high %v4225, 0.0
        %v4243 = vcombine.high %v4233, 0.0
        %v4244 = vcombine.high %v4240, 0.0
        %v4245 = vcombine.high %v950, 0.0
        %v4247 = vunpack.c.l.s4 1983009808
        %v4248 = vunpack.c.0.s8 %v4247
        %v4249 = vlaneseq
        %v4250 = vshrl.u32 %v4249, 7
        %v4251 = vsub.s32 %v4248, %v4250
        %v4252 = vrot.slane %v950, %v4251
        %v4254 = vunpack.c.l.s4 1983009808
        %v4255 = vunpack.c.0.s8 %v4254
        %v4256 = vlaneseq
        %v4257 = vshrl.u32 %v4256, 7
        %v4258 = vsub.s32 %v4255, %v4257
        %v4259 = vrot.slane %v4245, %v4258
        %v4260 = vcombine.high %v4252, 0.0
        %v4262 = vunpack.c.l.s4 1934713408
        %v4263 = vunpack.c.0.s8 %v4262
        %v4264 = vlaneseq
        %v4265 = vshrl.u32 %v4264, 7
        %v4266 = vsub.s32 %v4263, %v4265
        %v4267 = vrot.slane %v4252, %v4266
        %v4269 = vunpack.c.l.s4 1934713408
        %v4270 = vunpack.c.0.s8 %v4269
        %v4271 = vlaneseq
        %v4272 = vshrl.u32 %v4271, 7
        %v4273 = vsub.s32 %v4270, %v4272
        %v4274 = vrot.slane %v4260, %v4273
        %v4275 = vcombine.high %v4259, 0.0
        %v4277 = vunpack.c.l.s4 1934713408
        %v4278 = vunpack.c.0.s8 %v4277
        %v4279 = vlaneseq
        %v4280 = vshrl.u32 %v4279, 7
        %v4281 = vsub.s32 %v4278, %v4280
        %v4282 = vrot.slane %v4259, %v4281
        %v4284 = vunpack.c.l.s4 1934713408
        %v4285 = vunpack.c.0.s8 %v4284
        %v4286 = vlaneseq
        %v4287 = vshrl.u32 %v4286, 7
        %v4288 = vsub.s32 %v4285, %v4287
        %v4289 = vrot.slane %v4275, %v4288
        %v4290 = vcombine.high %v4267, 0.0
        %v4291 = vcombine.high %v4274, 0.0
        %v4292 = vcombine.high %v4282, 0.0
        %v4293 = vcombine.high %v4289, 0.0
        %v4294 = vcombine.high %v951, 0.0
        %v4296 = vunpack.c.l.s4 1983009808
        %v4297 = vunpack.c.0.s8 %v4296
        %v4298 = vlaneseq
        %v4299 = vshrl.u32 %v4298, 7
        %v4300 = vsub.s32 %v4297, %v4299
        %v4301 = vrot.slane %v951, %v4300
        %v4303 = vunpack.c.l.s4 1983009808
        %v4304 = vunpack.c.0.s8 %v4303
        %v4305 = vlaneseq
        %v4306 = vshrl.u32 %v4305, 7
        %v4307 = vsub.s32 %v4304, %v4306
        %v4308 = vrot.slane %v4294, %v4307
        %v4309 = vcombine.high %v4301, 0.0
        %v4311 = vunpack.c.l.s4 1934713408
        %v4312 = vunpack.c.0.s8 %v4311
        %v4313 = vlaneseq
        %v4314 = vshrl.u32 %v4313, 7
        %v4315 = vsub.s32 %v4312, %v4314
        %v4316 = vrot.slane %v4301, %v4315
        %v4318 = vunpack.c.l.s4 1934713408
        %v4319 = vunpack.c.0.s8 %v4318
        %v4320 = vlaneseq
        %v4321 = vshrl.u32 %v4320, 7
        %v4322 = vsub.s32 %v4319, %v4321
        %v4323 = vrot.slane %v4309, %v4322
        %v4324 = vcombine.high %v4308, 0.0
        %v4326 = vunpack.c.l.s4 1934713408
        %v4327 = vunpack.c.0.s8 %v4326
        %v4328 = vlaneseq
        %v4329 = vshrl.u32 %v4328, 7
        %v4330 = vsub.s32 %v4327, %v4329
        %v4331 = vrot.slane %v4308, %v4330
        %v4333 = vunpack.c.l.s4 1934713408
        %v4334 = vunpack.c.0.s8 %v4333
        %v4335 = vlaneseq
        %v4336 = vshrl.u32 %v4335, 7
        %v4337 = vsub.s32 %v4334, %v4336
        %v4338 = vrot.slane %v4324, %v4337
        %v4339 = vcombine.high %v4316, 0.0
        %v4340 = vcombine.high %v4323, 0.0
        %v4341 = vcombine.high %v4331, 0.0
        %v4342 = vcombine.high %v4338, 0.0
        %v4343 = vcombine.high %v952, 0.0
        %v4345 = vunpack.c.l.s4 1983009808
        %v4346 = vunpack.c.0.s8 %v4345
        %v4347 = vlaneseq
        %v4348 = vshrl.u32 %v4347, 7
        %v4349 = vsub.s32 %v4346, %v4348
        %v4350 = vrot.slane %v952, %v4349
        %v4352 = vunpack.c.l.s4 1983009808
        %v4353 = vunpack.c.0.s8 %v4352
        %v4354 = vlaneseq
        %v4355 = vshrl.u32 %v4354, 7
        %v4356 = vsub.s32 %v4353, %v4355
        %v4357 = vrot.slane %v4343, %v4356
        %v4358 = vcombine.high %v4350, 0.0
        %v4360 = vunpack.c.l.s4 1934713408
        %v4361 = vunpack.c.0.s8 %v4360
        %v4362 = vlaneseq
        %v4363 = vshrl.u32 %v4362, 7
        %v4364 = vsub.s32 %v4361, %v4363
        %v4365 = vrot.slane %v4350, %v4364
        %v4367 = vunpack.c.l.s4 1934713408
        %v4368 = vunpack.c.0.s8 %v4367
        %v4369 = vlaneseq
        %v4370 = vshrl.u32 %v4369, 7
        %v4371 = vsub.s32 %v4368, %v4370
        %v4372 = vrot.slane %v4358, %v4371
        %v4373 = vcombine.high %v4357, 0.0
        %v4375 = vunpack.c.l.s4 1934713408
        %v4376 = vunpack.c.0.s8 %v4375
        %v4377 = vlaneseq
        %v4378 = vshrl.u32 %v4377, 7
        %v4379 = vsub.s32 %v4376, %v4378
        %v4380 = vrot.slane %v4357, %v4379
        %v4382 = vunpack.c.l.s4 1934713408
        %v4383 = vunpack.c.0.s8 %v4382
        %v4384 = vlaneseq
        %v4385 = vshrl.u32 %v4384, 7
        %v4386 = vsub.s32 %v4383, %v4385
        %v4387 = vrot.slane %v4373, %v4386
        %v4388 = vcombine.high %v4365, 0.0
        %v4389 = vcombine.high %v4372, 0.0
        %v4390 = vcombine.high %v4380, 0.0
        %v4391 = vcombine.high %v4387, 0.0
        %v4392 = vcombine.high %v953, 0.0
        %v4394 = vunpack.c.l.s4 1983009808
        %v4395 = vunpack.c.0.s8 %v4394
        %v4396 = vlaneseq
        %v4397 = vshrl.u32 %v4396, 7
        %v4398 = vsub.s32 %v4395, %v4397
        %v4399 = vrot.slane %v953, %v4398
        %v4401 = vunpack.c.l.s4 1983009808
        %v4402 = vunpack.c.0.s8 %v4401
        %v4403 = vlaneseq
        %v4404 = vshrl.u32 %v4403, 7
        %v4405 = vsub.s32 %v4402, %v4404
        %v4406 = vrot.slane %v4392, %v4405
        %v4407 = vcombine.high %v4399, 0.0
        %v4409 = vunpack.c.l.s4 1934713408
        %v4410 = vunpack.c.0.s8 %v4409
        %v4411 = vlaneseq
        %v4412 = vshrl.u32 %v4411, 7
        %v4413 = vsub.s32 %v4410, %v4412
        %v4414 = vrot.slane %v4399, %v4413
        %v4416 = vunpack.c.l.s4 1934713408
        %v4417 = vunpack.c.0.s8 %v4416
        %v4418 = vlaneseq
        %v4419 = vshrl.u32 %v4418, 7
        %v4420 = vsub.s32 %v4417, %v4419
        %v4421 = vrot.slane %v4407, %v4420
        %v4422 = vcombine.high %v4406, 0.0
        %v4424 = vunpack.c.l.s4 1934713408
        %v4425 = vunpack.c.0.s8 %v4424
        %v4426 = vlaneseq
        %v4427 = vshrl.u32 %v4426, 7
        %v4428 = vsub.s32 %v4425, %v4427
        %v4429 = vrot.slane %v4406, %v4428
        %v4431 = vunpack.c.l.s4 1934713408
        %v4432 = vunpack.c.0.s8 %v4431
        %v4433 = vlaneseq
        %v4434 = vshrl.u32 %v4433, 7
        %v4435 = vsub.s32 %v4432, %v4434
        %v4436 = vrot.slane %v4422, %v4435
        %v4437 = vcombine.high %v4414, 0.0
        %v4438 = vcombine.high %v4421, 0.0
        %v4439 = vcombine.high %v4429, 0.0
        %v4440 = vcombine.high %v4436, 0.0
        %v4441 = vcombine.high %v954, 0.0
        %v4443 = vunpack.c.l.s4 1983009808
        %v4444 = vunpack.c.0.s8 %v4443
        %v4445 = vlaneseq
        %v4446 = vshrl.u32 %v4445, 7
        %v4447 = vsub.s32 %v4444, %v4446
        %v4448 = vrot.slane %v954, %v4447
        %v4450 = vunpack.c.l.s4 1983009808
        %v4451 = vunpack.c.0.s8 %v4450
        %v4452 = vlaneseq
        %v4453 = vshrl.u32 %v4452, 7
        %v4454 = vsub.s32 %v4451, %v4453
        %v4455 = vrot.slane %v4441, %v4454
        %v4456 = vcombine.high %v4448, 0.0
        %v4458 = vunpack.c.l.s4 1934713408
        %v4459 = vunpack.c.0.s8 %v4458
        %v4460 = vlaneseq
        %v4461 = vshrl.u32 %v4460, 7
        %v4462 = vsub.s32 %v4459, %v4461
        %v4463 = vrot.slane %v4448, %v4462
        %v4465 = vunpack.c.l.s4 1934713408
        %v4466 = vunpack.c.0.s8 %v4465
        %v4467 = vlaneseq
        %v4468 = vshrl.u32 %v4467, 7
        %v4469 = vsub.s32 %v4466, %v4468
        %v4470 = vrot.slane %v4456, %v4469
        %v4471 = vcombine.high %v4455, 0.0
        %v4473 = vunpack.c.l.s4 1934713408
        %v4474 = vunpack.c.0.s8 %v4473
        %v4475 = vlaneseq
        %v4476 = vshrl.u32 %v4475, 7
        %v4477 = vsub.s32 %v4474, %v4476
        %v4478 = vrot.slane %v4455, %v4477
        %v4480 = vunpack.c.l.s4 1934713408
        %v4481 = vunpack.c.0.s8 %v4480
        %v4482 = vlaneseq
        %v4483 = vshrl.u32 %v4482, 7
        %v4484 = vsub.s32 %v4481, %v4483
        %v4485 = vrot.slane %v4471, %v4484
        %v4486 = vcombine.high %v4463, 0.0
        %v4487 = vcombine.high %v4470, 0.0
        %v4488 = vcombine.high %v4478, 0.0
        %v4489 = vcombine.high %v4485, 0.0
        %v4490 = vcombine.high %v955, 0.0
        %v4492 = vunpack.c.l.s4 1983009808
        %v4493 = vunpack.c.0.s8 %v4492
        %v4494 = vlaneseq
        %v4495 = vshrl.u32 %v4494, 7
        %v4496 = vsub.s32 %v4493, %v4495
        %v4497 = vrot.slane %v955, %v4496
        %v4499 = vunpack.c.l.s4 1983009808
        %v4500 = vunpack.c.0.s8 %v4499
        %v4501 = vlaneseq
        %v4502 = vshrl.u32 %v4501, 7
        %v4503 = vsub.s32 %v4500, %v4502
        %v4504 = vrot.slane %v4490, %v4503
        %v4505 = vcombine.high %v4497, 0.0
        %v4507 = vunpack.c.l.s4 1934713408
        %v4508 = vunpack.c.0.s8 %v4507
        %v4509 = vlaneseq
        %v4510 = vshrl.u32 %v4509, 7
        %v4511 = vsub.s32 %v4508, %v4510
        %v4512 = vrot.slane %v4497, %v4511
        %v4514 = vunpack.c.l.s4 1934713408
        %v4515 = vunpack.c.0.s8 %v4514
        %v4516 = vlaneseq
        %v4517 = vshrl.u32 %v4516, 7
        %v4518 = vsub.s32 %v4515, %v4517
        %v4519 = vrot.slane %v4505, %v4518
        %v4520 = vcombine.high %v4504, 0.0
        %v4522 = vunpack.c.l.s4 1934713408
        %v4523 = vunpack.c.0.s8 %v4522
        %v4524 = vlaneseq
        %v4525 = vshrl.u32 %v4524, 7
        %v4526 = vsub.s32 %v4523, %v4525
        %v4527 = vrot.slane %v4504, %v4526
        %v4529 = vunpack.c.l.s4 1934713408
        %v4530 = vunpack.c.0.s8 %v4529
        %v4531 = vlaneseq
        %v4532 = vshrl.u32 %v4531, 7
        %v4533 = vsub.s32 %v4530, %v4532
        %v4534 = vrot.slane %v4520, %v4533
        %v4535 = vcombine.high %v4512, 0.0
        %v4536 = vcombine.high %v4519, 0.0
        %v4537 = vcombine.high %v4527, 0.0
        %v4538 = vcombine.high %v4534, 0.0
        %v4539 = vcombine.high %v956, 0.0
        %v4541 = vunpack.c.l.s4 1983009808
        %v4542 = vunpack.c.0.s8 %v4541
        %v4543 = vlaneseq
        %v4544 = vshrl.u32 %v4543, 7
        %v4545 = vsub.s32 %v4542, %v4544
        %v4546 = vrot.slane %v956, %v4545
        %v4548 = vunpack.c.l.s4 1983009808
        %v4549 = vunpack.c.0.s8 %v4548
        %v4550 = vlaneseq
        %v4551 = vshrl.u32 %v4550, 7
        %v4552 = vsub.s32 %v4549, %v4551
        %v4553 = vrot.slane %v4539, %v4552
        %v4554 = vcombine.high %v4546, 0.0
        %v4556 = vunpack.c.l.s4 1934713408
        %v4557 = vunpack.c.0.s8 %v4556
        %v4558 = vlaneseq
        %v4559 = vshrl.u32 %v4558, 7
        %v4560 = vsub.s32 %v4557, %v4559
        %v4561 = vrot.slane %v4546, %v4560
        %v4563 = vunpack.c.l.s4 1934713408
        %v4564 = vunpack.c.0.s8 %v4563
        %v4565 = vlaneseq
        %v4566 = vshrl.u32 %v4565, 7
        %v4567 = vsub.s32 %v4564, %v4566
        %v4568 = vrot.slane %v4554, %v4567
        %v4569 = vcombine.high %v4553, 0.0
        %v4571 = vunpack.c.l.s4 1934713408
        %v4572 = vunpack.c.0.s8 %v4571
        %v4573 = vlaneseq
        %v4574 = vshrl.u32 %v4573, 7
        %v4575 = vsub.s32 %v4572, %v4574
        %v4576 = vrot.slane %v4553, %v4575
        %v4578 = vunpack.c.l.s4 1934713408
        %v4579 = vunpack.c.0.s8 %v4578
        %v4580 = vlaneseq
        %v4581 = vshrl.u32 %v4580, 7
        %v4582 = vsub.s32 %v4579, %v4581
        %v4583 = vrot.slane %v4569, %v4582
        %v4584 = vcombine.high %v4561, 0.0
        %v4585 = vcombine.high %v4568, 0.0
        %v4586 = vcombine.high %v4576, 0.0
        %v4587 = vcombine.high %v4583, 0.0
        %v4588 = vcombine.high %v957, 0.0
        %v4590 = vunpack.c.l.s4 1983009808
        %v4591 = vunpack.c.0.s8 %v4590
        %v4592 = vlaneseq
        %v4593 = vshrl.u32 %v4592, 7
        %v4594 = vsub.s32 %v4591, %v4593
        %v4595 = vrot.slane %v957, %v4594
        %v4597 = vunpack.c.l.s4 1983009808
        %v4598 = vunpack.c.0.s8 %v4597
        %v4599 = vlaneseq
        %v4600 = vshrl.u32 %v4599, 7
        %v4601 = vsub.s32 %v4598, %v4600
        %v4602 = vrot.slane %v4588, %v4601
        %v4603 = vcombine.high %v4595, 0.0
        %v4605 = vunpack.c.l.s4 1934713408
        %v4606 = vunpack.c.0.s8 %v4605
        %v4607 = vlaneseq
        %v4608 = vshrl.u32 %v4607, 7
        %v4609 = vsub.s32 %v4606, %v4608
        %v4610 = vrot.slane %v4595, %v4609
        %v4612 = vunpack.c.l.s4 1934713408
        %v4613 = vunpack.c.0.s8 %v4612
        %v4614 = vlaneseq
        %v4615 = vshrl.u32 %v4614, 7
        %v4616 = vsub.s32 %v4613, %v4615
        %v4617 = vrot.slane %v4603, %v4616
        %v4618 = vcombine.high %v4602, 0.0
        %v4620 = vunpack.c.l.s4 1934713408
        %v4621 = vunpack.c.0.s8 %v4620
        %v4622 = vlaneseq
        %v4623 = vshrl.u32 %v4622, 7
        %v4624 = vsub.s32 %v4621, %v4623
        %v4625 = vrot.slane %v4602, %v4624
        %v4627 = vunpack.c.l.s4 1934713408
        %v4628 = vunpack.c.0.s8 %v4627
        %v4629 = vlaneseq
        %v4630 = vshrl.u32 %v4629, 7
        %v4631 = vsub.s32 %v4628, %v4630
        %v4632 = vrot.slane %v4618, %v4631
        %v4633 = vcombine.high %v4610, 0.0
        %v4634 = vcombine.high %v4617, 0.0
        %v4635 = vcombine.high %v4625, 0.0
        %v4636 = vcombine.high %v4632, 0.0
        %v4637 = vcombine.high %v958, 0.0
        %v4639 = vunpack.c.l.s4 1983009808
        %v4640 = vunpack.c.0.s8 %v4639
        %v4641 = vlaneseq
        %v4642 = vshrl.u32 %v4641, 7
        %v4643 = vsub.s32 %v4640, %v4642
        %v4644 = vrot.slane %v958, %v4643
        %v4646 = vunpack.c.l.s4 1983009808
        %v4647 = vunpack.c.0.s8 %v4646
        %v4648 = vlaneseq
        %v4649 = vshrl.u32 %v4648, 7
        %v4650 = vsub.s32 %v4647, %v4649
        %v4651 = vrot.slane %v4637, %v4650
        %v4652 = vcombine.high %v4644, 0.0
        %v4654 = vunpack.c.l.s4 1934713408
        %v4655 = vunpack.c.0.s8 %v4654
        %v4656 = vlaneseq
        %v4657 = vshrl.u32 %v4656, 7
        %v4658 = vsub.s32 %v4655, %v4657
        %v4659 = vrot.slane %v4644, %v4658
        %v4661 = vunpack.c.l.s4 1934713408
        %v4662 = vunpack.c.0.s8 %v4661
        %v4663 = vlaneseq
        %v4664 = vshrl.u32 %v4663, 7
        %v4665 = vsub.s32 %v4662, %v4664
        %v4666 = vrot.slane %v4652, %v4665
        %v4667 = vcombine.high %v4651, 0.0
        %v4669 = vunpack.c.l.s4 1934713408
        %v4670 = vunpack.c.0.s8 %v4669
        %v4671 = vlaneseq
        %v4672 = vshrl.u32 %v4671, 7
        %v4673 = vsub.s32 %v4670, %v4672
        %v4674 = vrot.slane %v4651, %v4673
        %v4676 = vunpack.c.l.s4 1934713408
        %v4677 = vunpack.c.0.s8 %v4676
        %v4678 = vlaneseq
        %v4679 = vshrl.u32 %v4678, 7
        %v4680 = vsub.s32 %v4677, %v4679
        %v4681 = vrot.slane %v4667, %v4680
        %v4682 = vcombine.high %v4659, 0.0
        %v4683 = vcombine.high %v4666, 0.0
        %v4684 = vcombine.high %v4674, 0.0
        %v4685 = vcombine.high %v4681, 0.0
        %v4686 = vcombine.high %v959, 0.0
        %v4688 = vunpack.c.l.s4 1983009808
        %v4689 = vunpack.c.0.s8 %v4688
        %v4690 = vlaneseq
        %v4691 = vshrl.u32 %v4690, 7
        %v4692 = vsub.s32 %v4689, %v4691
        %v4693 = vrot.slane %v959, %v4692
        %v4695 = vunpack.c.l.s4 1983009808
        %v4696 = vunpack.c.0.s8 %v4695
        %v4697 = vlaneseq
        %v4698 = vshrl.u32 %v4697, 7
        %v4699 = vsub.s32 %v4696, %v4698
        %v4700 = vrot.slane %v4686, %v4699
        %v4701 = vcombine.high %v4693, 0.0
        %v4703 = vunpack.c.l.s4 1934713408
        %v4704 = vunpack.c.0.s8 %v4703
        %v4705 = vlaneseq
        %v4706 = vshrl.u32 %v4705, 7
        %v4707 = vsub.s32 %v4704, %v4706
        %v4708 = vrot.slane %v4693, %v4707
        %v4710 = vunpack.c.l.s4 1934713408
        %v4711 = vunpack.c.0.s8 %v4710
        %v4712 = vlaneseq
        %v4713 = vshrl.u32 %v4712, 7
        %v4714 = vsub.s32 %v4711, %v4713
        %v4715 = vrot.slane %v4701, %v4714
        %v4716 = vcombine.high %v4700, 0.0
        %v4718 = vunpack.c.l.s4 1934713408
        %v4719 = vunpack.c.0.s8 %v4718
        %v4720 = vlaneseq
        %v4721 = vshrl.u32 %v4720, 7
        %v4722 = vsub.s32 %v4719, %v4721
        %v4723 = vrot.slane %v4700, %v4722
        %v4725 = vunpack.c.l.s4 1934713408
        %v4726 = vunpack.c.0.s8 %v4725
        %v4727 = vlaneseq
        %v4728 = vshrl.u32 %v4727, 7
        %v4729 = vsub.s32 %v4726, %v4728
        %v4730 = vrot.slane %v4716, %v4729
        %v4731 = vcombine.high %v4708, 0.0
        %v4732 = vcombine.high %v4715, 0.0
        %v4733 = vcombine.high %v4723, 0.0
        %v4734 = vcombine.high %v4730, 0.0
        %v4735 = vcombine.high %v960, 0.0
        %v4737 = vunpack.c.l.s4 1983009808
        %v4738 = vunpack.c.0.s8 %v4737
        %v4739 = vlaneseq
        %v4740 = vshrl.u32 %v4739, 7
        %v4741 = vsub.s32 %v4738, %v4740
        %v4742 = vrot.slane %v960, %v4741
        %v4744 = vunpack.c.l.s4 1983009808
        %v4745 = vunpack.c.0.s8 %v4744
        %v4746 = vlaneseq
        %v4747 = vshrl.u32 %v4746, 7
        %v4748 = vsub.s32 %v4745, %v4747
        %v4749 = vrot.slane %v4735, %v4748
        %v4750 = vcombine.high %v4742, 0.0
        %v4752 = vunpack.c.l.s4 1934713408
        %v4753 = vunpack.c.0.s8 %v4752
        %v4754 = vlaneseq
        %v4755 = vshrl.u32 %v4754, 7
        %v4756 = vsub.s32 %v4753, %v4755
        %v4757 = vrot.slane %v4742, %v4756
        %v4759 = vunpack.c.l.s4 1934713408
        %v4760 = vunpack.c.0.s8 %v4759
        %v4761 = vlaneseq
        %v4762 = vshrl.u32 %v4761, 7
        %v4763 = vsub.s32 %v4760, %v4762
        %v4764 = vrot.slane %v4750, %v4763
        %v4765 = vcombine.high %v4749, 0.0
        %v4767 = vunpack.c.l.s4 1934713408
        %v4768 = vunpack.c.0.s8 %v4767
        %v4769 = vlaneseq
        %v4770 = vshrl.u32 %v4769, 7
        %v4771 = vsub.s32 %v4768, %v4770
        %v4772 = vrot.slane %v4749, %v4771
        %v4774 = vunpack.c.l.s4 1934713408
        %v4775 = vunpack.c.0.s8 %v4774
        %v4776 = vlaneseq
        %v4777 = vshrl.u32 %v4776, 7
        %v4778 = vsub.s32 %v4775, %v4777
        %v4779 = vrot.slane %v4765, %v4778
        %v4780 = vcombine.high %v4757, 0.0
        %v4781 = vcombine.high %v4764, 0.0
        %v4782 = vcombine.high %v4772, 0.0
        %v4783 = vcombine.high %v4779, 0.0
        %v4784 = vcombine.high %v961, 0.0
        %v4786 = vunpack.c.l.s4 1983009808
        %v4787 = vunpack.c.0.s8 %v4786
        %v4788 = vlaneseq
        %v4789 = vshrl.u32 %v4788, 7
        %v4790 = vsub.s32 %v4787, %v4789
        %v4791 = vrot.slane %v961, %v4790
        %v4793 = vunpack.c.l.s4 1983009808
        %v4794 = vunpack.c.0.s8 %v4793
        %v4795 = vlaneseq
        %v4796 = vshrl.u32 %v4795, 7
        %v4797 = vsub.s32 %v4794, %v4796
        %v4798 = vrot.slane %v4784, %v4797
        %v4799 = vcombine.high %v4791, 0.0
        %v4801 = vunpack.c.l.s4 1934713408
        %v4802 = vunpack.c.0.s8 %v4801
        %v4803 = vlaneseq
        %v4804 = vshrl.u32 %v4803, 7
        %v4805 = vsub.s32 %v4802, %v4804
        %v4806 = vrot.slane %v4791, %v4805
        %v4808 = vunpack.c.l.s4 1934713408
        %v4809 = vunpack.c.0.s8 %v4808
        %v4810 = vlaneseq
        %v4811 = vshrl.u32 %v4810, 7
        %v4812 = vsub.s32 %v4809, %v4811
        %v4813 = vrot.slane %v4799, %v4812
        %v4814 = vcombine.high %v4798, 0.0
        %v4816 = vunpack.c.l.s4 1934713408
        %v4817 = vunpack.c.0.s8 %v4816
        %v4818 = vlaneseq
        %v4819 = vshrl.u32 %v4818, 7
        %v4820 = vsub.s32 %v4817, %v4819
        %v4821 = vrot.slane %v4798, %v4820
        %v4823 = vunpack.c.l.s4 1934713408
        %v4824 = vunpack.c.0.s8 %v4823
        %v4825 = vlaneseq
        %v4826 = vshrl.u32 %v4825, 7
        %v4827 = vsub.s32 %v4824, %v4826
        %v4828 = vrot.slane %v4814, %v4827
        %v4829 = vcombine.high %v4806, 0.0
        %v4830 = vcombine.high %v4813, 0.0
        %v4831 = vcombine.high %v4821, 0.0
        %v4832 = vcombine.high %v4828, 0.0
        %v4833 = vcombine.high %v962, 0.0
        %v4835 = vunpack.c.l.s4 1983009808
        %v4836 = vunpack.c.0.s8 %v4835
        %v4837 = vlaneseq
        %v4838 = vshrl.u32 %v4837, 7
        %v4839 = vsub.s32 %v4836, %v4838
        %v4840 = vrot.slane %v962, %v4839
        %v4842 = vunpack.c.l.s4 1983009808
        %v4843 = vunpack.c.0.s8 %v4842
        %v4844 = vlaneseq
        %v4845 = vshrl.u32 %v4844, 7
        %v4846 = vsub.s32 %v4843, %v4845
        %v4847 = vrot.slane %v4833, %v4846
        %v4848 = vcombine.high %v4840, 0.0
        %v4850 = vunpack.c.l.s4 1934713408
        %v4851 = vunpack.c.0.s8 %v4850
        %v4852 = vlaneseq
        %v4853 = vshrl.u32 %v4852, 7
        %v4854 = vsub.s32 %v4851, %v4853
        %v4855 = vrot.slane %v4840, %v4854
        %v4857 = vunpack.c.l.s4 1934713408
        %v4858 = vunpack.c.0.s8 %v4857
        %v4859 = vlaneseq
        %v4860 = vshrl.u32 %v4859, 7
        %v4861 = vsub.s32 %v4858, %v4860
        %v4862 = vrot.slane %v4848, %v4861
        %v4863 = vcombine.high %v4847, 0.0
        %v4865 = vunpack.c.l.s4 1934713408
        %v4866 = vunpack.c.0.s8 %v4865
        %v4867 = vlaneseq
        %v4868 = vshrl.u32 %v4867, 7
        %v4869 = vsub.s32 %v4866, %v4868
        %v4870 = vrot.slane %v4847, %v4869
        %v4872 = vunpack.c.l.s4 1934713408
        %v4873 = vunpack.c.0.s8 %v4872
        %v4874 = vlaneseq
        %v4875 = vshrl.u32 %v4874, 7
        %v4876 = vsub.s32 %v4873, %v4875
        %v4877 = vrot.slane %v4863, %v4876
        %v4878 = vcombine.high %v4855, 0.0
        %v4879 = vcombine.high %v4862, 0.0
        %v4880 = vcombine.high %v4870, 0.0
        %v4881 = vcombine.high %v4877, 0.0
        %v4882 = vcombine.high %v963, 0.0
        %v4884 = vunpack.c.l.s4 1983009808
        %v4885 = vunpack.c.0.s8 %v4884
        %v4886 = vlaneseq
        %v4887 = vshrl.u32 %v4886, 7
        %v4888 = vsub.s32 %v4885, %v4887
        %v4889 = vrot.slane %v963, %v4888
        %v4891 = vunpack.c.l.s4 1983009808
        %v4892 = vunpack.c.0.s8 %v4891
        %v4893 = vlaneseq
        %v4894 = vshrl.u32 %v4893, 7
        %v4895 = vsub.s32 %v4892, %v4894
        %v4896 = vrot.slane %v4882, %v4895
        %v4897 = vcombine.high %v4889, 0.0
        %v4899 = vunpack.c.l.s4 1934713408
        %v4900 = vunpack.c.0.s8 %v4899
        %v4901 = vlaneseq
        %v4902 = vshrl.u32 %v4901, 7
        %v4903 = vsub.s32 %v4900, %v4902
        %v4904 = vrot.slane %v4889, %v4903
        %v4906 = vunpack.c.l.s4 1934713408
        %v4907 = vunpack.c.0.s8 %v4906
        %v4908 = vlaneseq
        %v4909 = vshrl.u32 %v4908, 7
        %v4910 = vsub.s32 %v4907, %v4909
        %v4911 = vrot.slane %v4897, %v4910
        %v4912 = vcombine.high %v4896, 0.0
        %v4914 = vunpack.c.l.s4 1934713408
        %v4915 = vunpack.c.0.s8 %v4914
        %v4916 = vlaneseq
        %v4917 = vshrl.u32 %v4916, 7
        %v4918 = vsub.s32 %v4915, %v4917
        %v4919 = vrot.slane %v4896, %v4918
        %v4921 = vunpack.c.l.s4 1934713408
        %v4922 = vunpack.c.0.s8 %v4921
        %v4923 = vlaneseq
        %v4924 = vshrl.u32 %v4923, 7
        %v4925 = vsub.s32 %v4922, %v4924
        %v4926 = vrot.slane %v4912, %v4925
        %v4927 = vcombine.high %v4904, 0.0
        %v4928 = vcombine.high %v4911, 0.0
        %v4929 = vcombine.high %v4919, 0.0
        %v4930 = vcombine.high %v4926, 0.0
        %v4931 = vcombine.high %v964, 0.0
        %v4933 = vunpack.c.l.s4 1983009808
        %v4934 = vunpack.c.0.s8 %v4933
        %v4935 = vlaneseq
        %v4936 = vshrl.u32 %v4935, 7
        %v4937 = vsub.s32 %v4934, %v4936
        %v4938 = vrot.slane %v964, %v4937
        %v4940 = vunpack.c.l.s4 1983009808
        %v4941 = vunpack.c.0.s8 %v4940
        %v4942 = vlaneseq
        %v4943 = vshrl.u32 %v4942, 7
        %v4944 = vsub.s32 %v4941, %v4943
        %v4945 = vrot.slane %v4931, %v4944
        %v4946 = vcombine.high %v4938, 0.0
        %v4948 = vunpack.c.l.s4 1934713408
        %v4949 = vunpack.c.0.s8 %v4948
        %v4950 = vlaneseq
        %v4951 = vshrl.u32 %v4950, 7
        %v4952 = vsub.s32 %v4949, %v4951
        %v4953 = vrot.slane %v4938, %v4952
        %v4955 = vunpack.c.l.s4 1934713408
        %v4956 = vunpack.c.0.s8 %v4955
        %v4957 = vlaneseq
        %v4958 = vshrl.u32 %v4957, 7
        %v4959 = vsub.s32 %v4956, %v4958
        %v4960 = vrot.slane %v4946, %v4959
        %v4961 = vcombine.high %v4945, 0.0
        %v4963 = vunpack.c.l.s4 1934713408
        %v4964 = vunpack.c.0.s8 %v4963
        %v4965 = vlaneseq
        %v4966 = vshrl.u32 %v4965, 7
        %v4967 = vsub.s32 %v4964, %v4966
        %v4968 = vrot.slane %v4945, %v4967
        %v4970 = vunpack.c.l.s4 1934713408
        %v4971 = vunpack.c.0.s8 %v4970
        %v4972 = vlaneseq
        %v4973 = vshrl.u32 %v4972, 7
        %v4974 = vsub.s32 %v4971, %v4973
        %v4975 = vrot.slane %v4961, %v4974
        %v4976 = vcombine.high %v4953, 0.0
        %v4977 = vcombine.high %v4960, 0.0
        %v4978 = vcombine.high %v4968, 0.0
        %v4979 = vcombine.high %v4975, 0.0
        %v4980 = vcombine.high %v965, 0.0
        %v4982 = vunpack.c.l.s4 1983009808
        %v4983 = vunpack.c.0.s8 %v4982
        %v4984 = vlaneseq
        %v4985 = vshrl.u32 %v4984, 7
        %v4986 = vsub.s32 %v4983, %v4985
        %v4987 = vrot.slane %v965, %v4986
        %v4989 = vunpack.c.l.s4 1983009808
        %v4990 = vunpack.c.0.s8 %v4989
        %v4991 = vlaneseq
        %v4992 = vshrl.u32 %v4991, 7
        %v4993 = vsub.s32 %v4990, %v4992
        %v4994 = vrot.slane %v4980, %v4993
        %v4995 = vcombine.high %v4987, 0.0
        %v4997 = vunpack.c.l.s4 1934713408
        %v4998 = vunpack.c.0.s8 %v4997
        %v4999 = vlaneseq
        %v5000 = vshrl.u32 %v4999, 7
        %v5001 = vsub.s32 %v4998, %v5000
        %v5002 = vrot.slane %v4987, %v5001
        %v5004 = vunpack.c.l.s4 1934713408
        %v5005 = vunpack.c.0.s8 %v5004
        %v5006 = vlaneseq
        %v5007 = vshrl.u32 %v5006, 7
        %v5008 = vsub.s32 %v5005, %v5007
        %v5009 = vrot.slane %v4995, %v5008
        %v5010 = vcombine.high %v4994, 0.0
        %v5012 = vunpack.c.l.s4 1934713408
        %v5013 = vunpack.c.0.s8 %v5012
        %v5014 = vlaneseq
        %v5015 = vshrl.u32 %v5014, 7
        %v5016 = vsub.s32 %v5013, %v5015
        %v5017 = vrot.slane %v4994, %v5016
        %v5019 = vunpack.c.l.s4 1934713408
        %v5020 = vunpack.c.0.s8 %v5019
        %v5021 = vlaneseq
        %v5022 = vshrl.u32 %v5021, 7
        %v5023 = vsub.s32 %v5020, %v5022
        %v5024 = vrot.slane %v5010, %v5023
        %v5025 = vcombine.high %v5002, 0.0
        %v5026 = vcombine.high %v5009, 0.0
        %v5027 = vcombine.high %v5017, 0.0
        %v5028 = vcombine.high %v5024, 0.0
        %v5029 = vcombine.high %v966, 0.0
        %v5031 = vunpack.c.l.s4 1983009808
        %v5032 = vunpack.c.0.s8 %v5031
        %v5033 = vlaneseq
        %v5034 = vshrl.u32 %v5033, 7
        %v5035 = vsub.s32 %v5032, %v5034
        %v5036 = vrot.slane %v966, %v5035
        %v5038 = vunpack.c.l.s4 1983009808
        %v5039 = vunpack.c.0.s8 %v5038
        %v5040 = vlaneseq
        %v5041 = vshrl.u32 %v5040, 7
        %v5042 = vsub.s32 %v5039, %v5041
        %v5043 = vrot.slane %v5029, %v5042
        %v5044 = vcombine.high %v5036, 0.0
        %v5046 = vunpack.c.l.s4 1934713408
        %v5047 = vunpack.c.0.s8 %v5046
        %v5048 = vlaneseq
        %v5049 = vshrl.u32 %v5048, 7
        %v5050 = vsub.s32 %v5047, %v5049
        %v5051 = vrot.slane %v5036, %v5050
        %v5053 = vunpack.c.l.s4 1934713408
        %v5054 = vunpack.c.0.s8 %v5053
        %v5055 = vlaneseq
        %v5056 = vshrl.u32 %v5055, 7
        %v5057 = vsub.s32 %v5054, %v5056
        %v5058 = vrot.slane %v5044, %v5057
        %v5059 = vcombine.high %v5043, 0.0
        %v5061 = vunpack.c.l.s4 1934713408
        %v5062 = vunpack.c.0.s8 %v5061
        %v5063 = vlaneseq
        %v5064 = vshrl.u32 %v5063, 7
        %v5065 = vsub.s32 %v5062, %v5064
        %v5066 = vrot.slane %v5043, %v5065
        %v5068 = vunpack.c.l.s4 1934713408
        %v5069 = vunpack.c.0.s8 %v5068
        %v5070 = vlaneseq
        %v5071 = vshrl.u32 %v5070, 7
        %v5072 = vsub.s32 %v5069, %v5071
        %v5073 = vrot.slane %v5059, %v5072
        %v5074 = vcombine.high %v5051, 0.0
        %v5075 = vcombine.high %v5058, 0.0
        %v5076 = vcombine.high %v5066, 0.0
        %v5077 = vcombine.high %v5073, 0.0
        %v5078 = vcombine.high %v967, 0.0
        %v5080 = vunpack.c.l.s4 1983009808
        %v5081 = vunpack.c.0.s8 %v5080
        %v5082 = vlaneseq
        %v5083 = vshrl.u32 %v5082, 7
        %v5084 = vsub.s32 %v5081, %v5083
        %v5085 = vrot.slane %v967, %v5084
        %v5087 = vunpack.c.l.s4 1983009808
        %v5088 = vunpack.c.0.s8 %v5087
        %v5089 = vlaneseq
        %v5090 = vshrl.u32 %v5089, 7
        %v5091 = vsub.s32 %v5088, %v5090
        %v5092 = vrot.slane %v5078, %v5091
        %v5093 = vcombine.high %v5085, 0.0
        %v5095 = vunpack.c.l.s4 1934713408
        %v5096 = vunpack.c.0.s8 %v5095
        %v5097 = vlaneseq
        %v5098 = vshrl.u32 %v5097, 7
        %v5099 = vsub.s32 %v5096, %v5098
        %v5100 = vrot.slane %v5085, %v5099
        %v5102 = vunpack.c.l.s4 1934713408
        %v5103 = vunpack.c.0.s8 %v5102
        %v5104 = vlaneseq
        %v5105 = vshrl.u32 %v5104, 7
        %v5106 = vsub.s32 %v5103, %v5105
        %v5107 = vrot.slane %v5093, %v5106
        %v5108 = vcombine.high %v5092, 0.0
        %v5110 = vunpack.c.l.s4 1934713408
        %v5111 = vunpack.c.0.s8 %v5110
        %v5112 = vlaneseq
        %v5113 = vshrl.u32 %v5112, 7
        %v5114 = vsub.s32 %v5111, %v5113
        %v5115 = vrot.slane %v5092, %v5114
        %v5117 = vunpack.c.l.s4 1934713408
        %v5118 = vunpack.c.0.s8 %v5117
        %v5119 = vlaneseq
        %v5120 = vshrl.u32 %v5119, 7
        %v5121 = vsub.s32 %v5118, %v5120
        %v5122 = vrot.slane %v5108, %v5121
        %v5123 = vcombine.high %v5100, 0.0
        %v5124 = vcombine.high %v5107, 0.0
        %v5125 = vcombine.high %v5115, 0.0
        %v5126 = vcombine.high %v5122, 0.0
        %v5127 = vcombine.high %v968, 0.0
        %v5129 = vunpack.c.l.s4 1983009808
        %v5130 = vunpack.c.0.s8 %v5129
        %v5131 = vlaneseq
        %v5132 = vshrl.u32 %v5131, 7
        %v5133 = vsub.s32 %v5130, %v5132
        %v5134 = vrot.slane %v968, %v5133
        %v5136 = vunpack.c.l.s4 1983009808
        %v5137 = vunpack.c.0.s8 %v5136
        %v5138 = vlaneseq
        %v5139 = vshrl.u32 %v5138, 7
        %v5140 = vsub.s32 %v5137, %v5139
        %v5141 = vrot.slane %v5127, %v5140
        %v5142 = vcombine.high %v5134, 0.0
        %v5144 = vunpack.c.l.s4 1934713408
        %v5145 = vunpack.c.0.s8 %v5144
        %v5146 = vlaneseq
        %v5147 = vshrl.u32 %v5146, 7
        %v5148 = vsub.s32 %v5145, %v5147
        %v5149 = vrot.slane %v5134, %v5148
        %v5151 = vunpack.c.l.s4 1934713408
        %v5152 = vunpack.c.0.s8 %v5151
        %v5153 = vlaneseq
        %v5154 = vshrl.u32 %v5153, 7
        %v5155 = vsub.s32 %v5152, %v5154
        %v5156 = vrot.slane %v5142, %v5155
        %v5157 = vcombine.high %v5141, 0.0
        %v5159 = vunpack.c.l.s4 1934713408
        %v5160 = vunpack.c.0.s8 %v5159
        %v5161 = vlaneseq
        %v5162 = vshrl.u32 %v5161, 7
        %v5163 = vsub.s32 %v5160, %v5162
        %v5164 = vrot.slane %v5141, %v5163
        %v5166 = vunpack.c.l.s4 1934713408
        %v5167 = vunpack.c.0.s8 %v5166
        %v5168 = vlaneseq
        %v5169 = vshrl.u32 %v5168, 7
        %v5170 = vsub.s32 %v5167, %v5169
        %v5171 = vrot.slane %v5157, %v5170
        %v5172 = vcombine.high %v5149, 0.0
        %v5173 = vcombine.high %v5156, 0.0
        %v5174 = vcombine.high %v5164, 0.0
        %v5175 = vcombine.high %v5171, 0.0
        %v5176 = vcombine.high %v969, 0.0
        %v5178 = vunpack.c.l.s4 1983009808
        %v5179 = vunpack.c.0.s8 %v5178
        %v5180 = vlaneseq
        %v5181 = vshrl.u32 %v5180, 7
        %v5182 = vsub.s32 %v5179, %v5181
        %v5183 = vrot.slane %v969, %v5182
        %v5185 = vunpack.c.l.s4 1983009808
        %v5186 = vunpack.c.0.s8 %v5185
        %v5187 = vlaneseq
        %v5188 = vshrl.u32 %v5187, 7
        %v5189 = vsub.s32 %v5186, %v5188
        %v5190 = vrot.slane %v5176, %v5189
        %v5191 = vcombine.high %v5183, 0.0
        %v5193 = vunpack.c.l.s4 1934713408
        %v5194 = vunpack.c.0.s8 %v5193
        %v5195 = vlaneseq
        %v5196 = vshrl.u32 %v5195, 7
        %v5197 = vsub.s32 %v5194, %v5196
        %v5198 = vrot.slane %v5183, %v5197
        %v5200 = vunpack.c.l.s4 1934713408
        %v5201 = vunpack.c.0.s8 %v5200
        %v5202 = vlaneseq
        %v5203 = vshrl.u32 %v5202, 7
        %v5204 = vsub.s32 %v5201, %v5203
        %v5205 = vrot.slane %v5191, %v5204
        %v5206 = vcombine.high %v5190, 0.0
        %v5208 = vunpack.c.l.s4 1934713408
        %v5209 = vunpack.c.0.s8 %v5208
        %v5210 = vlaneseq
        %v5211 = vshrl.u32 %v5210, 7
        %v5212 = vsub.s32 %v5209, %v5211
        %v5213 = vrot.slane %v5190, %v5212
        %v5215 = vunpack.c.l.s4 1934713408
        %v5216 = vunpack.c.0.s8 %v5215
        %v5217 = vlaneseq
        %v5218 = vshrl.u32 %v5217, 7
        %v5219 = vsub.s32 %v5216, %v5218
        %v5220 = vrot.slane %v5206, %v5219
        %v5221 = vcombine.high %v5198, 0.0
        %v5222 = vcombine.high %v5205, 0.0
        %v5223 = vcombine.high %v5213, 0.0
        %v5224 = vcombine.high %v5220, 0.0
        %v5225 = vcombine.high %v970, 0.0
        %v5227 = vunpack.c.l.s4 1983009808
        %v5228 = vunpack.c.0.s8 %v5227
        %v5229 = vlaneseq
        %v5230 = vshrl.u32 %v5229, 7
        %v5231 = vsub.s32 %v5228, %v5230
        %v5232 = vrot.slane %v970, %v5231
        %v5234 = vunpack.c.l.s4 1983009808
        %v5235 = vunpack.c.0.s8 %v5234
        %v5236 = vlaneseq
        %v5237 = vshrl.u32 %v5236, 7
        %v5238 = vsub.s32 %v5235, %v5237
        %v5239 = vrot.slane %v5225, %v5238
        %v5240 = vcombine.high %v5232, 0.0
        %v5242 = vunpack.c.l.s4 1934713408
        %v5243 = vunpack.c.0.s8 %v5242
        %v5244 = vlaneseq
        %v5245 = vshrl.u32 %v5244, 7
        %v5246 = vsub.s32 %v5243, %v5245
        %v5247 = vrot.slane %v5232, %v5246
        %v5249 = vunpack.c.l.s4 1934713408
        %v5250 = vunpack.c.0.s8 %v5249
        %v5251 = vlaneseq
        %v5252 = vshrl.u32 %v5251, 7
        %v5253 = vsub.s32 %v5250, %v5252
        %v5254 = vrot.slane %v5240, %v5253
        %v5255 = vcombine.high %v5239, 0.0
        %v5257 = vunpack.c.l.s4 1934713408
        %v5258 = vunpack.c.0.s8 %v5257
        %v5259 = vlaneseq
        %v5260 = vshrl.u32 %v5259, 7
        %v5261 = vsub.s32 %v5258, %v5260
        %v5262 = vrot.slane %v5239, %v5261
        %v5264 = vunpack.c.l.s4 1934713408
        %v5265 = vunpack.c.0.s8 %v5264
        %v5266 = vlaneseq
        %v5267 = vshrl.u32 %v5266, 7
        %v5268 = vsub.s32 %v5265, %v5267
        %v5269 = vrot.slane %v5255, %v5268
        %v5270 = vcombine.high %v5247, 0.0
        %v5271 = vcombine.high %v5254, 0.0
        %v5272 = vcombine.high %v5262, 0.0
        %v5273 = vcombine.high %v5269, 0.0
        %v5274 = vcombine.high %v971, 0.0
        %v5276 = vunpack.c.l.s4 1983009808
        %v5277 = vunpack.c.0.s8 %v5276
        %v5278 = vlaneseq
        %v5279 = vshrl.u32 %v5278, 7
        %v5280 = vsub.s32 %v5277, %v5279
        %v5281 = vrot.slane %v971, %v5280
        %v5283 = vunpack.c.l.s4 1983009808
        %v5284 = vunpack.c.0.s8 %v5283
        %v5285 = vlaneseq
        %v5286 = vshrl.u32 %v5285, 7
        %v5287 = vsub.s32 %v5284, %v5286
        %v5288 = vrot.slane %v5274, %v5287
        %v5289 = vcombine.high %v5281, 0.0
        %v5291 = vunpack.c.l.s4 1934713408
        %v5292 = vunpack.c.0.s8 %v5291
        %v5293 = vlaneseq
        %v5294 = vshrl.u32 %v5293, 7
        %v5295 = vsub.s32 %v5292, %v5294
        %v5296 = vrot.slane %v5281, %v5295
        %v5298 = vunpack.c.l.s4 1934713408
        %v5299 = vunpack.c.0.s8 %v5298
        %v5300 = vlaneseq
        %v5301 = vshrl.u32 %v5300, 7
        %v5302 = vsub.s32 %v5299, %v5301
        %v5303 = vrot.slane %v5289, %v5302
        %v5304 = vcombine.high %v5288, 0.0
        %v5306 = vunpack.c.l.s4 1934713408
        %v5307 = vunpack.c.0.s8 %v5306
        %v5308 = vlaneseq
        %v5309 = vshrl.u32 %v5308, 7
        %v5310 = vsub.s32 %v5307, %v5309
        %v5311 = vrot.slane %v5288, %v5310
        %v5313 = vunpack.c.l.s4 1934713408
        %v5314 = vunpack.c.0.s8 %v5313
        %v5315 = vlaneseq
        %v5316 = vshrl.u32 %v5315, 7
        %v5317 = vsub.s32 %v5314, %v5316
        %v5318 = vrot.slane %v5304, %v5317
        %v5319 = vcombine.high %v5296, 0.0
        %v5320 = vcombine.high %v5303, 0.0
        %v5321 = vcombine.high %v5311, 0.0
        %v5322 = vcombine.high %v5318, 0.0
        %5339 = vrot.lane.b32.xlu0 %v3800, 2
        %v5340 = vpop.permute.xlu0 %5339
        %5341 = vrot.lane.b32.xlu0 %v3898, 2
        %v5342 = vpop.permute.xlu0 %5341
        %5343 = vrot.lane.b32.xlu0 %v3996, 2
        %v5344 = vpop.permute.xlu0 %5343
        %5345 = vrot.lane.b32.xlu0 %v4094, 2
        %v5346 = vpop.permute.xlu0 %5345
        %5347 = vrot.lane.b32.xlu0 %v4192, 2
        %v5348 = vpop.permute.xlu0 %5347
        %5349 = vrot.lane.b32.xlu0 %v4290, 2
        %v5350 = vpop.permute.xlu0 %5349
        %5351 = vrot.lane.b32.xlu0 %v4388, 2
        %v5352 = vpop.permute.xlu0 %5351
        %5353 = vrot.lane.b32.xlu0 %v4486, 2
        %v5354 = vpop.permute.xlu0 %5353
        %5355 = vrot.lane.b32.xlu0 %v4584, 2
        %v5356 = vpop.permute.xlu0 %5355
        %5357 = vrot.lane.b32.xlu0 %v4682, 2
        %v5358 = vpop.permute.xlu0 %5357
        %5359 = vrot.lane.b32.xlu0 %v4780, 2
        %v5360 = vpop.permute.xlu0 %5359
        %5361 = vrot.lane.b32.xlu0 %v4878, 2
        %v5362 = vpop.permute.xlu0 %5361
        %5363 = vrot.lane.b32.xlu0 %v4976, 2
        %v5364 = vpop.permute.xlu0 %5363
        %5365 = vrot.lane.b32.xlu0 %v5074, 2
        %v5366 = vpop.permute.xlu0 %5365
        %5367 = vrot.lane.b32.xlu0 %v5172, 2
        %v5368 = vpop.permute.xlu0 %5367
        %5369 = vrot.lane.b32.xlu0 %v5270, 2
        %v5370 = vpop.permute.xlu0 %5369
        %5403 = vrot.lane.b32.xlu0 %v3784, 4
        %v5404 = vpop.permute.xlu0 %5403
        %5405 = vrot.lane.b32.xlu0 %v3882, 4
        %v5406 = vpop.permute.xlu0 %5405
        %5407 = vrot.lane.b32.xlu0 %v3980, 4
        %v5408 = vpop.permute.xlu0 %5407
        %5409 = vrot.lane.b32.xlu0 %v4078, 4
        %v5410 = vpop.permute.xlu0 %5409
        %5411 = vrot.lane.b32.xlu0 %v4176, 4
        %v5412 = vpop.permute.xlu0 %5411
        %5413 = vrot.lane.b32.xlu0 %v4274, 4
        %v5414 = vpop.permute.xlu0 %5413
        %5415 = vrot.lane.b32.xlu0 %v4372, 4
        %v5416 = vpop.permute.xlu0 %5415
        %5417 = vrot.lane.b32.xlu0 %v4470, 4
        %v5418 = vpop.permute.xlu0 %5417
        %5419 = vrot.lane.b32.xlu0 %v4568, 4
        %v5420 = vpop.permute.xlu0 %5419
        %5421 = vrot.lane.b32.xlu0 %v4666, 4
        %v5422 = vpop.permute.xlu0 %5421
        %5423 = vrot.lane.b32.xlu0 %v4764, 4
        %v5424 = vpop.permute.xlu0 %5423
        %5425 = vrot.lane.b32.xlu0 %v4862, 4
        %v5426 = vpop.permute.xlu0 %5425
        %5427 = vrot.lane.b32.xlu0 %v4960, 4
        %v5428 = vpop.permute.xlu0 %5427
        %5429 = vrot.lane.b32.xlu0 %v5058, 4
        %v5430 = vpop.permute.xlu0 %5429
        %5431 = vrot.lane.b32.xlu0 %v5156, 4
        %v5432 = vpop.permute.xlu0 %5431
        %5433 = vrot.lane.b32.xlu0 %v5254, 4
        %v5434 = vpop.permute.xlu0 %5433
        %5467 = vrot.lane.b32.xlu0 %v3801, 6
        %v5468 = vpop.permute.xlu0 %5467
        %5469 = vrot.lane.b32.xlu0 %v3899, 6
        %v5470 = vpop.permute.xlu0 %5469
        %5471 = vrot.lane.b32.xlu0 %v3997, 6
        %v5472 = vpop.permute.xlu0 %5471
        %5473 = vrot.lane.b32.xlu0 %v4095, 6
        %v5474 = vpop.permute.xlu0 %5473
        %5475 = vrot.lane.b32.xlu0 %v4193, 6
        %v5476 = vpop.permute.xlu0 %5475
        %5477 = vrot.lane.b32.xlu0 %v4291, 6
        %v5478 = vpop.permute.xlu0 %5477
        %5479 = vrot.lane.b32.xlu0 %v4389, 6
        %v5480 = vpop.permute.xlu0 %5479
        %5481 = vrot.lane.b32.xlu0 %v4487, 6
        %v5482 = vpop.permute.xlu0 %5481
        %5483 = vrot.lane.b32.xlu0 %v4585, 6
        %v5484 = vpop.permute.xlu0 %5483
        %5485 = vrot.lane.b32.xlu0 %v4683, 6
        %v5486 = vpop.permute.xlu0 %5485
        %5487 = vrot.lane.b32.xlu0 %v4781, 6
        %v5488 = vpop.permute.xlu0 %5487
        %5489 = vrot.lane.b32.xlu0 %v4879, 6
        %v5490 = vpop.permute.xlu0 %5489
        %5491 = vrot.lane.b32.xlu0 %v4977, 6
        %v5492 = vpop.permute.xlu0 %5491
        %5493 = vrot.lane.b32.xlu0 %v5075, 6
        %v5494 = vpop.permute.xlu0 %5493
        %5495 = vrot.lane.b32.xlu0 %v5173, 6
        %v5496 = vpop.permute.xlu0 %5495
        %5497 = vrot.lane.b32.xlu0 %v5271, 6
        %v5498 = vpop.permute.xlu0 %5497
        %5531 = vrot.lane.b32.xlu0 %v3792, 8
        %v5532 = vpop.permute.xlu0 %5531
        %5533 = vrot.lane.b32.xlu0 %v3890, 8
        %v5534 = vpop.permute.xlu0 %5533
        %5535 = vrot.lane.b32.xlu0 %v3988, 8
        %v5536 = vpop.permute.xlu0 %5535
        %5537 = vrot.lane.b32.xlu0 %v4086, 8
        %v5538 = vpop.permute.xlu0 %5537
        %5539 = vrot.lane.b32.xlu0 %v4184, 8
        %v5540 = vpop.permute.xlu0 %5539
        %5541 = vrot.lane.b32.xlu0 %v4282, 8
        %v5542 = vpop.permute.xlu0 %5541
        %5543 = vrot.lane.b32.xlu0 %v4380, 8
        %v5544 = vpop.permute.xlu0 %5543
        %5545 = vrot.lane.b32.xlu0 %v4478, 8
        %v5546 = vpop.permute.xlu0 %5545
        %5547 = vrot.lane.b32.xlu0 %v4576, 8
        %v5548 = vpop.permute.xlu0 %5547
        %5549 = vrot.lane.b32.xlu0 %v4674, 8
        %v5550 = vpop.permute.xlu0 %5549
        %5551 = vrot.lane.b32.xlu0 %v4772, 8
        %v5552 = vpop.permute.xlu0 %5551
        %5553 = vrot.lane.b32.xlu0 %v4870, 8
        %v5554 = vpop.permute.xlu0 %5553
        %5555 = vrot.lane.b32.xlu0 %v4968, 8
        %v5556 = vpop.permute.xlu0 %5555
        %5557 = vrot.lane.b32.xlu0 %v5066, 8
        %v5558 = vpop.permute.xlu0 %5557
        %5559 = vrot.lane.b32.xlu0 %v5164, 8
        %v5560 = vpop.permute.xlu0 %5559
        %5561 = vrot.lane.b32.xlu0 %v5262, 8
        %v5562 = vpop.permute.xlu0 %5561
        %5595 = vrot.lane.b32.xlu0 %v3802, 10
        %v5596 = vpop.permute.xlu0 %5595
        %5597 = vrot.lane.b32.xlu0 %v3900, 10
        %v5598 = vpop.permute.xlu0 %5597
        %5599 = vrot.lane.b32.xlu0 %v3998, 10
        %v5600 = vpop.permute.xlu0 %5599
        %5601 = vrot.lane.b32.xlu0 %v4096, 10
        %v5602 = vpop.permute.xlu0 %5601
        %5603 = vrot.lane.b32.xlu0 %v4194, 10
        %v5604 = vpop.permute.xlu0 %5603
        %5605 = vrot.lane.b32.xlu0 %v4292, 10
        %v5606 = vpop.permute.xlu0 %5605
        %5607 = vrot.lane.b32.xlu0 %v4390, 10
        %v5608 = vpop.permute.xlu0 %5607
        %5609 = vrot.lane.b32.xlu0 %v4488, 10
        %v5610 = vpop.permute.xlu0 %5609
        %5611 = vrot.lane.b32.xlu0 %v4586, 10
        %v5612 = vpop.permute.xlu0 %5611
        %5613 = vrot.lane.b32.xlu0 %v4684, 10
        %v5614 = vpop.permute.xlu0 %5613
        %5615 = vrot.lane.b32.xlu0 %v4782, 10
        %v5616 = vpop.permute.xlu0 %5615
        %5617 = vrot.lane.b32.xlu0 %v4880, 10
        %v5618 = vpop.permute.xlu0 %5617
        %5619 = vrot.lane.b32.xlu0 %v4978, 10
        %v5620 = vpop.permute.xlu0 %5619
        %5621 = vrot.lane.b32.xlu0 %v5076, 10
        %v5622 = vpop.permute.xlu0 %5621
        %5623 = vrot.lane.b32.xlu0 %v5174, 10
        %v5624 = vpop.permute.xlu0 %5623
        %5625 = vrot.lane.b32.xlu0 %v5272, 10
        %v5626 = vpop.permute.xlu0 %5625
        %5659 = vrot.lane.b32.xlu0 %v3799, 12
        %v5660 = vpop.permute.xlu0 %5659
        %5661 = vrot.lane.b32.xlu0 %v3897, 12
        %v5662 = vpop.permute.xlu0 %5661
        %5663 = vrot.lane.b32.xlu0 %v3995, 12
        %v5664 = vpop.permute.xlu0 %5663
        %5665 = vrot.lane.b32.xlu0 %v4093, 12
        %v5666 = vpop.permute.xlu0 %5665
        %5667 = vrot.lane.b32.xlu0 %v4191, 12
        %v5668 = vpop.permute.xlu0 %5667
        %5669 = vrot.lane.b32.xlu0 %v4289, 12
        %v5670 = vpop.permute.xlu0 %5669
        %5671 = vrot.lane.b32.xlu0 %v4387, 12
        %v5672 = vpop.permute.xlu0 %5671
        %5673 = vrot.lane.b32.xlu0 %v4485, 12
        %v5674 = vpop.permute.xlu0 %5673
        %5675 = vrot.lane.b32.xlu0 %v4583, 12
        %v5676 = vpop.permute.xlu0 %5675
        %5677 = vrot.lane.b32.xlu0 %v4681, 12
        %v5678 = vpop.permute.xlu0 %5677
        %5679 = vrot.lane.b32.xlu0 %v4779, 12
        %v5680 = vpop.permute.xlu0 %5679
        %5681 = vrot.lane.b32.xlu0 %v4877, 12
        %v5682 = vpop.permute.xlu0 %5681
        %5683 = vrot.lane.b32.xlu0 %v4975, 12
        %v5684 = vpop.permute.xlu0 %5683
        %5685 = vrot.lane.b32.xlu0 %v5073, 12
        %v5686 = vpop.permute.xlu0 %5685
        %5687 = vrot.lane.b32.xlu0 %v5171, 12
        %v5688 = vpop.permute.xlu0 %5687
        %5689 = vrot.lane.b32.xlu0 %v5269, 12
        %v5690 = vpop.permute.xlu0 %5689
        %5723 = vrot.lane.b32.xlu0 %v3803, 14
        %v5724 = vpop.permute.xlu0 %5723
        %5725 = vrot.lane.b32.xlu0 %v3901, 14
        %v5726 = vpop.permute.xlu0 %5725
        %5727 = vrot.lane.b32.xlu0 %v3999, 14
        %v5728 = vpop.permute.xlu0 %5727
        %5729 = vrot.lane.b32.xlu0 %v4097, 14
        %v5730 = vpop.permute.xlu0 %5729
        %5731 = vrot.lane.b32.xlu0 %v4195, 14
        %v5732 = vpop.permute.xlu0 %5731
        %5733 = vrot.lane.b32.xlu0 %v4293, 14
        %v5734 = vpop.permute.xlu0 %5733
        %5735 = vrot.lane.b32.xlu0 %v4391, 14
        %v5736 = vpop.permute.xlu0 %5735
        %5737 = vrot.lane.b32.xlu0 %v4489, 14
        %v5738 = vpop.permute.xlu0 %5737
        %5739 = vrot.lane.b32.xlu0 %v4587, 14
        %v5740 = vpop.permute.xlu0 %5739
        %5741 = vrot.lane.b32.xlu0 %v4685, 14
        %v5742 = vpop.permute.xlu0 %5741
        %5743 = vrot.lane.b32.xlu0 %v4783, 14
        %v5744 = vpop.permute.xlu0 %5743
        %5745 = vrot.lane.b32.xlu0 %v4881, 14
        %v5746 = vpop.permute.xlu0 %5745
        %5747 = vrot.lane.b32.xlu0 %v4979, 14
        %v5748 = vpop.permute.xlu0 %5747
        %5749 = vrot.lane.b32.xlu0 %v5077, 14
        %v5750 = vpop.permute.xlu0 %5749
        %5751 = vrot.lane.b32.xlu0 %v5175, 14
        %v5752 = vpop.permute.xlu0 %5751
        %5753 = vrot.lane.b32.xlu0 %v5273, 14
        %v5754 = vpop.permute.xlu0 %5753
        %5787 = vrot.lane.b32.xlu0 %v3826, 16
        %v5788 = vpop.permute.xlu0 %5787
        %5789 = vrot.lane.b32.xlu0 %v3924, 16
        %v5790 = vpop.permute.xlu0 %5789
        %5791 = vrot.lane.b32.xlu0 %v4022, 16
        %v5792 = vpop.permute.xlu0 %5791
        %5793 = vrot.lane.b32.xlu0 %v4120, 16
        %v5794 = vpop.permute.xlu0 %5793
        %5795 = vrot.lane.b32.xlu0 %v4218, 16
        %v5796 = vpop.permute.xlu0 %5795
        %5797 = vrot.lane.b32.xlu0 %v4316, 16
        %v5798 = vpop.permute.xlu0 %5797
        %5799 = vrot.lane.b32.xlu0 %v4414, 16
        %v5800 = vpop.permute.xlu0 %5799
        %5801 = vrot.lane.b32.xlu0 %v4512, 16
        %v5802 = vpop.permute.xlu0 %5801
        %5803 = vrot.lane.b32.xlu0 %v4610, 16
        %v5804 = vpop.permute.xlu0 %5803
        %5805 = vrot.lane.b32.xlu0 %v4708, 16
        %v5806 = vpop.permute.xlu0 %5805
        %5807 = vrot.lane.b32.xlu0 %v4806, 16
        %v5808 = vpop.permute.xlu0 %5807
        %5809 = vrot.lane.b32.xlu0 %v4904, 16
        %v5810 = vpop.permute.xlu0 %5809
        %5811 = vrot.lane.b32.xlu0 %v5002, 16
        %v5812 = vpop.permute.xlu0 %5811
        %5813 = vrot.lane.b32.xlu0 %v5100, 16
        %v5814 = vpop.permute.xlu0 %5813
        %5815 = vrot.lane.b32.xlu0 %v5198, 16
        %v5816 = vpop.permute.xlu0 %5815
        %5817 = vrot.lane.b32.xlu0 %v5296, 16
        %v5818 = vpop.permute.xlu0 %5817
        %5851 = vrot.lane.b32.xlu0 %v3849, 18
        %v5852 = vpop.permute.xlu0 %5851
        %5853 = vrot.lane.b32.xlu0 %v3947, 18
        %v5854 = vpop.permute.xlu0 %5853
        %5855 = vrot.lane.b32.xlu0 %v4045, 18
        %v5856 = vpop.permute.xlu0 %5855
        %5857 = vrot.lane.b32.xlu0 %v4143, 18
        %v5858 = vpop.permute.xlu0 %5857
        %5859 = vrot.lane.b32.xlu0 %v4241, 18
        %v5860 = vpop.permute.xlu0 %5859
        %5861 = vrot.lane.b32.xlu0 %v4339, 18
        %v5862 = vpop.permute.xlu0 %5861
        %5863 = vrot.lane.b32.xlu0 %v4437, 18
        %v5864 = vpop.permute.xlu0 %5863
        %5865 = vrot.lane.b32.xlu0 %v4535, 18
        %v5866 = vpop.permute.xlu0 %5865
        %5867 = vrot.lane.b32.xlu0 %v4633, 18
        %v5868 = vpop.permute.xlu0 %5867
        %5869 = vrot.lane.b32.xlu0 %v4731, 18
        %v5870 = vpop.permute.xlu0 %5869
        %5871 = vrot.lane.b32.xlu0 %v4829, 18
        %v5872 = vpop.permute.xlu0 %5871
        %5873 = vrot.lane.b32.xlu0 %v4927, 18
        %v5874 = vpop.permute.xlu0 %5873
        %5875 = vrot.lane.b32.xlu0 %v5025, 18
        %v5876 = vpop.permute.xlu0 %5875
        %5877 = vrot.lane.b32.xlu0 %v5123, 18
        %v5878 = vpop.permute.xlu0 %5877
        %5879 = vrot.lane.b32.xlu0 %v5221, 18
        %v5880 = vpop.permute.xlu0 %5879
        %5881 = vrot.lane.b32.xlu0 %v5319, 18
        %v5882 = vpop.permute.xlu0 %5881
        %5915 = vrot.lane.b32.xlu0 %v3833, 20
        %v5916 = vpop.permute.xlu0 %5915
        %5917 = vrot.lane.b32.xlu0 %v3931, 20
        %v5918 = vpop.permute.xlu0 %5917
        %5919 = vrot.lane.b32.xlu0 %v4029, 20
        %v5920 = vpop.permute.xlu0 %5919
        %5921 = vrot.lane.b32.xlu0 %v4127, 20
        %v5922 = vpop.permute.xlu0 %5921
        %5923 = vrot.lane.b32.xlu0 %v4225, 20
        %v5924 = vpop.permute.xlu0 %5923
        %5925 = vrot.lane.b32.xlu0 %v4323, 20
        %v5926 = vpop.permute.xlu0 %5925
        %5927 = vrot.lane.b32.xlu0 %v4421, 20
        %v5928 = vpop.permute.xlu0 %5927
        %5929 = vrot.lane.b32.xlu0 %v4519, 20
        %v5930 = vpop.permute.xlu0 %5929
        %5931 = vrot.lane.b32.xlu0 %v4617, 20
        %v5932 = vpop.permute.xlu0 %5931
        %5933 = vrot.lane.b32.xlu0 %v4715, 20
        %v5934 = vpop.permute.xlu0 %5933
        %5935 = vrot.lane.b32.xlu0 %v4813, 20
        %v5936 = vpop.permute.xlu0 %5935
        %5937 = vrot.lane.b32.xlu0 %v4911, 20
        %v5938 = vpop.permute.xlu0 %5937
        %5939 = vrot.lane.b32.xlu0 %v5009, 20
        %v5940 = vpop.permute.xlu0 %5939
        %5941 = vrot.lane.b32.xlu0 %v5107, 20
        %v5942 = vpop.permute.xlu0 %5941
        %5943 = vrot.lane.b32.xlu0 %v5205, 20
        %v5944 = vpop.permute.xlu0 %5943
        %5945 = vrot.lane.b32.xlu0 %v5303, 20
        %v5946 = vpop.permute.xlu0 %5945
        %5979 = vrot.lane.b32.xlu0 %v3850, 22
        %v5980 = vpop.permute.xlu0 %5979
        %5981 = vrot.lane.b32.xlu0 %v3948, 22
        %v5982 = vpop.permute.xlu0 %5981
        %5983 = vrot.lane.b32.xlu0 %v4046, 22
        %v5984 = vpop.permute.xlu0 %5983
        %5985 = vrot.lane.b32.xlu0 %v4144, 22
        %v5986 = vpop.permute.xlu0 %5985
        %5987 = vrot.lane.b32.xlu0 %v4242, 22
        %v5988 = vpop.permute.xlu0 %5987
        %5989 = vrot.lane.b32.xlu0 %v4340, 22
        %v5990 = vpop.permute.xlu0 %5989
        %5991 = vrot.lane.b32.xlu0 %v4438, 22
        %v5992 = vpop.permute.xlu0 %5991
        %5993 = vrot.lane.b32.xlu0 %v4536, 22
        %v5994 = vpop.permute.xlu0 %5993
        %5995 = vrot.lane.b32.xlu0 %v4634, 22
        %v5996 = vpop.permute.xlu0 %5995
        %5997 = vrot.lane.b32.xlu0 %v4732, 22
        %v5998 = vpop.permute.xlu0 %5997
        %5999 = vrot.lane.b32.xlu0 %v4830, 22
        %v6000 = vpop.permute.xlu0 %5999
        %6001 = vrot.lane.b32.xlu0 %v4928, 22
        %v6002 = vpop.permute.xlu0 %6001
        %6003 = vrot.lane.b32.xlu0 %v5026, 22
        %v6004 = vpop.permute.xlu0 %6003
        %6005 = vrot.lane.b32.xlu0 %v5124, 22
        %v6006 = vpop.permute.xlu0 %6005
        %6007 = vrot.lane.b32.xlu0 %v5222, 22
        %v6008 = vpop.permute.xlu0 %6007
        %6009 = vrot.lane.b32.xlu0 %v5320, 22
        %v6010 = vpop.permute.xlu0 %6009
        %6043 = vrot.lane.b32.xlu0 %v3841, 24
        %v6044 = vpop.permute.xlu0 %6043
        %6045 = vrot.lane.b32.xlu0 %v3939, 24
        %v6046 = vpop.permute.xlu0 %6045
        %6047 = vrot.lane.b32.xlu0 %v4037, 24
        %v6048 = vpop.permute.xlu0 %6047
        %6049 = vrot.lane.b32.xlu0 %v4135, 24
        %v6050 = vpop.permute.xlu0 %6049
        %6051 = vrot.lane.b32.xlu0 %v4233, 24
        %v6052 = vpop.permute.xlu0 %6051
        %6053 = vrot.lane.b32.xlu0 %v4331, 24
        %v6054 = vpop.permute.xlu0 %6053
        %6055 = vrot.lane.b32.xlu0 %v4429, 24
        %v6056 = vpop.permute.xlu0 %6055
        %6057 = vrot.lane.b32.xlu0 %v4527, 24
        %v6058 = vpop.permute.xlu0 %6057
        %6059 = vrot.lane.b32.xlu0 %v4625, 24
        %v6060 = vpop.permute.xlu0 %6059
        %6061 = vrot.lane.b32.xlu0 %v4723, 24
        %v6062 = vpop.permute.xlu0 %6061
        %6063 = vrot.lane.b32.xlu0 %v4821, 24
        %v6064 = vpop.permute.xlu0 %6063
        %6065 = vrot.lane.b32.xlu0 %v4919, 24
        %v6066 = vpop.permute.xlu0 %6065
        %6067 = vrot.lane.b32.xlu0 %v5017, 24
        %v6068 = vpop.permute.xlu0 %6067
        %6069 = vrot.lane.b32.xlu0 %v5115, 24
        %v6070 = vpop.permute.xlu0 %6069
        %6071 = vrot.lane.b32.xlu0 %v5213, 24
        %v6072 = vpop.permute.xlu0 %6071
        %6073 = vrot.lane.b32.xlu0 %v5311, 24
        %v6074 = vpop.permute.xlu0 %6073
        %6107 = vrot.lane.b32.xlu0 %v3851, 26
        %v6108 = vpop.permute.xlu0 %6107
        %6109 = vrot.lane.b32.xlu0 %v3949, 26
        %v6110 = vpop.permute.xlu0 %6109
        %6111 = vrot.lane.b32.xlu0 %v4047, 26
        %v6112 = vpop.permute.xlu0 %6111
        %6113 = vrot.lane.b32.xlu0 %v4145, 26
        %v6114 = vpop.permute.xlu0 %6113
        %6115 = vrot.lane.b32.xlu0 %v4243, 26
        %v6116 = vpop.permute.xlu0 %6115
        %6117 = vrot.lane.b32.xlu0 %v4341, 26
        %v6118 = vpop.permute.xlu0 %6117
        %6119 = vrot.lane.b32.xlu0 %v4439, 26
        %v6120 = vpop.permute.xlu0 %6119
        %6121 = vrot.lane.b32.xlu0 %v4537, 26
        %v6122 = vpop.permute.xlu0 %6121
        %6123 = vrot.lane.b32.xlu0 %v4635, 26
        %v6124 = vpop.permute.xlu0 %6123
        %6125 = vrot.lane.b32.xlu0 %v4733, 26
        %v6126 = vpop.permute.xlu0 %6125
        %6127 = vrot.lane.b32.xlu0 %v4831, 26
        %v6128 = vpop.permute.xlu0 %6127
        %6129 = vrot.lane.b32.xlu0 %v4929, 26
        %v6130 = vpop.permute.xlu0 %6129
        %6131 = vrot.lane.b32.xlu0 %v5027, 26
        %v6132 = vpop.permute.xlu0 %6131
        %6133 = vrot.lane.b32.xlu0 %v5125, 26
        %v6134 = vpop.permute.xlu0 %6133
        %6135 = vrot.lane.b32.xlu0 %v5223, 26
        %v6136 = vpop.permute.xlu0 %6135
        %6137 = vrot.lane.b32.xlu0 %v5321, 26
        %v6138 = vpop.permute.xlu0 %6137
        %6171 = vrot.lane.b32.xlu0 %v3848, 28
        %v6172 = vpop.permute.xlu0 %6171
        %6173 = vrot.lane.b32.xlu0 %v3946, 28
        %v6174 = vpop.permute.xlu0 %6173
        %6175 = vrot.lane.b32.xlu0 %v4044, 28
        %v6176 = vpop.permute.xlu0 %6175
        %6177 = vrot.lane.b32.xlu0 %v4142, 28
        %v6178 = vpop.permute.xlu0 %6177
        %6179 = vrot.lane.b32.xlu0 %v4240, 28
        %v6180 = vpop.permute.xlu0 %6179
        %6181 = vrot.lane.b32.xlu0 %v4338, 28
        %v6182 = vpop.permute.xlu0 %6181
        %6183 = vrot.lane.b32.xlu0 %v4436, 28
        %v6184 = vpop.permute.xlu0 %6183
        %6185 = vrot.lane.b32.xlu0 %v4534, 28
        %v6186 = vpop.permute.xlu0 %6185
        %6187 = vrot.lane.b32.xlu0 %v4632, 28
        %v6188 = vpop.permute.xlu0 %6187
        %6189 = vrot.lane.b32.xlu0 %v4730, 28
        %v6190 = vpop.permute.xlu0 %6189
        %6191 = vrot.lane.b32.xlu0 %v4828, 28
        %v6192 = vpop.permute.xlu0 %6191
        %6193 = vrot.lane.b32.xlu0 %v4926, 28
        %v6194 = vpop.permute.xlu0 %6193
        %6195 = vrot.lane.b32.xlu0 %v5024, 28
        %v6196 = vpop.permute.xlu0 %6195
        %6197 = vrot.lane.b32.xlu0 %v5122, 28
        %v6198 = vpop.permute.xlu0 %6197
        %6199 = vrot.lane.b32.xlu0 %v5220, 28
        %v6200 = vpop.permute.xlu0 %6199
        %6201 = vrot.lane.b32.xlu0 %v5318, 28
        %v6202 = vpop.permute.xlu0 %6201
        %6235 = vrot.lane.b32.xlu0 %v3852, 30
        %v6236 = vpop.permute.xlu0 %6235
        %6237 = vrot.lane.b32.xlu0 %v3950, 30
        %v6238 = vpop.permute.xlu0 %6237
        %6239 = vrot.lane.b32.xlu0 %v4048, 30
        %v6240 = vpop.permute.xlu0 %6239
        %6241 = vrot.lane.b32.xlu0 %v4146, 30
        %v6242 = vpop.permute.xlu0 %6241
        %6243 = vrot.lane.b32.xlu0 %v4244, 30
        %v6244 = vpop.permute.xlu0 %6243
        %6245 = vrot.lane.b32.xlu0 %v4342, 30
        %v6246 = vpop.permute.xlu0 %6245
        %6247 = vrot.lane.b32.xlu0 %v4440, 30
        %v6248 = vpop.permute.xlu0 %6247
        %6249 = vrot.lane.b32.xlu0 %v4538, 30
        %v6250 = vpop.permute.xlu0 %6249
        %6251 = vrot.lane.b32.xlu0 %v4636, 30
        %v6252 = vpop.permute.xlu0 %6251
        %6253 = vrot.lane.b32.xlu0 %v4734, 30
        %v6254 = vpop.permute.xlu0 %6253
        %6255 = vrot.lane.b32.xlu0 %v4832, 30
        %v6256 = vpop.permute.xlu0 %6255
        %6257 = vrot.lane.b32.xlu0 %v4930, 30
        %v6258 = vpop.permute.xlu0 %6257
        %6259 = vrot.lane.b32.xlu0 %v5028, 30
        %v6260 = vpop.permute.xlu0 %6259
        %6261 = vrot.lane.b32.xlu0 %v5126, 30
        %v6262 = vpop.permute.xlu0 %6261
        %6263 = vrot.lane.b32.xlu0 %v5224, 30
        %v6264 = vpop.permute.xlu0 %6263
        %6265 = vrot.lane.b32.xlu0 %v5322, 30
        %v6266 = vpop.permute.xlu0 %6265
        %v6283 = vsel %vm3500, %v3777, %v5340
        %v6284 = vsel %vm3500, %v3875, %v5342
        %v6285 = vsel %vm3500, %v3973, %v5344
        %v6286 = vsel %vm3500, %v4071, %v5346
        %v6287 = vsel %vm3500, %v4169, %v5348
        %v6288 = vsel %vm3500, %v4267, %v5350
        %v6289 = vsel %vm3500, %v4365, %v5352
        %v6290 = vsel %vm3500, %v4463, %v5354
        %v6291 = vsel %vm3500, %v4561, %v5356
        %v6292 = vsel %vm3500, %v4659, %v5358
        %v6293 = vsel %vm3500, %v4757, %v5360
        %v6294 = vsel %vm3500, %v4855, %v5362
        %v6295 = vsel %vm3500, %v4953, %v5364
        %v6296 = vsel %vm3500, %v5051, %v5366
        %v6297 = vsel %vm3500, %v5149, %v5368
        %v6298 = vsel %vm3500, %v5247, %v5370
        %v6299 = vsel %vm3517, %v6283, %v5404
        %v6300 = vsel %vm3517, %v6284, %v5406
        %v6301 = vsel %vm3517, %v6285, %v5408
        %v6302 = vsel %vm3517, %v6286, %v5410
        %v6303 = vsel %vm3517, %v6287, %v5412
        %v6304 = vsel %vm3517, %v6288, %v5414
        %v6305 = vsel %vm3517, %v6289, %v5416
        %v6306 = vsel %vm3517, %v6290, %v5418
        %v6307 = vsel %vm3517, %v6291, %v5420
        %v6308 = vsel %vm3517, %v6292, %v5422
        %v6309 = vsel %vm3517, %v6293, %v5424
        %v6310 = vsel %vm3517, %v6294, %v5426
        %v6311 = vsel %vm3517, %v6295, %v5428
        %v6312 = vsel %vm3517, %v6296, %v5430
        %v6313 = vsel %vm3517, %v6297, %v5432
        %v6314 = vsel %vm3517, %v6298, %v5434
        %v6315 = vsel %vm3534, %v6299, %v5468
        %v6316 = vsel %vm3534, %v6300, %v5470
        %v6317 = vsel %vm3534, %v6301, %v5472
        %v6318 = vsel %vm3534, %v6302, %v5474
        %v6319 = vsel %vm3534, %v6303, %v5476
        %v6320 = vsel %vm3534, %v6304, %v5478
        %v6321 = vsel %vm3534, %v6305, %v5480
        %v6322 = vsel %vm3534, %v6306, %v5482
        %v6323 = vsel %vm3534, %v6307, %v5484
        %v6324 = vsel %vm3534, %v6308, %v5486
        %v6325 = vsel %vm3534, %v6309, %v5488
        %v6326 = vsel %vm3534, %v6310, %v5490
        %v6327 = vsel %vm3534, %v6311, %v5492
        %v6328 = vsel %vm3534, %v6312, %v5494
        %v6329 = vsel %vm3534, %v6313, %v5496
        %v6330 = vsel %vm3534, %v6314, %v5498
        %v6331 = vsel %vm3551, %v6315, %v5532
        %v6332 = vsel %vm3551, %v6316, %v5534
        %v6333 = vsel %vm3551, %v6317, %v5536
        %v6334 = vsel %vm3551, %v6318, %v5538
        %v6335 = vsel %vm3551, %v6319, %v5540
        %v6336 = vsel %vm3551, %v6320, %v5542
        %v6337 = vsel %vm3551, %v6321, %v5544
        %v6338 = vsel %vm3551, %v6322, %v5546
        %v6339 = vsel %vm3551, %v6323, %v5548
        %v6340 = vsel %vm3551, %v6324, %v5550
        %v6341 = vsel %vm3551, %v6325, %v5552
        %v6342 = vsel %vm3551, %v6326, %v5554
        %v6343 = vsel %vm3551, %v6327, %v5556
        %v6344 = vsel %vm3551, %v6328, %v5558
        %v6345 = vsel %vm3551, %v6329, %v5560
        %v6346 = vsel %vm3551, %v6330, %v5562
        %v6347 = vsel %vm3568, %v6331, %v5596
        %v6348 = vsel %vm3568, %v6332, %v5598
        %v6349 = vsel %vm3568, %v6333, %v5600
        %v6350 = vsel %vm3568, %v6334, %v5602
        %v6351 = vsel %vm3568, %v6335, %v5604
        %v6352 = vsel %vm3568, %v6336, %v5606
        %v6353 = vsel %vm3568, %v6337, %v5608
        %v6354 = vsel %vm3568, %v6338, %v5610
        %v6355 = vsel %vm3568, %v6339, %v5612
        %v6356 = vsel %vm3568, %v6340, %v5614
        %v6357 = vsel %vm3568, %v6341, %v5616
        %v6358 = vsel %vm3568, %v6342, %v5618
        %v6359 = vsel %vm3568, %v6343, %v5620
        %v6360 = vsel %vm3568, %v6344, %v5622
        %v6361 = vsel %vm3568, %v6345, %v5624
        %v6362 = vsel %vm3568, %v6346, %v5626
        %v6363 = vsel %vm3585, %v6347, %v5660
        %v6364 = vsel %vm3585, %v6348, %v5662
        %v6365 = vsel %vm3585, %v6349, %v5664
        %v6366 = vsel %vm3585, %v6350, %v5666
        %v6367 = vsel %vm3585, %v6351, %v5668
        %v6368 = vsel %vm3585, %v6352, %v5670
        %v6369 = vsel %vm3585, %v6353, %v5672
        %v6370 = vsel %vm3585, %v6354, %v5674
        %v6371 = vsel %vm3585, %v6355, %v5676
        %v6372 = vsel %vm3585, %v6356, %v5678
        %v6373 = vsel %vm3585, %v6357, %v5680
        %v6374 = vsel %vm3585, %v6358, %v5682
        %v6375 = vsel %vm3585, %v6359, %v5684
        %v6376 = vsel %vm3585, %v6360, %v5686
        %v6377 = vsel %vm3585, %v6361, %v5688
        %v6378 = vsel %vm3585, %v6362, %v5690
        %v6379 = vsel %vm3602, %v6363, %v5724
        %v6380 = vsel %vm3602, %v6364, %v5726
        %v6381 = vsel %vm3602, %v6365, %v5728
        %v6382 = vsel %vm3602, %v6366, %v5730
        %v6383 = vsel %vm3602, %v6367, %v5732
        %v6384 = vsel %vm3602, %v6368, %v5734
        %v6385 = vsel %vm3602, %v6369, %v5736
        %v6386 = vsel %vm3602, %v6370, %v5738
        %v6387 = vsel %vm3602, %v6371, %v5740
        %v6388 = vsel %vm3602, %v6372, %v5742
        %v6389 = vsel %vm3602, %v6373, %v5744
        %v6390 = vsel %vm3602, %v6374, %v5746
        %v6391 = vsel %vm3602, %v6375, %v5748
        %v6392 = vsel %vm3602, %v6376, %v5750
        %v6393 = vsel %vm3602, %v6377, %v5752
        %v6394 = vsel %vm3602, %v6378, %v5754
        %v6395 = vsel %vm3619, %v6379, %v5788
        %v6396 = vsel %vm3619, %v6380, %v5790
        %v6397 = vsel %vm3619, %v6381, %v5792
        %v6398 = vsel %vm3619, %v6382, %v5794
        %v6399 = vsel %vm3619, %v6383, %v5796
        %v6400 = vsel %vm3619, %v6384, %v5798
        %v6401 = vsel %vm3619, %v6385, %v5800
        %v6402 = vsel %vm3619, %v6386, %v5802
        %v6403 = vsel %vm3619, %v6387, %v5804
        %v6404 = vsel %vm3619, %v6388, %v5806
        %v6405 = vsel %vm3619, %v6389, %v5808
        %v6406 = vsel %vm3619, %v6390, %v5810
        %v6407 = vsel %vm3619, %v6391, %v5812
        %v6408 = vsel %vm3619, %v6392, %v5814
        %v6409 = vsel %vm3619, %v6393, %v5816
        %v6410 = vsel %vm3619, %v6394, %v5818
        %v6411 = vsel %vm3636, %v6395, %v5852
        %v6412 = vsel %vm3636, %v6396, %v5854
        %v6413 = vsel %vm3636, %v6397, %v5856
        %v6414 = vsel %vm3636, %v6398, %v5858
        %v6415 = vsel %vm3636, %v6399, %v5860
        %v6416 = vsel %vm3636, %v6400, %v5862
        %v6417 = vsel %vm3636, %v6401, %v5864
        %v6418 = vsel %vm3636, %v6402, %v5866
        %v6419 = vsel %vm3636, %v6403, %v5868
        %v6420 = vsel %vm3636, %v6404, %v5870
        %v6421 = vsel %vm3636, %v6405, %v5872
        %v6422 = vsel %vm3636, %v6406, %v5874
        %v6423 = vsel %vm3636, %v6407, %v5876
        %v6424 = vsel %vm3636, %v6408, %v5878
        %v6425 = vsel %vm3636, %v6409, %v5880
        %v6426 = vsel %vm3636, %v6410, %v5882
        %v6427 = vsel %vm3653, %v6411, %v5916
        %v6428 = vsel %vm3653, %v6412, %v5918
        %v6429 = vsel %vm3653, %v6413, %v5920
        %v6430 = vsel %vm3653, %v6414, %v5922
        %v6431 = vsel %vm3653, %v6415, %v5924
        %v6432 = vsel %vm3653, %v6416, %v5926
        %v6433 = vsel %vm3653, %v6417, %v5928
        %v6434 = vsel %vm3653, %v6418, %v5930
        %v6435 = vsel %vm3653, %v6419, %v5932
        %v6436 = vsel %vm3653, %v6420, %v5934
        %v6437 = vsel %vm3653, %v6421, %v5936
        %v6438 = vsel %vm3653, %v6422, %v5938
        %v6439 = vsel %vm3653, %v6423, %v5940
        %v6440 = vsel %vm3653, %v6424, %v5942
        %v6441 = vsel %vm3653, %v6425, %v5944
        %v6442 = vsel %vm3653, %v6426, %v5946
        %v6443 = vsel %vm3670, %v6427, %v5980
        %v6444 = vsel %vm3670, %v6428, %v5982
        %v6445 = vsel %vm3670, %v6429, %v5984
        %v6446 = vsel %vm3670, %v6430, %v5986
        %v6447 = vsel %vm3670, %v6431, %v5988
        %v6448 = vsel %vm3670, %v6432, %v5990
        %v6449 = vsel %vm3670, %v6433, %v5992
        %v6450 = vsel %vm3670, %v6434, %v5994
        %v6451 = vsel %vm3670, %v6435, %v5996
        %v6452 = vsel %vm3670, %v6436, %v5998
        %v6453 = vsel %vm3670, %v6437, %v6000
        %v6454 = vsel %vm3670, %v6438, %v6002
        %v6455 = vsel %vm3670, %v6439, %v6004
        %v6456 = vsel %vm3670, %v6440, %v6006
        %v6457 = vsel %vm3670, %v6441, %v6008
        %v6458 = vsel %vm3670, %v6442, %v6010
        %v6459 = vsel %vm3687, %v6443, %v6044
        %v6460 = vsel %vm3687, %v6444, %v6046
        %v6461 = vsel %vm3687, %v6445, %v6048
        %v6462 = vsel %vm3687, %v6446, %v6050
        %v6463 = vsel %vm3687, %v6447, %v6052
        %v6464 = vsel %vm3687, %v6448, %v6054
        %v6465 = vsel %vm3687, %v6449, %v6056
        %v6466 = vsel %vm3687, %v6450, %v6058
        %v6467 = vsel %vm3687, %v6451, %v6060
        %v6468 = vsel %vm3687, %v6452, %v6062
        %v6469 = vsel %vm3687, %v6453, %v6064
        %v6470 = vsel %vm3687, %v6454, %v6066
        %v6471 = vsel %vm3687, %v6455, %v6068
        %v6472 = vsel %vm3687, %v6456, %v6070
        %v6473 = vsel %vm3687, %v6457, %v6072
        %v6474 = vsel %vm3687, %v6458, %v6074
        %v6475 = vsel %vm3704, %v6459, %v6108
        %v6476 = vsel %vm3704, %v6460, %v6110
        %v6477 = vsel %vm3704, %v6461, %v6112
        %v6478 = vsel %vm3704, %v6462, %v6114
        %v6479 = vsel %vm3704, %v6463, %v6116
        %v6480 = vsel %vm3704, %v6464, %v6118
        %v6481 = vsel %vm3704, %v6465, %v6120
        %v6482 = vsel %vm3704, %v6466, %v6122
        %v6483 = vsel %vm3704, %v6467, %v6124
        %v6484 = vsel %vm3704, %v6468, %v6126
        %v6485 = vsel %vm3704, %v6469, %v6128
        %v6486 = vsel %vm3704, %v6470, %v6130
        %v6487 = vsel %vm3704, %v6471, %v6132
        %v6488 = vsel %vm3704, %v6472, %v6134
        %v6489 = vsel %vm3704, %v6473, %v6136
        %v6490 = vsel %vm3704, %v6474, %v6138
        %v6491 = vsel %vm3721, %v6475, %v6172
        %v6492 = vsel %vm3721, %v6476, %v6174
        %v6493 = vsel %vm3721, %v6477, %v6176
        %v6494 = vsel %vm3721, %v6478, %v6178
        %v6495 = vsel %vm3721, %v6479, %v6180
        %v6496 = vsel %vm3721, %v6480, %v6182
        %v6497 = vsel %vm3721, %v6481, %v6184
        %v6498 = vsel %vm3721, %v6482, %v6186
        %v6499 = vsel %vm3721, %v6483, %v6188
        %v6500 = vsel %vm3721, %v6484, %v6190
        %v6501 = vsel %vm3721, %v6485, %v6192
        %v6502 = vsel %vm3721, %v6486, %v6194
        %v6503 = vsel %vm3721, %v6487, %v6196
        %v6504 = vsel %vm3721, %v6488, %v6198
        %v6505 = vsel %vm3721, %v6489, %v6200
        %v6506 = vsel %vm3721, %v6490, %v6202
        %v6507 = vsel %vm3738, %v6491, %v6236
        %v6508 = vsel %vm3738, %v6492, %v6238
        %v6509 = vsel %vm3738, %v6493, %v6240
        %v6510 = vsel %vm3738, %v6494, %v6242
        %v6511 = vsel %vm3738, %v6495, %v6244
        %v6512 = vsel %vm3738, %v6496, %v6246
        %v6513 = vsel %vm3738, %v6497, %v6248
        %v6514 = vsel %vm3738, %v6498, %v6250
        %v6515 = vsel %vm3738, %v6499, %v6252
        %v6516 = vsel %vm3738, %v6500, %v6254
        %v6517 = vsel %vm3738, %v6501, %v6256
        %v6518 = vsel %vm3738, %v6502, %v6258
        %v6519 = vsel %vm3738, %v6503, %v6260
        %v6520 = vsel %vm3738, %v6504, %v6262
        %v6521 = vsel %vm3738, %v6505, %v6264
        %v6522 = vsel %vm3738, %v6506, %v6266
        %v6539 = vrot.slane %v6507, 7
        %v6540 = vrot.slane %v6508, 7
        %v6541 = vrot.slane %v6509, 7
        %v6542 = vrot.slane %v6510, 7
        %v6543 = vrot.slane %v6511, 7
        %v6544 = vrot.slane %v6512, 7
        %v6545 = vrot.slane %v6513, 7
        %v6546 = vrot.slane %v6514, 7
        %v6547 = vrot.slane %v6515, 7
        %v6548 = vrot.slane %v6516, 7
        %v6549 = vrot.slane %v6517, 7
        %v6550 = vrot.slane %v6518, 7
        %v6551 = vrot.slane %v6519, 7
        %v6552 = vrot.slane %v6520, 7
        %v6553 = vrot.slane %v6521, 7
        %v6554 = vrot.slane %v6522, 7
        %vm6571 = vcmask 1040384
        %v6572 = vsel %vm6571, %v3739, %v6539
        %v6573 = vsel %vm6571, %v3740, %v6540
        %v6574 = vsel %vm6571, %v3741, %v6541
        %v6575 = vsel %vm6571, %v3742, %v6542
        %v6576 = vsel %vm6571, %v3743, %v6543
        %v6577 = vsel %vm6571, %v3744, %v6544
        %v6578 = vsel %vm6571, %v3745, %v6545
        %v6579 = vsel %vm6571, %v3746, %v6546
        %v6580 = vsel %vm6571, %v3747, %v6547
        %v6581 = vsel %vm6571, %v3748, %v6548
        %v6582 = vsel %vm6571, %v3749, %v6549
        %v6583 = vsel %vm6571, %v3750, %v6550
        %v6584 = vsel %vm6571, %v3751, %v6551
        %v6585 = vsel %vm6571, %v3752, %v6552
        %v6586 = vsel %vm6571, %v3753, %v6553
        %v6587 = vsel %vm6571, %v3754, %v6554
        %v6604 = vcombine.low %v6572, %v6573
        %v6605 = vcombine.low %v6574, %v6575
        %v6607 = vunpack.c.l.s4 1983009808
        %v6608 = vunpack.c.0.s8 %v6607
        %v6609 = vlaneseq
        %v6610 = vshrl.u32 %v6609, 7
        %v6611 = vsub.s32 %v6608, %v6610
        %v6612 = vrot.slane %v6604, %v6611
        %v6614 = vunpack.c.l.s4 1983009808
        %v6615 = vunpack.c.0.s8 %v6614
        %v6616 = vlaneseq
        %v6617 = vshrl.u32 %v6616, 7
        %v6618 = vsub.s32 %v6615, %v6617
        %v6619 = vrot.slane %v6605, %v6618
        %v6620 = vcombine.low %v6612, %v6619
        %v6621 = vcombine.low %v6576, %v6577
        %v6622 = vcombine.low %v6578, %v6579
        %v6624 = vunpack.c.l.s4 1983009808
        %v6625 = vunpack.c.0.s8 %v6624
        %v6626 = vlaneseq
        %v6627 = vshrl.u32 %v6626, 7
        %v6628 = vsub.s32 %v6625, %v6627
        %v6629 = vrot.slane %v6621, %v6628
        %v6631 = vunpack.c.l.s4 1983009808
        %v6632 = vunpack.c.0.s8 %v6631
        %v6633 = vlaneseq
        %v6634 = vshrl.u32 %v6633, 7
        %v6635 = vsub.s32 %v6632, %v6634
        %v6636 = vrot.slane %v6622, %v6635
        %v6637 = vcombine.low %v6629, %v6636
        %v6638 = vcombine.low %v6580, %v6581
        %v6639 = vcombine.low %v6582, %v6583
        %v6641 = vunpack.c.l.s4 1983009808
        %v6642 = vunpack.c.0.s8 %v6641
        %v6643 = vlaneseq
        %v6644 = vshrl.u32 %v6643, 7
        %v6645 = vsub.s32 %v6642, %v6644
        %v6646 = vrot.slane %v6638, %v6645
        %v6648 = vunpack.c.l.s4 1983009808
        %v6649 = vunpack.c.0.s8 %v6648
        %v6650 = vlaneseq
        %v6651 = vshrl.u32 %v6650, 7
        %v6652 = vsub.s32 %v6649, %v6651
        %v6653 = vrot.slane %v6639, %v6652
        %v6654 = vcombine.low %v6646, %v6653
        %v6655 = vcombine.low %v6584, %v6585
        %v6656 = vcombine.low %v6586, %v6587
        %v6658 = vunpack.c.l.s4 1983009808
        %v6659 = vunpack.c.0.s8 %v6658
        %v6660 = vlaneseq
        %v6661 = vshrl.u32 %v6660, 7
        %v6662 = vsub.s32 %v6659, %v6661
        %v6663 = vrot.slane %v6655, %v6662
        %v6665 = vunpack.c.l.s4 1983009808
        %v6666 = vunpack.c.0.s8 %v6665
        %v6667 = vlaneseq
        %v6668 = vshrl.u32 %v6667, 7
        %v6669 = vsub.s32 %v6666, %v6668
        %v6670 = vrot.slane %v6656, %v6669
        %v6671 = vcombine.low %v6663, %v6670
        %vm6676 = vcmask 261120
        %6677 = vst.msk [vmem:[%s165] sm:$0xff] %vm6676, %v6620
        %6678 = vst.msk [vmem:[%s165 + $0x8] sm:$0xff] %vm6676, %v6637
        %6679 = vst.msk [vmem:[%s165 + $0x10] sm:$0xff] %vm6676, %v6654
        %6680 = vst.msk [vmem:[%s165 + $0x18] sm:$0xff] %vm6676, %v6671
        %s6681 = sand.u32 %s79, 1
        %s6682 = scalar_lea.sflag [#allocation4], %s6681
        %s6683 = sand.u32 %s79, 1
        %s6684 = smul.addr %s6683, 32
        %s6685 = scalar_lea.vmem [#allocation5], %s6684
        // Predicated region
        $region29: #{tpu_custom_call.1} parent=23 // pred_check
          %p6686 = pneg %p89
        $region30: #{tpu_custom_call.1} parent=23 // pred_check_branch
          %6688 = sbr.rel (%p6686) target = $region32
        $region31: #{tpu_custom_call.1} parent=23 // pred_region
          %s6689 = smul.u32 4, %s25
          %s6691 = ssub.s32 512, 512
          %6692 = vsyncadd %s6682, %s6691
          %s6693 = smul.addr %s24, 4
          %s6694 = sadd.s32 %s6689, %s6693
          %s6695 = smul.addr %s23, 4
          %s6696 = sadd.s32 %s6694, %s6695
          %s6697 = smul.addr %s6696, 128
          %s6698 = scalar_lea.hbm %s1, %s6697
          %s6699 = sshll.u32 %s6685, 4
          %s6700 = int_to_ptr.vmem [resolvable:$true] %s6699
          %6705 = dma.vmem_to_hbm [thread:$0]  %s6700, 512, %s6698, %s6682, 128, 128, 8
        $region32: #{tpu_custom_call.1} parent=23 // pred_fallthru
          _
      $region24: #{tpu_custom_call.1} parent=5 // pred_fallthru
        _
      %p6706 = scmp.le.s32.totalorder 2, %s13
      // Predicated region
      $region33: #{tpu_custom_call.1} parent=5 // pred_check
        %p6707 = pneg %p6706
      $region34: #{tpu_custom_call.1} parent=5 // pred_check_branch
        %6709 = sbr.rel (%p6707) target = $region36
      $region35: #{tpu_custom_call.1} parent=5 // pred_region
        %s6710 = ssub.s32 %s13, 2
        // Predicated region
        $region37: #{tpu_custom_call.1} parent=35 // pred_check
          %p6711 = pneg %p95
        $region38: #{tpu_custom_call.1} parent=35 // pred_check_branch
          %6713 = sbr.rel (%p6711) target = $region40
        $region39: #{tpu_custom_call.1} parent=35 // pred_region
          %s6714 = sand.u32 %s80, 1
          %s6715 = scalar_lea.sflag [#allocation4], %s6714
          %s6716 = sand.u32 %s80, 1
          %s6717 = smul.addr %s6716, 32
          %s6718 = scalar_lea.vmem [#allocation5], %s6717
          %6719 = dma.done %s6715, 512
        $region40: #{tpu_custom_call.1} parent=35 // pred_fallthru
          _
      $region36: #{tpu_custom_call.1} parent=5 // pred_fallthru
        _
    $region6: #{tpu_custom_call.1} parent=1 // loop_footer
      %s17 = sadd.s32 1, %s13
    $region7: #{tpu_custom_call.1} parent=1 // loop_footer_branch
      %12 = sbr.rel target = $region3
    $region8: #{tpu_custom_call.1} parent=1 // loop_exit
      _
    %6720 = vsyncpa [#allocation3], 1
    %s6721 = scalar_lea.sflag [#allocation3], 1
    %6722 = vsyncpa %s6721, 1
    %6723 = vsyncpa [#allocation4], 1
    %s6724 = scalar_lea.sflag [#allocation4], 1
    %6725 = vsyncpa %s6724, 1

</llo_original>
